<compile_context>
chip_gen: v5e
topology: v5e:2x2
jax: 0.10.0
libtpu: 0.0.40
codegen_flags: <defaults>
</compile_context>

<pallas_src>
import jax
import jax.numpy as jnp
import numpy as np
from jax.experimental import pallas as pl
from jax.experimental.pallas import tpu as pltpu

F32 = jnp.float32
BF16 = jnp.bfloat16
LN_EPS = 1e-5      # nn.LayerNorm default
NORM_EPS = 1e-3    # the `+ 0.001` in the reference forward


# ---------------------------------------------------------------------------
# Pass 1: LayerNorm + fused left|right projection + masking  -> bf16 left/right
# ---------------------------------------------------------------------------
def proj_kernel(act_ref, mask_ref, ln_ref, wlr_ref, blr_ref, left_ref, right_ref):
    _, TM, N, INC = act_ref.shape
    mid = wlr_ref.shape[1] // 2

    # LayerNorm statistics in f32 (v5e has no bf16 VPU/EUP path).
    a = act_ref[0].astype(F32).reshape(TM * N, INC)
    lnv = ln_ref[...]
    mu = jnp.mean(a, axis=-1, keepdims=True)
    var = jnp.mean(jnp.square(a - mu), axis=-1, keepdims=True)
    a = (a - mu) * jax.lax.rsqrt(var + LN_EPS) * lnv[0:1, :] + lnv[1:2, :]

    # One fused [TM*N, in_c] @ [in_c, 2*mid] MXU matmul (bf16 in, f32 accumulate).
    mflat = mask_ref[0].reshape(TM * N, 1)
    lr = jnp.dot(a.astype(BF16), wlr_ref[...], preferred_element_type=F32)
    lr = (lr + blr_ref[...]) * mflat                       # mask after bias (as in ref)

    left_ref[0] = lr[:, :mid].reshape(TM, N, mid).astype(BF16)
    right_ref[0] = lr[:, mid:].reshape(TM, N, mid).astype(BF16)


# ---------------------------------------------------------------------------
# Pass 2: m-contraction (MXU) -> regroup -> output projection (MXU) -> /norm
#   rt_ref     : [1, mid, TJ, TM]  bf16   right, pre-transposed so rows=(y,j), cols=m
#   lv_ref     : [1, TM, TI*mid]   bf16   left, rows=m, lanes=(i,x)
#   maskTj_ref : [1, TJ, TM]       f32
#   maski_ref  : [1, TM, TI]       f32
#   w2_ref     : [mid*mid, C]      bf16   w_out with rows regrouped as (y, x)
#   bout_ref   : [1, C]            f32
# ---------------------------------------------------------------------------
def opm_contract_kernel(rt_ref, lv_ref, maskTj_ref, maski_ref, w2_ref, bout_ref,
                        out_ref, p_acc, n_acc, a_buf, n_col):
    tm = pl.program_id(3)
    n_tm = pl.num_programs(3)

    _, mid, TJ, TM = rt_ref.shape
    TI = lv_ref.shape[2] // mid
    C = bout_ref.shape[1]

    @pl.when(tm == 0)
    def _():
        p_acc[...] = jnp.zeros_like(p_acc)
        n_acc[...] = jnp.zeros_like(n_acc)

    # m-contraction on the MXU:  P[(y,j), (i,x)] += sum_m right[m,j,y] * left[m,i,x]
    rt = rt_ref[0].reshape(mid * TJ, TM)               # merge leading dims (lane dim kept)
    lv = lv_ref[0]                                     # [TM, TI*mid]
    p_acc[...] += jnp.dot(rt, lv, preferred_element_type=F32)

    # norm accumulation as a tiny lane-dense MXU matmul: n[j,i] += sum_m m[m,j]*m[m,i]
    n_acc[...] += jnp.dot(maskTj_ref[0], maski_ref[0], preferred_element_type=F32)

    @pl.when(tm == n_tm - 1)
    def _():
        # Regroup P[(y,j),(i,x)] -> A[(i,j),(y,x)] and norm[(j),(i)] -> [(i,j),1]
        # using contiguous block copies only (no cross-lane relayout).
        # TODO(synk): for production tile sizes convert these static loops into a
        # lax.fori_loop over i with pl.ds/pl.multiple_of dynamic slices.
        for i in range(TI):
            n_col[i * TJ:(i + 1) * TJ, :] = n_acc[:, i:i + 1]
            for y in range(mid):
                a_buf[i * TJ:(i + 1) * TJ, y * mid:(y + 1) * mid] = (
                    p_acc[y * TJ:(y + 1) * TJ, i * mid:(i + 1) * mid])

        # Output projection: ONE [TI*TJ, mid*mid] @ [mid*mid, C] MXU matmul (K=mid^2).
        proj = jnp.dot(a_buf[...].astype(BF16), w2_ref[...],
                       preferred_element_type=F32)

        # mask-norm division via approx reciprocal (EUP slot) + multiply.
        inv = pl.reciprocal(n_col[...] + NORM_EPS, approx=True)
        res = (proj + bout_ref[...]) * inv              # [TI*TJ, C]

        # Store; last block dim = C (lane-dense at production C=128).
        out_ref[0] = res.reshape(TI, TJ, C).astype(out_ref.dtype)


# ---------------------------------------------------------------------------
# Wrapper: host-side weight repacking + cheap layout plumbing + pallas_call plumbing.
# ---------------------------------------------------------------------------
def outer_product_mean(act, mask, params):
    B, M, N, in_c = act.shape
    mid = params['w_left'].shape[1]
    C = params['w_out'].shape[1]

    # Tile sizes: full extent at these (small) shapes.  For production shapes these
    # become (8,128)-multiple tiles sized per-generation (v6e vs v7x VMEM).
    TM1 = M     # pass-1 sequence tile
    TI = N      # output row tile (left-branch residues)
    TJ = N      # output col tile (right-branch residues)
    TM = M      # pass-2 sequence (reduction) tile
    assert M % TM1 == 0 and N % TI == 0 and N % TJ == 0 and M % TM == 0

    maskf = mask.astype(F32)
    mask4 = maskf[..., None]                                               # [B, M, N, 1]
    ln = jnp.stack([params['ln_gamma'], params['ln_beta']]).astype(F32)    # [2, in_c]
    w_lr = jnp.concatenate([params['w_left'], params['w_right']], axis=1).astype(BF16)
    b_lr = jnp.concatenate([params['b_left'], params['b_right']])[None, :].astype(F32)

    # ---- pass 1: LayerNorm + left/right projection + masking ----
    left, right = pl.pallas_call(
        proj_kernel,
        out_shape=(jax.ShapeDtypeStruct((B, M, N, mid), BF16),
                   jax.ShapeDtypeStruct((B, M, N, mid), BF16)),
        grid=(B, M // TM1),
        in_specs=[
            pl.BlockSpec((1, TM1, N, in_c), lambda b, m: (b, m, 0, 0)),    # act
            pl.BlockSpec((1, TM1, N, 1), lambda b, m: (b, m, 0, 0)),       # mask
            pl.BlockSpec((2, in_c), lambda b, m: (0, 0)),                  # LN gamma/beta
            pl.BlockSpec((in_c, 2 * mid), lambda b, m: (0, 0)),            # fused L|R weight
            pl.BlockSpec((1, 2 * mid), lambda b, m: (0, 0)),               # fused L|R bias
        ],
        out_specs=[
            pl.BlockSpec((1, TM1, N, mid), lambda b, m: (b, m, 0, 0)),
            pl.BlockSpec((1, TM1, N, mid), lambda b, m: (b, m, 0, 0)),
        ],
        compiler_params=pltpu.CompilerParams(
            dimension_semantics=("parallel", "parallel")),
    )(act, mask4, ln, w_lr, b_lr)

    # Cheap layout plumbing (left reshape is free; right/mask transposes touch only
    # the small [B,M,N,mid] / [B,M,N] tensors, not act or the [B,N,N,C] output).
    left_v = left.reshape(B, M, N * mid)                  # rows m, lanes (i, x)
    rt = jnp.transpose(right, (0, 3, 2, 1))               # [B, mid, N, M] rows (y, j)
    maskT = jnp.swapaxes(maskf, 1, 2)                     # [B, N, M]

    # w_out rows are (x*mid + y); regroup host-side to (y*mid + x) to match A's lanes.
    w_out2 = (params['w_out'].reshape(mid, mid, C).transpose(1, 0, 2)
              .reshape(mid * mid, C).astype(BF16))
    b_out2 = params['b_out'][None, :].astype(F32)                          # [1, C]

    # ---- pass 2: MXU m-contraction + regroup + output projection + /norm ----
    out = pl.pallas_call(
        opm_contract_kernel,
        out_shape=jax.ShapeDtypeStruct((B, N, N, C), F32),
        grid=(B, N // TI, N // TJ, M // TM),
        in_specs=[
            pl.BlockSpec((1, mid, TJ, TM), lambda b, i, j, m: (b, 0, j, m)),   # right^T
            pl.BlockSpec((1, TM, TI * mid), lambda b, i, j, m: (b, m, i)),     # left (merged lanes)
            pl.BlockSpec((1, TJ, TM), lambda b, i, j, m: (b, j, m)),           # mask^T (j tile)
            pl.BlockSpec((1, TM, TI), lambda b, i, j, m: (b, m, i)),           # mask   (i tile)
            pl.BlockSpec((mid * mid, C), lambda b, i, j, m: (0, 0)),           # w_out (regrouped)
            pl.BlockSpec((1, C), lambda b, i, j, m: (0, 0)),                   # b_out
        ],
        out_specs=pl.BlockSpec((1, TI, TJ, C), lambda b, i, j, m: (b, i, j, 0)),
        scratch_shapes=[
            pltpu.VMEM((mid * TJ, TI * mid), F32),   # P accumulator
            pltpu.VMEM((TJ, TI), F32),               # norm accumulator
            pltpu.VMEM((TI * TJ, mid * mid), F32),   # regrouped A
            pltpu.VMEM((TI * TJ, 1), F32),           # regrouped norm column
        ],
        compiler_params=pltpu.CompilerParams(
            dimension_semantics=("parallel", "parallel", "parallel", "arbitrary")),
    )(rt, left_v, maskT, maskf, w_out2, b_out2)
    return out


# ---------------------------------------------------------------------------
# Pure-JAX reference (mirrors the PyTorch forward exactly) + parameter init.
# ---------------------------------------------------------------------------
def opm_reference(act, mask, params):
    mu = jnp.mean(act, -1, keepdims=True)
    var = jnp.mean((act - mu) ** 2, -1, keepdims=True)
    a = (act - mu) / jnp.sqrt(var + LN_EPS) * params['ln_gamma'] + params['ln_beta']
    m = mask[..., None]
    left = m * (a @ params['w_left'] + params['b_left'])
    right = m * (a @ params['w_right'] + params['b_right'])
    x2d = jnp.einsum('bmix,bmjy->bjixy', left, right)
    B, Nj, Ni, mx, my = x2d.shape
    out = x2d.reshape(B, Nj, Ni, mx * my) @ params['w_out'] + params['b_out']
    out = jnp.swapaxes(out, 1, 2)                         # .transpose(-2, -3)
    norm = jnp.einsum('bmi,bmj->bij', mask, mask)[..., None]
    return out / (norm + NORM_EPS)


def init_params(key, in_c, mid, out_c):
    ks = jax.random.split(key, 8)

    def w(k, i, o):
        return jax.random.normal(k, (i, o), F32) / np.sqrt(i)

    return {
        'ln_gamma': 1.0 + 0.1 * jax.random.normal(ks[0], (in_c,), F32),
        'ln_beta': 0.1 * jax.random.normal(ks[1], (in_c,), F32),
        'w_left': w(ks[2], in_c, mid),
        'b_left': 0.02 * jax.random.normal(ks[3], (mid,), F32),
        'w_right': w(ks[4], in_c, mid),
        'b_right': 0.02 * jax.random.normal(ks[5], (mid,), F32),
        'w_out': w(ks[6], mid * mid, out_c),
        'b_out': 0.02 * jax.random.normal(ks[7], (out_c,), F32),
    }


# ---------------------------------------------------------------------------
if __name__ == "__main__":
    B, M, N = 2, 8, 16              # batch, n_seq, n_res
    IN_C, MID_C, OUT_C = 32, 8, 32  # norm_channel, num_outer_channel, num_output_channel

    root = jax.random.PRNGKey(0)
    k_act, k_mask, k_par = jax.random.split(root, 3)
    act = jax.random.normal(k_act, (B, M, N, IN_C), F32)
    mask = (jax.random.uniform(k_mask, (B, M, N)) > 0.2).astype(F32)
    params = init_params(k_par, IN_C, MID_C, OUT_C)

    fwd = jax.jit(outer_product_mean)
    out = jax.block_until_ready(fwd(act, mask, params))

    assert out.shape == (B, N, N, OUT_C), out.shape
    assert bool(jnp.all(jnp.isfinite(out)))

    # Tolerances account for bf16 MXU operands (f32 accumulation) vs the f32 reference.
    ref = opm_reference(act, mask, params)
    np.testing.assert_allclose(np.asarray(out), np.asarray(ref), rtol=2e-2, atol=5e-2)

    print("KERNEL_OK")
</pallas_src>

<mosaic_0001>
module attributes {stable_mosaic.version = 11 : i64} {
  func.func @proj_kernel(%arg0: i32, %arg1: i32, %arg2: memref<1x8x16x32xf32, #tpu.memory_space<vmem>>, %arg3: memref<1x8x16x1xf32, #tpu.memory_space<vmem>>, %arg4: memref<2x32xf32, #tpu.memory_space<vmem>>, %arg5: memref<32x16xbf16, #tpu.memory_space<vmem>>, %arg6: memref<1x16xf32, #tpu.memory_space<vmem>>, %arg7: memref<1x8x16x8xbf16, #tpu.memory_space<vmem>>, %arg8: memref<1x8x16x8xbf16, #tpu.memory_space<vmem>>) attributes {dimension_semantics = [#tpu.dimension_semantics<parallel>, #tpu.dimension_semantics<parallel>], iteration_bounds = array<i64: 2, 1>, scalar_prefetch = 0 : i64, scratch_operands = 0 : i64, tpu.core_type = #tpu.core_type<tc>, window_params = [{transform_indices = @transform_0, window_bounds = array<i64: 1, 8, 16, 32>}, {transform_indices = @transform_1, window_bounds = array<i64: 1, 8, 16, 1>}, {pipeline_mode = #tpu.pipeline_mode<synchronous>, transform_indices = @transform_2, window_bounds = array<i64: 2, 32>}, {pipeline_mode = #tpu.pipeline_mode<synchronous>, transform_indices = @transform_3, window_bounds = array<i64: 32, 16>}, {pipeline_mode = #tpu.pipeline_mode<synchronous>, transform_indices = @transform_4, window_bounds = array<i64: 1, 16>}, {transform_indices = @transform_5, window_bounds = array<i64: 1, 8, 16, 8>}, {transform_indices = @transform_6, window_bounds = array<i64: 1, 8, 16, 8>}]} {
    %c0 = arith.constant 0 : index
    %c0_0 = arith.constant 0 : index
    %c0_1 = arith.constant 0 : index
    %c0_2 = arith.constant 0 : index
    %0 = vector.load %arg2[%c0, %c0_0, %c0_1, %c0_2] : memref<1x8x16x32xf32, #tpu.memory_space<vmem>>, vector<1x8x16x32xf32>
    %1 = vector.shape_cast %0 : vector<1x8x16x32xf32> to vector<8x16x32xf32>
    %2 = vector.shape_cast %1 : vector<8x16x32xf32> to vector<128x32xf32>
    %c0_3 = arith.constant 0 : index
    %c0_4 = arith.constant 0 : index
    %3 = vector.load %arg4[%c0_3, %c0_4] : memref<2x32xf32, #tpu.memory_space<vmem>>, vector<2x32xf32>
    %cst = arith.constant dense<0.000000e+00> : vector<128xf32>
    %4 = vector.multi_reduction <add>, %2, %cst [1] : vector<128x32xf32> to vector<128xf32>
    %5 = vector.shape_cast %4 : vector<128xf32> to vector<128x1xf32>
    %cst_5 = arith.constant 3.200000e+01 : f32
    %6 = vector.broadcast %cst_5 : f32 to vector<128x1xf32>
    %7 = arith.divf %5, %6 : vector<128x1xf32>
    %8 = vector.broadcast %7 : vector<128x1xf32> to vector<128x32xf32>
    %9 = arith.subf %2, %8 : vector<128x32xf32>
    %10 = arith.mulf %9, %9 : vector<128x32xf32>
    %cst_6 = arith.constant dense<0.000000e+00> : vector<128xf32>
    %11 = vector.multi_reduction <add>, %10, %cst_6 [1] : vector<128x32xf32> to vector<128xf32>
    %12 = vector.shape_cast %11 : vector<128xf32> to vector<128x1xf32>
    %cst_7 = arith.constant 3.200000e+01 : f32
    %13 = vector.broadcast %cst_7 : f32 to vector<128x1xf32>
    %14 = arith.divf %12, %13 : vector<128x1xf32>
    %15 = vector.broadcast %7 : vector<128x1xf32> to vector<128x32xf32>
    %16 = arith.subf %2, %15 : vector<128x32xf32>
    %cst_8 = arith.constant 9.99999974E-6 : f32
    %17 = vector.broadcast %cst_8 : f32 to vector<128x1xf32>
    %18 = arith.addf %14, %17 : vector<128x1xf32>
    %19 = math.rsqrt %18 : vector<128x1xf32>
    %20 = vector.broadcast %19 : vector<128x1xf32> to vector<128x32xf32>
    %21 = arith.mulf %16, %20 : vector<128x32xf32>
    %22 = vector.extract_strided_slice %3 {offsets = [0, 0], sizes = [1, 32], strides = [1, 1]} : vector<2x32xf32> to vector<1x32xf32>
    %23 = vector.broadcast %22 : vector<1x32xf32> to vector<128x32xf32>
    %24 = arith.mulf %21, %23 : vector<128x32xf32>
    %25 = vector.extract_strided_slice %3 {offsets = [1, 0], sizes = [1, 32], strides = [1, 1]} : vector<2x32xf32> to vector<1x32xf32>
    %26 = vector.broadcast %25 : vector<1x32xf32> to vector<128x32xf32>
    %27 = arith.addf %24, %26 : vector<128x32xf32>
    %c0_9 = arith.constant 0 : index
    %c0_10 = arith.constant 0 : index
    %c0_11 = arith.constant 0 : index
    %c0_12 = arith.constant 0 : index
    %28 = vector.load %arg3[%c0_9, %c0_10, %c0_11, %c0_12] : memref<1x8x16x1xf32, #tpu.memory_space<vmem>>, vector<1x8x16x1xf32>
    %29 = vector.shape_cast %28 : vector<1x8x16x1xf32> to vector<8x16x1xf32>
    %30 = vector.shape_cast %29 : vector<8x16x1xf32> to vector<128x1xf32>
    %31 = arith.truncf %27 : vector<128x32xf32> to vector<128x32xbf16>
    %c0_13 = arith.constant 0 : index
    %c0_14 = arith.constant 0 : index
    %32 = vector.load %arg5[%c0_13, %c0_14] : memref<32x16xbf16, #tpu.memory_space<vmem>>, vector<32x16xbf16>
    %cst_15 = arith.constant dense<0.000000e+00> : vector<128x16xf32>
    %33 = tpu.matmul %31, %32, %cst_15 {dimension_numbers = #tpu.dot_dimension_numbers<[1], [0], [0], [1], [0, 0, 1, 1], [], []>} : vector<128x32xbf16>, vector<32x16xbf16>, vector<128x16xf32> -> vector<128x16xf32>
    %c0_16 = arith.constant 0 : index
    %c0_17 = arith.constant 0 : index
    %34 = vector.load %arg6[%c0_16, %c0_17] : memref<1x16xf32, #tpu.memory_space<vmem>>, vector<1x16xf32>
    %35 = vector.broadcast %34 : vector<1x16xf32> to vector<128x16xf32>
    %36 = arith.addf %33, %35 : vector<128x16xf32>
    %37 = vector.broadcast %30 : vector<128x1xf32> to vector<128x16xf32>
    %38 = arith.mulf %36, %37 : vector<128x16xf32>
    %39 = vector.extract_strided_slice %38 {offsets = [0, 0], sizes = [128, 8], strides = [1, 1]} : vector<128x16xf32> to vector<128x8xf32>
    %40 = vector.shape_cast %39 : vector<128x8xf32> to vector<8x16x8xf32>
    %41 = arith.truncf %40 : vector<8x16x8xf32> to vector<8x16x8xbf16>
    %c0_18 = arith.constant 0 : index
    %c0_19 = arith.constant 0 : index
    %c0_20 = arith.constant 0 : index
    %c0_21 = arith.constant 0 : index
    %42 = vector.load %arg7[%c0_18, %c0_19, %c0_20, %c0_21] : memref<1x8x16x8xbf16, #tpu.memory_space<vmem>>, vector<1x8x16x8xbf16>
    %43 = vector.shape_cast %42 : vector<1x8x16x8xbf16> to vector<8x16x8xbf16>
    %44 = vector.shape_cast %41 : vector<8x16x8xbf16> to vector<1x8x16x8xbf16>
    tpu.vector_store %arg7[%c0_18, %c0_19, %c0_20, %c0_21], %44 {strides = array<i32>} : memref<1x8x16x8xbf16, #tpu.memory_space<vmem>>, vector<1x8x16x8xbf16>,
    %45 = vector.extract_strided_slice %38 {offsets = [0, 8], sizes = [128, 8], strides = [1, 1]} : vector<128x16xf32> to vector<128x8xf32>
    %46 = vector.shape_cast %45 : vector<128x8xf32> to vector<8x16x8xf32>
    %47 = arith.truncf %46 : vector<8x16x8xf32> to vector<8x16x8xbf16>
    %c0_22 = arith.constant 0 : index
    %c0_23 = arith.constant 0 : index
    %c0_24 = arith.constant 0 : index
    %c0_25 = arith.constant 0 : index
    %48 = vector.load %arg8[%c0_22, %c0_23, %c0_24, %c0_25] : memref<1x8x16x8xbf16, #tpu.memory_space<vmem>>, vector<1x8x16x8xbf16>
    %49 = vector.shape_cast %48 : vector<1x8x16x8xbf16> to vector<8x16x8xbf16>
    %50 = vector.shape_cast %47 : vector<8x16x8xbf16> to vector<1x8x16x8xbf16>
    tpu.vector_store %arg8[%c0_22, %c0_23, %c0_24, %c0_25], %50 {strides = array<i32>} : memref<1x8x16x8xbf16, #tpu.memory_space<vmem>>, vector<1x8x16x8xbf16>,
    return
  }
  func.func @transform_0(%arg0: i32, %arg1: i32) -> (i32, i32, i32, i32) {
    %c0_i32 = arith.constant 0 : i32
    %c0_i32_0 = arith.constant 0 : i32
    %c0_i32_1 = arith.constant 0 : i32
    return %arg0, %arg1, %c0_i32, %c0_i32_0 : i32, i32, i32, i32
  }
  func.func @transform_1(%arg0: i32, %arg1: i32) -> (i32, i32, i32, i32) {
    %c0_i32 = arith.constant 0 : i32
    %c0_i32_0 = arith.constant 0 : i32
    %c0_i32_1 = arith.constant 0 : i32
    return %arg0, %arg1, %c0_i32, %c0_i32_0 : i32, i32, i32, i32
  }
  func.func @transform_2(%arg0: i32, %arg1: i32) -> (i32, i32) {
    %c0_i32 = arith.constant 0 : i32
    %c0_i32_0 = arith.constant 0 : i32
    %c0_i32_1 = arith.constant 0 : i32
    return %c0_i32, %c0_i32_0 : i32, i32
  }
  func.func @transform_3(%arg0: i32, %arg1: i32) -> (i32, i32) {
    %c0_i32 = arith.constant 0 : i32
    %c0_i32_0 = arith.constant 0 : i32
    %c0_i32_1 = arith.constant 0 : i32
    return %c0_i32, %c0_i32_0 : i32, i32
  }
  func.func @transform_4(%arg0: i32, %arg1: i32) -> (i32, i32) {
    %c0_i32 = arith.constant 0 : i32
    %c0_i32_0 = arith.constant 0 : i32
    %c0_i32_1 = arith.constant 0 : i32
    return %c0_i32, %c0_i32_0 : i32, i32
  }
  func.func @transform_5(%arg0: i32, %arg1: i32) -> (i32, i32, i32, i32) {
    %c0_i32 = arith.constant 0 : i32
    %c0_i32_0 = arith.constant 0 : i32
    %c0_i32_1 = arith.constant 0 : i32
    return %arg0, %arg1, %c0_i32, %c0_i32_0 : i32, i32, i32, i32
  }
  func.func @transform_6(%arg0: i32, %arg1: i32) -> (i32, i32, i32, i32) {
    %c0_i32 = arith.constant 0 : i32
    %c0_i32_0 = arith.constant 0 : i32
    %c0_i32_1 = arith.constant 0 : i32
    return %arg0, %arg1, %c0_i32, %c0_i32_0 : i32, i32, i32, i32
  }
}

module attributes {stable_mosaic.version = 11 : i64} {
  func.func @opm_contract_kernel(%arg0: i32, %arg1: i32, %arg2: i32, %arg3: i32, %arg4: memref<1x8x16x8xbf16, #tpu.memory_space<vmem>>, %arg5: memref<1x8x128xbf16, #tpu.memory_space<vmem>>, %arg6: memref<1x16x8xf32, #tpu.memory_space<vmem>>, %arg7: memref<1x8x16xf32, #tpu.memory_space<vmem>>, %arg8: memref<64x32xbf16, #tpu.memory_space<vmem>>, %arg9: memref<1x32xf32, #tpu.memory_space<vmem>>, %arg10: memref<1x16x16x32xf32, #tpu.memory_space<vmem>>, %arg11: memref<128x128xf32, #tpu.memory_space<vmem>>, %arg12: memref<16x16xf32, #tpu.memory_space<vmem>>, %arg13: memref<256x64xf32, #tpu.memory_space<vmem>>, %arg14: memref<256x1xf32, #tpu.memory_space<vmem>>) attributes {dimension_semantics = [#tpu.dimension_semantics<parallel>, #tpu.dimension_semantics<parallel>, #tpu.dimension_semantics<parallel>, #tpu.dimension_semantics<arbitrary>], iteration_bounds = array<i64: 2, 1, 1, 1>, scalar_prefetch = 0 : i64, scratch_operands = 4 : i64, tpu.core_type = #tpu.core_type<tc>, window_params = [{transform_indices = @transform_0, window_bounds = array<i64: 1, 8, 16, 8>}, {transform_indices = @transform_1, window_bounds = array<i64: 1, 8, 128>}, {transform_indices = @transform_2, window_bounds = array<i64: 1, 16, 8>}, {transform_indices = @transform_3, window_bounds = array<i64: 1, 8, 16>}, {pipeline_mode = #tpu.pipeline_mode<synchronous>, transform_indices = @transform_4, window_bounds = array<i64: 64, 32>}, {pipeline_mode = #tpu.pipeline_mode<synchronous>, transform_indices = @transform_5, window_bounds = array<i64: 1, 32>}, {transform_indices = @transform_6, window_bounds = array<i64: 1, 16, 16, 32>}]} {
    %c0_i32 = arith.constant 0 : i32
    %0 = arith.cmpi eq, %arg3, %c0_i32 : i32
    %1 = arith.extui %0 : i1 to i32
    %c0_i32_0 = arith.constant 0 : i32
    %2 = arith.cmpi ne, %1, %c0_i32_0 : i32
    scf.if %2 {
      %cst_24 = arith.constant 0.000000e+00 : f32
      %23 = vector.broadcast %cst_24 : f32 to vector<128x128xf32>
      %c0_25 = arith.constant 0 : index
      %c0_26 = arith.constant 0 : index
      %24 = vector.load %arg11[%c0_25, %c0_26] : memref<128x128xf32, #tpu.memory_space<vmem>>, vector<128x128xf32>
      tpu.vector_store %arg11[%c0_25, %c0_26], %23 {strides = array<i32>} : memref<128x128xf32, #tpu.memory_space<vmem>>, vector<128x128xf32>,
      %cst_27 = arith.constant 0.000000e+00 : f32
      %25 = vector.broadcast %cst_27 : f32 to vector<16x16xf32>
      %c0_28 = arith.constant 0 : index
      %c0_29 = arith.constant 0 : index
      %26 = vector.load %arg12[%c0_28, %c0_29] : memref<16x16xf32, #tpu.memory_space<vmem>>, vector<16x16xf32>
      tpu.vector_store %arg12[%c0_28, %c0_29], %25 {strides = array<i32>} : memref<16x16xf32, #tpu.memory_space<vmem>>, vector<16x16xf32>,
    } else {
    }
    %c0 = arith.constant 0 : index
    %c0_1 = arith.constant 0 : index
    %c0_2 = arith.constant 0 : index
    %c0_3 = arith.constant 0 : index
    %3 = vector.load %arg4[%c0, %c0_1, %c0_2, %c0_3] : memref<1x8x16x8xbf16, #tpu.memory_space<vmem>>, vector<1x8x16x8xbf16>
    %4 = vector.shape_cast %3 : vector<1x8x16x8xbf16> to vector<8x16x8xbf16>
    %5 = vector.shape_cast %4 : vector<8x16x8xbf16> to vector<128x8xbf16>
    %c0_4 = arith.constant 0 : index
    %c0_5 = arith.constant 0 : index
    %c0_6 = arith.constant 0 : index
    %6 = vector.load %arg5[%c0_4, %c0_5, %c0_6] : memref<1x8x128xbf16, #tpu.memory_space<vmem>>, vector<1x8x128xbf16>
    %7 = vector.shape_cast %6 : vector<1x8x128xbf16> to vector<8x128xbf16>
    %c0_7 = arith.constant 0 : index
    %c0_8 = arith.constant 0 : index
    %8 = vector.load %arg11[%c0_7, %c0_8] : memref<128x128xf32, #tpu.memory_space<vmem>>, vector<128x128xf32>
    %cst = arith.constant dense<0.000000e+00> : vector<128x128xf32>
    %9 = tpu.matmul %5, %7, %cst {dimension_numbers = #tpu.dot_dimension_numbers<[1], [0], [0], [1], [0, 0, 1, 1], [], []>} : vector<128x8xbf16>, vector<8x128xbf16>, vector<128x128xf32> -> vector<128x128xf32>
    %10 = arith.addf %8, %9 : vector<128x128xf32>
    %c0_9 = arith.constant 0 : index
    %c0_10 = arith.constant 0 : index
    %11 = vector.load %arg11[%c0_9, %c0_10] : memref<128x128xf32, #tpu.memory_space<vmem>>, vector<128x128xf32>
    tpu.vector_store %arg11[%c0_9, %c0_10], %10 {strides = array<i32>} : memref<128x128xf32, #tpu.memory_space<vmem>>, vector<128x128xf32>,
    %c0_11 = arith.constant 0 : index
    %c0_12 = arith.constant 0 : index
    %12 = vector.load %arg12[%c0_11, %c0_12] : memref<16x16xf32, #tpu.memory_space<vmem>>, vector<16x16xf32>
    %c0_13 = arith.constant 0 : index
    %c0_14 = arith.constant 0 : index
    %c0_15 = arith.constant 0 : index
    %13 = vector.load %arg6[%c0_13, %c0_14, %c0_15] : memref<1x16x8xf32, #tpu.memory_space<vmem>>, vector<1x16x8xf32>
    %14 = vector.shape_cast %13 : vector<1x16x8xf32> to vector<16x8xf32>
    %c0_16 = arith.constant 0 : index
    %c0_17 = arith.constant 0 : index
    %c0_18 = arith.constant 0 : index
    %15 = vector.load %arg7[%c0_16, %c0_17, %c0_18] : memref<1x8x16xf32, #tpu.memory_space<vmem>>, vector<1x8x16xf32>
    %16 = vector.shape_cast %15 : vector<1x8x16xf32> to vector<8x16xf32>
    %cst_19 = arith.constant dense<0.000000e+00> : vector<16x16xf32>
    %17 = tpu.matmul %14, %16, %cst_19 {dimension_numbers = #tpu.dot_dimension_numbers<[1], [0], [0], [1], [0, 0, 1, 1], [], []>} : vector<16x8xf32>, vector<8x16xf32>, vector<16x16xf32> -> vector<16x16xf32>
    %18 = arith.addf %12, %17 : vector<16x16xf32>
    %c0_20 = arith.constant 0 : index
    %c0_21 = arith.constant 0 : index
    %19 = vector.load %arg12[%c0_20, %c0_21] : memref<16x16xf32, #tpu.memory_space<vmem>>, vector<16x16xf32>
    tpu.vector_store %arg12[%c0_20, %c0_21], %18 {strides = array<i32>} : memref<16x16xf32, #tpu.memory_space<vmem>>, vector<16x16xf32>,
    %c0_i32_22 = arith.constant 0 : i32
    %20 = arith.cmpi eq, %arg3, %c0_i32_22 : i32
    %21 = arith.extui %20 : i1 to i32
    %c0_i32_23 = arith.constant 0 : i32
    %22 = arith.cmpi ne, %21, %c0_i32_23 : i32
    scf.if %22 {
      %c0_24 = arith.constant 0 : index
      %c0_25 = arith.constant 0 : index
      %23 = vector.load %arg12[%c0_24, %c0_25] : memref<16x16xf32, #tpu.memory_space<vmem>>, vector<16x1xf32>
      %c0_26 = arith.constant 0 : index
      %c0_27 = arith.constant 0 : index
      %24 = vector.load %arg14[%c0_26, %c0_27] : memref<256x1xf32, #tpu.memory_space<vmem>>, vector<16x1xf32>
      tpu.vector_store %arg14[%c0_26, %c0_27], %23 {strides = array<i32>} : memref<256x1xf32, #tpu.memory_space<vmem>>, vector<16x1xf32>,
      %c0_28 = arith.constant 0 : index
      %c0_29 = arith.constant 0 : index
      %25 = vector.load %arg11[%c0_28, %c0_29] : memref<128x128xf32, #tpu.memory_space<vmem>>, vector<16x8xf32>
      %c0_30 = arith.constant 0 : index
      %c0_31 = arith.constant 0 : index
      %26 = vector.load %arg13[%c0_30, %c0_31] : memref<256x64xf32, #tpu.memory_space<vmem>>, vector<16x8xf32>
      tpu.vector_store %arg13[%c0_30, %c0_31], %25 {strides = array<i32>} : memref<256x64xf32, #tpu.memory_space<vmem>>, vector<16x8xf32>,
      %c16 = arith.constant 16 : index
      %c0_32 = arith.constant 0 : index
      %27 = vector.load %arg11[%c16, %c0_32] : memref<128x128xf32, #tpu.memory_space<vmem>>, vector<16x8xf32>
      %c0_33 = arith.constant 0 : index
      %c8 = arith.constant 8 : index
      %28 = vector.load %arg13[%c0_33, %c8] : memref<256x64xf32, #tpu.memory_space<vmem>>, vector<16x8xf32>
      tpu.vector_store %arg13[%c0_33, %c8], %27 {strides = array<i32>} : memref<256x64xf32, #tpu.memory_space<vmem>>, vector<16x8xf32>,
      %c32 = arith.constant 32 : index
      %c0_34 = arith.constant 0 : index
      %29 = vector.load %arg11[%c32, %c0_34] : memref<128x128xf32, #tpu.memory_space<vmem>>, vector<16x8xf32>
      %c0_35 = arith.constant 0 : index
      %c16_36 = arith.constant 16 : index
      %30 = vector.load %arg13[%c0_35, %c16_36] : memref<256x64xf32, #tpu.memory_space<vmem>>, vector<16x8xf32>
      tpu.vector_store %arg13[%c0_35, %c16_36], %29 {strides = array<i32>} : memref<256x64xf32, #tpu.memory_space<vmem>>, vector<16x8xf32>,
      %c48 = arith.constant 48 : index
      %c0_37 = arith.constant 0 : index
      %31 = vector.load %arg11[%c48, %c0_37] : memref<128x128xf32, #tpu.memory_space<vmem>>, vector<16x8xf32>
      %c0_38 = arith.constant 0 : index
      %c24 = arith.constant 24 : index
      %32 = vector.load %arg13[%c0_38, %c24] : memref<256x64xf32, #tpu.memory_space<vmem>>, vector<16x8xf32>
      tpu.vector_store %arg13[%c0_38, %c24], %31 {strides = array<i32>} : memref<256x64xf32, #tpu.memory_space<vmem>>, vector<16x8xf32>,
      %c64 = arith.constant 64 : index
      %c0_39 = arith.constant 0 : index
      %33 = vector.load %arg11[%c64, %c0_39] : memref<128x128xf32, #tpu.memory_space<vmem>>, vector<16x8xf32>
      %c0_40 = arith.constant 0 : index
      %c32_41 = arith.constant 32 : index
      %34 = vector.load %arg13[%c0_40, %c32_41] : memref<256x64xf32, #tpu.memory_space<vmem>>, vector<16x8xf32>
      tpu.vector_store %arg13[%c0_40, %c32_41], %33 {strides = array<i32>} : memref<256x64xf32, #tpu.memory_space<vmem>>, vector<16x8xf32>,
      %c80 = arith.constant 80 : index
      %c0_42 = arith.constant 0 : index
      %35 = vector.load %arg11[%c80, %c0_42] : memref<128x128xf32, #tpu.memory_space<vmem>>, vector<16x8xf32>
      %c0_43 = arith.constant 0 : index
      %c40 = arith.constant 40 : index
      %36 = vector.load %arg13[%c0_43, %c40] : memref<256x64xf32, #tpu.memory_space<vmem>>, vector<16x8xf32>
      tpu.vector_store %arg13[%c0_43, %c40], %35 {strides = array<i32>} : memref<256x64xf32, #tpu.memory_space<vmem>>, vector<16x8xf32>,
      %c96 = arith.constant 96 : index
      %c0_44 = arith.constant 0 : index
      %37 = vector.load %arg11[%c96, %c0_44] : memref<128x128xf32, #tpu.memory_space<vmem>>, vector<16x8xf32>
      %c0_45 = arith.constant 0 : index
      %c48_46 = arith.constant 48 : index
      %38 = vector.load %arg13[%c0_45, %c48_46] : memref<256x64xf32, #tpu.memory_space<vmem>>, vector<16x8xf32>
      tpu.vector_store %arg13[%c0_45, %c48_46], %37 {strides = array<i32>} : memref<256x64xf32, #tpu.memory_space<vmem>>, vector<16x8xf32>,
      %c112 = arith.constant 112 : index
      %c0_47 = arith.constant 0 : index
      %39 = vector.load %arg11[%c112, %c0_47] : memref<128x128xf32, #tpu.memory_space<vmem>>, vector<16x8xf32>
      %c0_48 = arith.constant 0 : index
      %c56 = arith.constant 56 : index
      %40 = vector.load %arg13[%c0_48, %c56] : memref<256x64xf32, #tpu.memory_space<vmem>>, vector<16x8xf32>
      tpu.vector_store %arg13[%c0_48, %c56], %39 {strides = array<i32>} : memref<256x64xf32, #tpu.memory_space<vmem>>, vector<16x8xf32>,
      %c0_49 = arith.constant 0 : index
      %c1 = arith.constant 1 : index
      %41 = vector.load %arg12[%c0_49, %c1] : memref<16x16xf32, #tpu.memory_space<vmem>>, vector<16x1xf32>
      %c16_50 = arith.constant 16 : index
      %c0_51 = arith.constant 0 : index
      %42 = vector.load %arg14[%c16_50, %c0_51] : memref<256x1xf32, #tpu.memory_space<vmem>>, vector<16x1xf32>
      tpu.vector_store %arg14[%c16_50, %c0_51], %41 {strides = array<i32>} : memref<256x1xf32, #tpu.memory_space<vmem>>, vector<16x1xf32>,
      %c0_52 = arith.constant 0 : index
      %c8_53 = arith.constant 8 : index
      %43 = vector.load %arg11[%c0_52, %c8_53] : memref<128x128xf32, #tpu.memory_space<vmem>>, vector<16x8xf32>
      %c16_54 = arith.constant 16 : index
      %c0_55 = arith.constant 0 : index
      %44 = vector.load %arg13[%c16_54, %c0_55] : memref<256x64xf32, #tpu.memory_space<vmem>>, vector<16x8xf32>
      tpu.vector_store %arg13[%c16_54, %c0_55], %43 {strides = array<i32>} : memref<256x64xf32, #tpu.memory_space<vmem>>, vector<16x8xf32>,
      %c16_56 = arith.constant 16 : index
      %c8_57 = arith.constant 8 : index
      %45 = vector.load %arg11[%c16_56, %c8_57] : memref<128x128xf32, #tpu.memory_space<vmem>>, vector<16x8xf32>
      %c16_58 = arith.constant 16 : index
      %c8_59 = arith.constant 8 : index
      %46 = vector.load %arg13[%c16_58, %c8_59] : memref<256x64xf32, #tpu.memory_space<vmem>>, vector<16x8xf32>
      tpu.vector_store %arg13[%c16_58, %c8_59], %45 {strides = array<i32>} : memref<256x64xf32, #tpu.memory_space<vmem>>, vector<16x8xf32>,
      %c32_60 = arith.constant 32 : index
      %c8_61 = arith.constant 8 : index
      %47 = vector.load %arg11[%c32_60, %c8_61] : memref<128x128xf32, #tpu.memory_space<vmem>>, vector<16x8xf32>
      %c16_62 = arith.constant 16 : index
      %c16_63 = arith.constant 16 : index
      %48 = vector.load %arg13[%c16_62, %c16_63] : memref<256x64xf32, #tpu.memory_space<vmem>>, vector<16x8xf32>
      tpu.vector_store %arg13[%c16_62, %c16_63], %47 {strides = array<i32>} : memref<256x64xf32, #tpu.memory_space<vmem>>, vector<16x8xf32>,
      %c48_64 = arith.constant 48 : index
      %c8_65 = arith.constant 8 : index
      %49 = vector.load %arg11[%c48_64, %c8_65] : memref<128x128xf32, #tpu.memory_space<vmem>>, vector<16x8xf32>
      %c16_66 = arith.constant 16 : index
      %c24_67 = arith.constant 24 : index
      %50 = vector.load %arg13[%c16_66, %c24_67] : memref<256x64xf32, #tpu.memory_space<vmem>>, vector<16x8xf32>
      tpu.vector_store %arg13[%c16_66, %c24_67], %49 {strides = array<i32>} : memref<256x64xf32, #tpu.memory_space<vmem>>, vector<16x8xf32>,
      %c64_68 = arith.constant 64 : index
      %c8_69 = arith.constant 8 : index
      %51 = vector.load %arg11[%c64_68, %c8_69] : memref<128x128xf32, #tpu.memory_space<vmem>>, vector<16x8xf32>
      %c16_70 = arith.constant 16 : index
      %c32_71 = arith.constant 32 : index
      %52 = vector.load %arg13[%c16_70, %c32_71] : memref<256x64xf32, #tpu.memory_space<vmem>>, vector<16x8xf32>
      tpu.vector_store %arg13[%c16_70, %c32_71], %51 {strides = array<i32>} : memref<256x64xf32, #tpu.memory_space<vmem>>, vector<16x8xf32>,
      %c80_72 = arith.constant 80 : index
      %c8_73 = arith.constant 8 : index
      %53 = vector.load %arg11[%c80_72, %c8_73] : memref<128x128xf32, #tpu.memory_space<vmem>>, vector<16x8xf32>
      %c16_74 = arith.constant 16 : index
      %c40_75 = arith.constant 40 : index
      %54 = vector.load %arg13[%c16_74, %c40_75] : memref<256x64xf32, #tpu.memory_space<vmem>>, vector<16x8xf32>
      tpu.vector_store %arg13[%c16_74, %c40_75], %53 {strides = array<i32>} : memref<256x64xf32, #tpu.memory_space<vmem>>, vector<16x8xf32>,
      %c96_76 = arith.constant 96 : index
      %c8_77 = arith.constant 8 : index
      %55 = vector.load %arg11[%c96_76, %c8_77] : memref<128x128xf32, #tpu.memory_space<vmem>>, vector<16x8xf32>
      %c16_78 = arith.constant 16 : index
      %c48_79 = arith.constant 48 : index
      %56 = vector.load %arg13[%c16_78, %c48_79] : memref<256x64xf32, #tpu.memory_space<vmem>>, vector<16x8xf32>
      tpu.vector_store %arg13[%c16_78, %c48_79], %55 {strides = array<i32>} : memref<256x64xf32, #tpu.memory_space<vmem>>, vector<16x8xf32>,
      %c112_80 = arith.constant 112 : index
      %c8_81 = arith.constant 8 : index
      %57 = vector.load %arg11[%c112_80, %c8_81] : memref<128x128xf32, #tpu.memory_space<vmem>>, vector<16x8xf32>
      %c16_82 = arith.constant 16 : index
      %c56_83 = arith.constant 56 : index
      %58 = vector.load %arg13[%c16_82, %c56_83] : memref<256x64xf32, #tpu.memory_space<vmem>>, vector<16x8xf32>
      tpu.vector_store %arg13[%c16_82, %c56_83], %57 {strides = array<i32>} : memref<256x64xf32, #tpu.memory_space<vmem>>, vector<16x8xf32>,
      %c0_84 = arith.constant 0 : index
      %c2 = arith.constant 2 : index
      %59 = vector.load %arg12[%c0_84, %c2] : memref<16x16xf32, #tpu.memory_space<vmem>>, vector<16x1xf32>
      %c32_85 = arith.constant 32 : index
      %c0_86 = arith.constant 0 : index
      %60 = vector.load %arg14[%c32_85, %c0_86] : memref<256x1xf32, #tpu.memory_space<vmem>>, vector<16x1xf32>
      tpu.vector_store %arg14[%c32_85, %c0_86], %59 {strides = array<i32>} : memref<256x1xf32, #tpu.memory_space<vmem>>, vector<16x1xf32>,
      %c0_87 = arith.constant 0 : index
      %c16_88 = arith.constant 16 : index
      %61 = vector.load %arg11[%c0_87, %c16_88] : memref<128x128xf32, #tpu.memory_space<vmem>>, vector<16x8xf32>
      %c32_89 = arith.constant 32 : index
      %c0_90 = arith.constant 0 : index
      %62 = vector.load %arg13[%c32_89, %c0_90] : memref<256x64xf32, #tpu.memory_space<vmem>>, vector<16x8xf32>
      tpu.vector_store %arg13[%c32_89, %c0_90], %61 {strides = array<i32>} : memref<256x64xf32, #tpu.memory_space<vmem>>, vector<16x8xf32>,
      %c16_91 = arith.constant 16 : index
      %c16_92 = arith.constant 16 : index
      %63 = vector.load %arg11[%c16_91, %c16_92] : memref<128x128xf32, #tpu.memory_space<vmem>>, vector<16x8xf32>
      %c32_93 = arith.constant 32 : index
      %c8_94 = arith.constant 8 : index
      %64 = vector.load %arg13[%c32_93, %c8_94] : memref<256x64xf32, #tpu.memory_space<vmem>>, vector<16x8xf32>
      tpu.vector_store %arg13[%c32_93, %c8_94], %63 {strides = array<i32>} : memref<256x64xf32, #tpu.memory_space<vmem>>, vector<16x8xf32>,
      %c32_95 = arith.constant 32 : index
      %c16_96 = arith.constant 16 : index
      %65 = vector.load %arg11[%c32_95, %c16_96] : memref<128x128xf32, #tpu.memory_space<vmem>>, vector<16x8xf32>
      %c32_97 = arith.constant 32 : index
      %c16_98 = arith.constant 16 : index
      %66 = vector.load %arg13[%c32_97, %c16_98] : memref<256x64xf32, #tpu.memory_space<vmem>>, vector<16x8xf32>
      tpu.vector_store %arg13[%c32_97, %c16_98], %65 {strides = array<i32>} : memref<256x64xf32, #tpu.memory_space<vmem>>, vector<16x8xf32>,
      %c48_99 = arith.constant 48 : index
      %c16_100 = arith.constant 16 : index
      %67 = vector.load %arg11[%c48_99, %c16_100] : memref<128x128xf32, #tpu.memory_space<vmem>>, vector<16x8xf32>
      %c32_101 = arith.constant 32 : index
      %c24_102 = arith.constant 24 : index
      %68 = vector.load %arg13[%c32_101, %c24_102] : memref<256x64xf32, #tpu.memory_space<vmem>>, vector<16x8xf32>
      tpu.vector_store %arg13[%c32_101, %c24_102], %67 {strides = array<i32>} : memref<256x64xf32, #tpu.memory_space<vmem>>, vector<16x8xf32>,
      %c64_103 = arith.constant 64 : index
      %c16_104 = arith.constant 16 : index
      %69 = vector.load %arg11[%c64_103, %c16_104] : memref<128x128xf32, #tpu.memory_space<vmem>>, vector<16x8xf32>
      %c32_105 = arith.constant 32 : index
      %c32_106 = arith.constant 32 : index
      %70 = vector.load %arg13[%c32_105, %c32_106] : memref<256x64xf32, #tpu.memory_space<vmem>>, vector<16x8xf32>
      tpu.vector_store %arg13[%c32_105, %c32_106], %69 {strides = array<i32>} : memref<256x64xf32, #tpu.memory_space<vmem>>, vector<16x8xf32>,
      %c80_107 = arith.constant 80 : index
      %c16_108 = arith.constant 16 : index
      %71 = vector.load %arg11[%c80_107, %c16_108] : memref<128x128xf32, #tpu.memory_space<vmem>>, vector<16x8xf32>
      %c32_109 = arith.constant 32 : index
      %c40_110 = arith.constant 40 : index
      %72 = vector.load %arg13[%c32_109, %c40_110] : memref<256x64xf32, #tpu.memory_space<vmem>>, vector<16x8xf32>
      tpu.vector_store %arg13[%c32_109, %c40_110], %71 {strides = array<i32>} : memref<256x64xf32, #tpu.memory_space<vmem>>, vector<16x8xf32>,
      %c96_111 = arith.constant 96 : index
      %c16_112 = arith.constant 16 : index
      %73 = vector.load %arg11[%c96_111, %c16_112] : memref<128x128xf32, #tpu.memory_space<vmem>>, vector<16x8xf32>
      %c32_113 = arith.constant 32 : index
      %c48_114 = arith.constant 48 : index
      %74 = vector.load %arg13[%c32_113, %c48_114] : memref<256x64xf32, #tpu.memory_space<vmem>>, vector<16x8xf32>
      tpu.vector_store %arg13[%c32_113, %c48_114], %73 {strides = array<i32>} : memref<256x64xf32, #tpu.memory_space<vmem>>, vector<16x8xf32>,
      %c112_115 = arith.constant 112 : index
      %c16_116 = arith.constant 16 : index
      %75 = vector.load %arg11[%c112_115, %c16_116] : memref<128x128xf32, #tpu.memory_space<vmem>>, vector<16x8xf32>
      %c32_117 = arith.constant 32 : index
      %c56_118 = arith.constant 56 : index
      %76 = vector.load %arg13[%c32_117, %c56_118] : memref<256x64xf32, #tpu.memory_space<vmem>>, vector<16x8xf32>
      tpu.vector_store %arg13[%c32_117, %c56_118], %75 {strides = array<i32>} : memref<256x64xf32, #tpu.memory_space<vmem>>, vector<16x8xf32>,
      %c0_119 = arith.constant 0 : index
      %c3 = arith.constant 3 : index
      %77 = vector.load %arg12[%c0_119, %c3] : memref<16x16xf32, #tpu.memory_space<vmem>>, vector<16x1xf32>
      %c48_120 = arith.constant 48 : index
      %c0_121 = arith.constant 0 : index
      %78 = vector.load %arg14[%c48_120, %c0_121] : memref<256x1xf32, #tpu.memory_space<vmem>>, vector<16x1xf32>
      tpu.vector_store %arg14[%c48_120, %c0_121], %77 {strides = array<i32>} : memref<256x1xf32, #tpu.memory_space<vmem>>, vector<16x1xf32>,
      %c0_122 = arith.constant 0 : index
      %c24_123 = arith.constant 24 : index
      %79 = vector.load %arg11[%c0_122, %c24_123] : memref<128x128xf32, #tpu.memory_space<vmem>>, vector<16x8xf32>
      %c48_124 = arith.constant 48 : index
      %c0_125 = arith.constant 0 : index
      %80 = vector.load %arg13[%c48_124, %c0_125] : memref<256x64xf32, #tpu.memory_space<vmem>>, vector<16x8xf32>
      tpu.vector_store %arg13[%c48_124, %c0_125], %79 {strides = array<i32>} : memref<256x64xf32, #tpu.memory_space<vmem>>, vector<16x8xf32>,
      %c16_126 = arith.constant 16 : index
      %c24_127 = arith.constant 24 : index
      %81 = vector.load %arg11[%c16_126, %c24_127] : memref<128x128xf32, #tpu.memory_space<vmem>>, vector<16x8xf32>
      %c48_128 = arith.constant 48 : index
      %c8_129 = arith.constant 8 : index
      %82 = vector.load %arg13[%c48_128, %c8_129] : memref<256x64xf32, #tpu.memory_space<vmem>>, vector<16x8xf32>
      tpu.vector_store %arg13[%c48_128, %c8_129], %81 {strides = array<i32>} : memref<256x64xf32, #tpu.memory_space<vmem>>, vector<16x8xf32>,
      %c32_130 = arith.constant 32 : index
      %c24_131 = arith.constant 24 : index
      %83 = vector.load %arg11[%c32_130, %c24_131] : memref<128x128xf32, #tpu.memory_space<vmem>>, vector<16x8xf32>
      %c48_132 = arith.constant 48 : index
      %c16_133 = arith.constant 16 : index
      %84 = vector.load %arg13[%c48_132, %c16_133] : memref<256x64xf32, #tpu.memory_space<vmem>>, vector<16x8xf32>
      tpu.vector_store %arg13[%c48_132, %c16_133], %83 {strides = array<i32>} : memref<256x64xf32, #tpu.memory_space<vmem>>, vector<16x8xf32>,
      %c48_134 = arith.constant 48 : index
      %c24_135 = arith.constant 24 : index
      %85 = vector.load %arg11[%c48_134, %c24_135] : memref<128x128xf32, #tpu.memory_space<vmem>>, vector<16x8xf32>
      %c48_136 = arith.constant 48 : index
      %c24_137 = arith.constant 24 : index
      %86 = vector.load %arg13[%c48_136, %c24_137] : memref<256x64xf32, #tpu.memory_space<vmem>>, vector<16x8xf32>
      tpu.vector_store %arg13[%c48_136, %c24_137], %85 {strides = array<i32>} : memref<256x64xf32, #tpu.memory_space<vmem>>, vector<16x8xf32>,
      %c64_138 = arith.constant 64 : index
      %c24_139 = arith.constant 24 : index
      %87 = vector.load %arg11[%c64_138, %c24_139] : memref<128x128xf32, #tpu.memory_space<vmem>>, vector<16x8xf32>
      %c48_140 = arith.constant 48 : index
      %c32_141 = arith.constant 32 : index
      %88 = vector.load %arg13[%c48_140, %c32_141] : memref<256x64xf32, #tpu.memory_space<vmem>>, vector<16x8xf32>
      tpu.vector_store %arg13[%c48_140, %c32_141], %87 {strides = array<i32>} : memref<256x64xf32, #tpu.memory_space<vmem>>, vector<16x8xf32>,
      %c80_142 = arith.constant 80 : index
      %c24_143 = arith.constant 24 : index
      %89 = vector.load %arg11[%c80_142, %c24_143] : memref<128x128xf32, #tpu.memory_space<vmem>>, vector<16x8xf32>
      %c48_144 = arith.constant 48 : index
      %c40_145 = arith.constant 40 : index
      %90 = vector.load %arg13[%c48_144, %c40_145] : memref<256x64xf32, #tpu.memory_space<vmem>>, vector<16x8xf32>
      tpu.vector_store %arg13[%c48_144, %c40_145], %89 {strides = array<i32>} : memref<256x64xf32, #tpu.memory_space<vmem>>, vector<16x8xf32>,
      %c96_146 = arith.constant 96 : index
      %c24_147 = arith.constant 24 : index
      %91 = vector.load %arg11[%c96_146, %c24_147] : memref<128x128xf32, #tpu.memory_space<vmem>>, vector<16x8xf32>
      %c48_148 = arith.constant 48 : index
      %c48_149 = arith.constant 48 : index
      %92 = vector.load %arg13[%c48_148, %c48_149] : memref<256x64xf32, #tpu.memory_space<vmem>>, vector<16x8xf32>
      tpu.vector_store %arg13[%c48_148, %c48_149], %91 {strides = array<i32>} : memref<256x64xf32, #tpu.memory_space<vmem>>, vector<16x8xf32>,
      %c112_150 = arith.constant 112 : index
      %c24_151 = arith.constant 24 : index
      %93 = vector.load %arg11[%c112_150, %c24_151] : memref<128x128xf32, #tpu.memory_space<vmem>>, vector<16x8xf32>
      %c48_152 = arith.constant 48 : index
      %c56_153 = arith.constant 56 : index
      %94 = vector.load %arg13[%c48_152, %c56_153] : memref<256x64xf32, #tpu.memory_space<vmem>>, vector<16x8xf32>
      tpu.vector_store %arg13[%c48_152, %c56_153], %93 {strides = array<i32>} : memref<256x64xf32, #tpu.memory_space<vmem>>, vector<16x8xf32>,
      %c0_154 = arith.constant 0 : index
      %c4 = arith.constant 4 : index
      %95 = vector.load %arg12[%c0_154, %c4] : memref<16x16xf32, #tpu.memory_space<vmem>>, vector<16x1xf32>
      %c64_155 = arith.constant 64 : index
      %c0_156 = arith.constant 0 : index
      %96 = vector.load %arg14[%c64_155, %c0_156] : memref<256x1xf32, #tpu.memory_space<vmem>>, vector<16x1xf32>
      tpu.vector_store %arg14[%c64_155, %c0_156], %95 {strides = array<i32>} : memref<256x1xf32, #tpu.memory_space<vmem>>, vector<16x1xf32>,
      %c0_157 = arith.constant 0 : index
      %c32_158 = arith.constant 32 : index
      %97 = vector.load %arg11[%c0_157, %c32_158] : memref<128x128xf32, #tpu.memory_space<vmem>>, vector<16x8xf32>
      %c64_159 = arith.constant 64 : index
      %c0_160 = arith.constant 0 : index
      %98 = vector.load %arg13[%c64_159, %c0_160] : memref<256x64xf32, #tpu.memory_space<vmem>>, vector<16x8xf32>
      tpu.vector_store %arg13[%c64_159, %c0_160], %97 {strides = array<i32>} : memref<256x64xf32, #tpu.memory_space<vmem>>, vector<16x8xf32>,
      %c16_161 = arith.constant 16 : index
      %c32_162 = arith.constant 32 : index
      %99 = vector.load %arg11[%c16_161, %c32_162] : memref<128x128xf32, #tpu.memory_space<vmem>>, vector<16x8xf32>
      %c64_163 = arith.constant 64 : index
      %c8_164 = arith.constant 8 : index
      %100 = vector.load %arg13[%c64_163, %c8_164] : memref<256x64xf32, #tpu.memory_space<vmem>>, vector<16x8xf32>
      tpu.vector_store %arg13[%c64_163, %c8_164], %99 {strides = array<i32>} : memref<256x64xf32, #tpu.memory_space<vmem>>, vector<16x8xf32>,
      %c32_165 = arith.constant 32 : index
      %c32_166 = arith.constant 32 : index
      %101 = vector.load %arg11[%c32_165, %c32_166] : memref<128x128xf32, #tpu.memory_space<vmem>>, vector<16x8xf32>
      %c64_167 = arith.constant 64 : index
      %c16_168 = arith.constant 16 : index
      %102 = vector.load %arg13[%c64_167, %c16_168] : memref<256x64xf32, #tpu.memory_space<vmem>>, vector<16x8xf32>
      tpu.vector_store %arg13[%c64_167, %c16_168], %101 {strides = array<i32>} : memref<256x64xf32, #tpu.memory_space<vmem>>, vector<16x8xf32>,
      %c48_169 = arith.constant 48 : index
      %c32_170 = arith.constant 32 : index
      %103 = vector.load %arg11[%c48_169, %c32_170] : memref<128x128xf32, #tpu.memory_space<vmem>>, vector<16x8xf32>
      %c64_171 = arith.constant 64 : index
      %c24_172 = arith.constant 24 : index
      %104 = vector.load %arg13[%c64_171, %c24_172] : memref<256x64xf32, #tpu.memory_space<vmem>>, vector<16x8xf32>
      tpu.vector_store %arg13[%c64_171, %c24_172], %103 {strides = array<i32>} : memref<256x64xf32, #tpu.memory_space<vmem>>, vector<16x8xf32>,
      %c64_173 = arith.constant 64 : index
      %c32_174 = arith.constant 32 : index
      %105 = vector.load %arg11[%c64_173, %c32_174] : memref<128x128xf32, #tpu.memory_space<vmem>>, vector<16x8xf32>
      %c64_175 = arith.constant 64 : index
      %c32_176 = arith.constant 32 : index
      %106 = vector.load %arg13[%c64_175, %c32_176] : memref<256x64xf32, #tpu.memory_space<vmem>>, vector<16x8xf32>
      tpu.vector_store %arg13[%c64_175, %c32_176], %105 {strides = array<i32>} : memref<256x64xf32, #tpu.memory_space<vmem>>, vector<16x8xf32>,
      %c80_177 = arith.constant 80 : index
      %c32_178 = arith.constant 32 : index
      %107 = vector.load %arg11[%c80_177, %c32_178] : memref<128x128xf32, #tpu.memory_space<vmem>>, vector<16x8xf32>
      %c64_179 = arith.constant 64 : index
      %c40_180 = arith.constant 40 : index
      %108 = vector.load %arg13[%c64_179, %c40_180] : memref<256x64xf32, #tpu.memory_space<vmem>>, vector<16x8xf32>
      tpu.vector_store %arg13[%c64_179, %c40_180], %107 {strides = array<i32>} : memref<256x64xf32, #tpu.memory_space<vmem>>, vector<16x8xf32>,
      %c96_181 = arith.constant 96 : index
      %c32_182 = arith.constant 32 : index
      %109 = vector.load %arg11[%c96_181, %c32_182] : memref<128x128xf32, #tpu.memory_space<vmem>>, vector<16x8xf32>
      %c64_183 = arith.constant 64 : index
      %c48_184 = arith.constant 48 : index
      %110 = vector.load %arg13[%c64_183, %c48_184] : memref<256x64xf32, #tpu.memory_space<vmem>>, vector<16x8xf32>
      tpu.vector_store %arg13[%c64_183, %c48_184], %109 {strides = array<i32>} : memref<256x64xf32, #tpu.memory_space<vmem>>, vector<16x8xf32>,
      %c112_185 = arith.constant 112 : index
      %c32_186 = arith.constant 32 : index
      %111 = vector.load %arg11[%c112_185, %c32_186] : memref<128x128xf32, #tpu.memory_space<vmem>>, vector<16x8xf32>
      %c64_187 = arith.constant 64 : index
      %c56_188 = arith.constant 56 : index
      %112 = vector.load %arg13[%c64_187, %c56_188] : memref<256x64xf32, #tpu.memory_space<vmem>>, vector<16x8xf32>
      tpu.vector_store %arg13[%c64_187, %c56_188], %111 {strides = array<i32>} : memref<256x64xf32, #tpu.memory_space<vmem>>, vector<16x8xf32>,
      %c0_189 = arith.constant 0 : index
      %c5 = arith.constant 5 : index
      %113 = vector.load %arg12[%c0_189, %c5] : memref<16x16xf32, #tpu.memory_space<vmem>>, vector<16x1xf32>
      %c80_190 = arith.constant 80 : index
      %c0_191 = arith.constant 0 : index
      %114 = vector.load %arg14[%c80_190, %c0_191] : memref<256x1xf32, #tpu.memory_space<vmem>>, vector<16x1xf32>
      tpu.vector_store %arg14[%c80_190, %c0_191], %113 {strides = array<i32>} : memref<256x1xf32, #tpu.memory_space<vmem>>, vector<16x1xf32>,
      %c0_192 = arith.constant 0 : index
      %c40_193 = arith.constant 40 : index
      %115 = vector.load %arg11[%c0_192, %c40_193] : memref<128x128xf32, #tpu.memory_space<vmem>>, vector<16x8xf32>
      %c80_194 = arith.constant 80 : index
      %c0_195 = arith.constant 0 : index
      %116 = vector.load %arg13[%c80_194, %c0_195] : memref<256x64xf32, #tpu.memory_space<vmem>>, vector<16x8xf32>
      tpu.vector_store %arg13[%c80_194, %c0_195], %115 {strides = array<i32>} : memref<256x64xf32, #tpu.memory_space<vmem>>, vector<16x8xf32>,
      %c16_196 = arith.constant 16 : index
      %c40_197 = arith.constant 40 : index
      %117 = vector.load %arg11[%c16_196, %c40_197] : memref<128x128xf32, #tpu.memory_space<vmem>>, vector<16x8xf32>
      %c80_198 = arith.constant 80 : index
      %c8_199 = arith.constant 8 : index
      %118 = vector.load %arg13[%c80_198, %c8_199] : memref<256x64xf32, #tpu.memory_space<vmem>>, vector<16x8xf32>
      tpu.vector_store %arg13[%c80_198, %c8_199], %117 {strides = array<i32>} : memref<256x64xf32, #tpu.memory_space<vmem>>, vector<16x8xf32>,
      %c32_200 = arith.constant 32 : index
      %c40_201 = arith.constant 40 : index
      %119 = vector.load %arg11[%c32_200, %c40_201] : memref<128x128xf32, #tpu.memory_space<vmem>>, vector<16x8xf32>
      %c80_202 = arith.constant 80 : index
      %c16_203 = arith.constant 16 : index
      %120 = vector.load %arg13[%c80_202, %c16_203] : memref<256x64xf32, #tpu.memory_space<vmem>>, vector<16x8xf32>
      tpu.vector_store %arg13[%c80_202, %c16_203], %119 {strides = array<i32>} : memref<256x64xf32, #tpu.memory_space<vmem>>, vector<16x8xf32>,
      %c48_204 = arith.constant 48 : index
      %c40_205 = arith.constant 40 : index
      %121 = vector.load %arg11[%c48_204, %c40_205] : memref<128x128xf32, #tpu.memory_space<vmem>>, vector<16x8xf32>
      %c80_206 = arith.constant 80 : index
      %c24_207 = arith.constant 24 : index
      %122 = vector.load %arg13[%c80_206, %c24_207] : memref<256x64xf32, #tpu.memory_space<vmem>>, vector<16x8xf32>
      tpu.vector_store %arg13[%c80_206, %c24_207], %121 {strides = array<i32>} : memref<256x64xf32, #tpu.memory_space<vmem>>, vector<16x8xf32>,
      %c64_208 = arith.constant 64 : index
      %c40_209 = arith.constant 40 : index
      %123 = vector.load %arg11[%c64_208, %c40_209] : memref<128x128xf32, #tpu.memory_space<vmem>>, vector<16x8xf32>
      %c80_210 = arith.constant 80 : index
      %c32_211 = arith.constant 32 : index
      %124 = vector.load %arg13[%c80_210, %c32_211] : memref<256x64xf32, #tpu.memory_space<vmem>>, vector<16x8xf32>
      tpu.vector_store %arg13[%c80_210, %c32_211], %123 {strides = array<i32>} : memref<256x64xf32, #tpu.memory_space<vmem>>, vector<16x8xf32>,
      %c80_212 = arith.constant 80 : index
      %c40_213 = arith.constant 40 : index
      %125 = vector.load %arg11[%c80_212, %c40_213] : memref<128x128xf32, #tpu.memory_space<vmem>>, vector<16x8xf32>
      %c80_214 = arith.constant 80 : index
      %c40_215 = arith.constant 40 : index
      %126 = vector.load %arg13[%c80_214, %c40_215] : memref<256x64xf32, #tpu.memory_space<vmem>>, vector<16x8xf32>
      tpu.vector_store %arg13[%c80_214, %c40_215], %125 {strides = array<i32>} : memref<256x64xf32, #tpu.memory_space<vmem>>, vector<16x8xf32>,
      %c96_216 = arith.constant 96 : index
      %c40_217 = arith.constant 40 : index
      %127 = vector.load %arg11[%c96_216, %c40_217] : memref<128x128xf32, #tpu.memory_space<vmem>>, vector<16x8xf32>
      %c80_218 = arith.constant 80 : index
      %c48_219 = arith.constant 48 : index
      %128 = vector.load %arg13[%c80_218, %c48_219] : memref<256x64xf32, #tpu.memory_space<vmem>>, vector<16x8xf32>
      tpu.vector_store %arg13[%c80_218, %c48_219], %127 {strides = array<i32>} : memref<256x64xf32, #tpu.memory_space<vmem>>, vector<16x8xf32>,
      %c112_220 = arith.constant 112 : index
      %c40_221 = arith.constant 40 : index
      %129 = vector.load %arg11[%c112_220, %c40_221] : memref<128x128xf32, #tpu.memory_space<vmem>>, vector<16x8xf32>
      %c80_222 = arith.constant 80 : index
      %c56_223 = arith.constant 56 : index
      %130 = vector.load %arg13[%c80_222, %c56_223] : memref<256x64xf32, #tpu.memory_space<vmem>>, vector<16x8xf32>
      tpu.vector_store %arg13[%c80_222, %c56_223], %129 {strides = array<i32>} : memref<256x64xf32, #tpu.memory_space<vmem>>, vector<16x8xf32>,
      %c0_224 = arith.constant 0 : index
      %c6 = arith.constant 6 : index
      %131 = vector.load %arg12[%c0_224, %c6] : memref<16x16xf32, #tpu.memory_space<vmem>>, vector<16x1xf32>
      %c96_225 = arith.constant 96 : index
      %c0_226 = arith.constant 0 : index
      %132 = vector.load %arg14[%c96_225, %c0_226] : memref<256x1xf32, #tpu.memory_space<vmem>>, vector<16x1xf32>
      tpu.vector_store %arg14[%c96_225, %c0_226], %131 {strides = array<i32>} : memref<256x1xf32, #tpu.memory_space<vmem>>, vector<16x1xf32>,
      %c0_227 = arith.constant 0 : index
      %c48_228 = arith.constant 48 : index
      %133 = vector.load %arg11[%c0_227, %c48_228] : memref<128x128xf32, #tpu.memory_space<vmem>>, vector<16x8xf32>
      %c96_229 = arith.constant 96 : index
      %c0_230 = arith.constant 0 : index
      %134 = vector.load %arg13[%c96_229, %c0_230] : memref<256x64xf32, #tpu.memory_space<vmem>>, vector<16x8xf32>
      tpu.vector_store %arg13[%c96_229, %c0_230], %133 {strides = array<i32>} : memref<256x64xf32, #tpu.memory_space<vmem>>, vector<16x8xf32>,
      %c16_231 = arith.constant 16 : index
      %c48_232 = arith.constant 48 : index
      %135 = vector.load %arg11[%c16_231, %c48_232] : memref<128x128xf32, #tpu.memory_space<vmem>>, vector<16x8xf32>
      %c96_233 = arith.constant 96 : index
      %c8_234 = arith.constant 8 : index
      %136 = vector.load %arg13[%c96_233, %c8_234] : memref<256x64xf32, #tpu.memory_space<vmem>>, vector<16x8xf32>
      tpu.vector_store %arg13[%c96_233, %c8_234], %135 {strides = array<i32>} : memref<256x64xf32, #tpu.memory_space<vmem>>, vector<16x8xf32>,
      %c32_235 = arith.constant 32 : index
      %c48_236 = arith.constant 48 : index
      %137 = vector.load %arg11[%c32_235, %c48_236] : memref<128x128xf32, #tpu.memory_space<vmem>>, vector<16x8xf32>
      %c96_237 = arith.constant 96 : index
      %c16_238 = arith.constant 16 : index
      %138 = vector.load %arg13[%c96_237, %c16_238] : memref<256x64xf32, #tpu.memory_space<vmem>>, vector<16x8xf32>
      tpu.vector_store %arg13[%c96_237, %c16_238], %137 {strides = array<i32>} : memref<256x64xf32, #tpu.memory_space<vmem>>, vector<16x8xf32>,
      %c48_239 = arith.constant 48 : index
      %c48_240 = arith.constant 48 : index
      %139 = vector.load %arg11[%c48_239, %c48_240] : memref<128x128xf32, #tpu.memory_space<vmem>>, vector<16x8xf32>
      %c96_241 = arith.constant 96 : index
      %c24_242 = arith.constant 24 : index
      %140 = vector.load %arg13[%c96_241, %c24_242] : memref<256x64xf32, #tpu.memory_space<vmem>>, vector<16x8xf32>
      tpu.vector_store %arg13[%c96_241, %c24_242], %139 {strides = array<i32>} : memref<256x64xf32, #tpu.memory_space<vmem>>, vector<16x8xf32>,
      %c64_243 = arith.constant 64 : index
      %c48_244 = arith.constant 48 : index
      %141 = vector.load %arg11[%c64_243, %c48_244] : memref<128x128xf32, #tpu.memory_space<vmem>>, vector<16x8xf32>
      %c96_245 = arith.constant 96 : index
      %c32_246 = arith.constant 32 : index
      %142 = vector.load %arg13[%c96_245, %c32_246] : memref<256x64xf32, #tpu.memory_space<vmem>>, vector<16x8xf32>
      tpu.vector_store %arg13[%c96_245, %c32_246], %141 {strides = array<i32>} : memref<256x64xf32, #tpu.memory_space<vmem>>, vector<16x8xf32>,
      %c80_247 = arith.constant 80 : index
      %c48_248 = arith.constant 48 : index
      %143 = vector.load %arg11[%c80_247, %c48_248] : memref<128x128xf32, #tpu.memory_space<vmem>>, vector<16x8xf32>
      %c96_249 = arith.constant 96 : index
      %c40_250 = arith.constant 40 : index
      %144 = vector.load %arg13[%c96_249, %c40_250] : memref<256x64xf32, #tpu.memory_space<vmem>>, vector<16x8xf32>
      tpu.vector_store %arg13[%c96_249, %c40_250], %143 {strides = array<i32>} : memref<256x64xf32, #tpu.memory_space<vmem>>, vector<16x8xf32>,
      %c96_251 = arith.constant 96 : index
      %c48_252 = arith.constant 48 : index
      %145 = vector.load %arg11[%c96_251, %c48_252] : memref<128x128xf32, #tpu.memory_space<vmem>>, vector<16x8xf32>
      %c96_253 = arith.constant 96 : index
      %c48_254 = arith.constant 48 : index
      %146 = vector.load %arg13[%c96_253, %c48_254] : memref<256x64xf32, #tpu.memory_space<vmem>>, vector<16x8xf32>
      tpu.vector_store %arg13[%c96_253, %c48_254], %145 {strides = array<i32>} : memref<256x64xf32, #tpu.memory_space<vmem>>, vector<16x8xf32>,
      %c112_255 = arith.constant 112 : index
      %c48_256 = arith.constant 48 : index
      %147 = vector.load %arg11[%c112_255, %c48_256] : memref<128x128xf32, #tpu.memory_space<vmem>>, vector<16x8xf32>
      %c96_257 = arith.constant 96 : index
      %c56_258 = arith.constant 56 : index
      %148 = vector.load %arg13[%c96_257, %c56_258] : memref<256x64xf32, #tpu.memory_space<vmem>>, vector<16x8xf32>
      tpu.vector_store %arg13[%c96_257, %c56_258], %147 {strides = array<i32>} : memref<256x64xf32, #tpu.memory_space<vmem>>, vector<16x8xf32>,
      %c0_259 = arith.constant 0 : index
      %c7 = arith.constant 7 : index
      %149 = vector.load %arg12[%c0_259, %c7] : memref<16x16xf32, #tpu.memory_space<vmem>>, vector<16x1xf32>
      %c112_260 = arith.constant 112 : index
      %c0_261 = arith.constant 0 : index
      %150 = vector.load %arg14[%c112_260, %c0_261] : memref<256x1xf32, #tpu.memory_space<vmem>>, vector<16x1xf32>
      tpu.vector_store %arg14[%c112_260, %c0_261], %149 {strides = array<i32>} : memref<256x1xf32, #tpu.memory_space<vmem>>, vector<16x1xf32>,
      %c0_262 = arith.constant 0 : index
      %c56_263 = arith.constant 56 : index
      %151 = vector.load %arg11[%c0_262, %c56_263] : memref<128x128xf32, #tpu.memory_space<vmem>>, vector<16x8xf32>
      %c112_264 = arith.constant 112 : index
      %c0_265 = arith.constant 0 : index
      %152 = vector.load %arg13[%c112_264, %c0_265] : memref<256x64xf32, #tpu.memory_space<vmem>>, vector<16x8xf32>
      tpu.vector_store %arg13[%c112_264, %c0_265], %151 {strides = array<i32>} : memref<256x64xf32, #tpu.memory_space<vmem>>, vector<16x8xf32>,
      %c16_266 = arith.constant 16 : index
      %c56_267 = arith.constant 56 : index
      %153 = vector.load %arg11[%c16_266, %c56_267] : memref<128x128xf32, #tpu.memory_space<vmem>>, vector<16x8xf32>
      %c112_268 = arith.constant 112 : index
      %c8_269 = arith.constant 8 : index
      %154 = vector.load %arg13[%c112_268, %c8_269] : memref<256x64xf32, #tpu.memory_space<vmem>>, vector<16x8xf32>
      tpu.vector_store %arg13[%c112_268, %c8_269], %153 {strides = array<i32>} : memref<256x64xf32, #tpu.memory_space<vmem>>, vector<16x8xf32>,
      %c32_270 = arith.constant 32 : index
      %c56_271 = arith.constant 56 : index
      %155 = vector.load %arg11[%c32_270, %c56_271] : memref<128x128xf32, #tpu.memory_space<vmem>>, vector<16x8xf32>
      %c112_272 = arith.constant 112 : index
      %c16_273 = arith.constant 16 : index
      %156 = vector.load %arg13[%c112_272, %c16_273] : memref<256x64xf32, #tpu.memory_space<vmem>>, vector<16x8xf32>
      tpu.vector_store %arg13[%c112_272, %c16_273], %155 {strides = array<i32>} : memref<256x64xf32, #tpu.memory_space<vmem>>, vector<16x8xf32>,
      %c48_274 = arith.constant 48 : index
      %c56_275 = arith.constant 56 : index
      %157 = vector.load %arg11[%c48_274, %c56_275] : memref<128x128xf32, #tpu.memory_space<vmem>>, vector<16x8xf32>
      %c112_276 = arith.constant 112 : index
      %c24_277 = arith.constant 24 : index
      %158 = vector.load %arg13[%c112_276, %c24_277] : memref<256x64xf32, #tpu.memory_space<vmem>>, vector<16x8xf32>
      tpu.vector_store %arg13[%c112_276, %c24_277], %157 {strides = array<i32>} : memref<256x64xf32, #tpu.memory_space<vmem>>, vector<16x8xf32>,
      %c64_278 = arith.constant 64 : index
      %c56_279 = arith.constant 56 : index
      %159 = vector.load %arg11[%c64_278, %c56_279] : memref<128x128xf32, #tpu.memory_space<vmem>>, vector<16x8xf32>
      %c112_280 = arith.constant 112 : index
      %c32_281 = arith.constant 32 : index
      %160 = vector.load %arg13[%c112_280, %c32_281] : memref<256x64xf32, #tpu.memory_space<vmem>>, vector<16x8xf32>
      tpu.vector_store %arg13[%c112_280, %c32_281], %159 {strides = array<i32>} : memref<256x64xf32, #tpu.memory_space<vmem>>, vector<16x8xf32>,
      %c80_282 = arith.constant 80 : index
      %c56_283 = arith.constant 56 : index
      %161 = vector.load %arg11[%c80_282, %c56_283] : memref<128x128xf32, #tpu.memory_space<vmem>>, vector<16x8xf32>
      %c112_284 = arith.constant 112 : index
      %c40_285 = arith.constant 40 : index
      %162 = vector.load %arg13[%c112_284, %c40_285] : memref<256x64xf32, #tpu.memory_space<vmem>>, vector<16x8xf32>
      tpu.vector_store %arg13[%c112_284, %c40_285], %161 {strides = array<i32>} : memref<256x64xf32, #tpu.memory_space<vmem>>, vector<16x8xf32>,
      %c96_286 = arith.constant 96 : index
      %c56_287 = arith.constant 56 : index
      %163 = vector.load %arg11[%c96_286, %c56_287] : memref<128x128xf32, #tpu.memory_space<vmem>>, vector<16x8xf32>
      %c112_288 = arith.constant 112 : index
      %c48_289 = arith.constant 48 : index
      %164 = vector.load %arg13[%c112_288, %c48_289] : memref<256x64xf32, #tpu.memory_space<vmem>>, vector<16x8xf32>
      tpu.vector_store %arg13[%c112_288, %c48_289], %163 {strides = array<i32>} : memref<256x64xf32, #tpu.memory_space<vmem>>, vector<16x8xf32>,
      %c112_290 = arith.constant 112 : index
      %c56_291 = arith.constant 56 : index
      %165 = vector.load %arg11[%c112_290, %c56_291] : memref<128x128xf32, #tpu.memory_space<vmem>>, vector<16x8xf32>
      %c112_292 = arith.constant 112 : index
      %c56_293 = arith.constant 56 : index
      %166 = vector.load %arg13[%c112_292, %c56_293] : memref<256x64xf32, #tpu.memory_space<vmem>>, vector<16x8xf32>
      tpu.vector_store %arg13[%c112_292, %c56_293], %165 {strides = array<i32>} : memref<256x64xf32, #tpu.memory_space<vmem>>, vector<16x8xf32>,
      %c0_294 = arith.constant 0 : index
      %c8_295 = arith.constant 8 : index
      %167 = vector.load %arg12[%c0_294, %c8_295] : memref<16x16xf32, #tpu.memory_space<vmem>>, vector<16x1xf32>
      %c128 = arith.constant 128 : index
      %c0_296 = arith.constant 0 : index
      %168 = vector.load %arg14[%c128, %c0_296] : memref<256x1xf32, #tpu.memory_space<vmem>>, vector<16x1xf32>
      tpu.vector_store %arg14[%c128, %c0_296], %167 {strides = array<i32>} : memref<256x1xf32, #tpu.memory_space<vmem>>, vector<16x1xf32>,
      %c0_297 = arith.constant 0 : index
      %c64_298 = arith.constant 64 : index
      %169 = vector.load %arg11[%c0_297, %c64_298] : memref<128x128xf32, #tpu.memory_space<vmem>>, vector<16x8xf32>
      %c128_299 = arith.constant 128 : index
      %c0_300 = arith.constant 0 : index
      %170 = vector.load %arg13[%c128_299, %c0_300] : memref<256x64xf32, #tpu.memory_space<vmem>>, vector<16x8xf32>
      tpu.vector_store %arg13[%c128_299, %c0_300], %169 {strides = array<i32>} : memref<256x64xf32, #tpu.memory_space<vmem>>, vector<16x8xf32>,
      %c16_301 = arith.constant 16 : index
      %c64_302 = arith.constant 64 : index
      %171 = vector.load %arg11[%c16_301, %c64_302] : memref<128x128xf32, #tpu.memory_space<vmem>>, vector<16x8xf32>
      %c128_303 = arith.constant 128 : index
      %c8_304 = arith.constant 8 : index
      %172 = vector.load %arg13[%c128_303, %c8_304] : memref<256x64xf32, #tpu.memory_space<vmem>>, vector<16x8xf32>
      tpu.vector_store %arg13[%c128_303, %c8_304], %171 {strides = array<i32>} : memref<256x64xf32, #tpu.memory_space<vmem>>, vector<16x8xf32>,
      %c32_305 = arith.constant 32 : index
      %c64_306 = arith.constant 64 : index
      %173 = vector.load %arg11[%c32_305, %c64_306] : memref<128x128xf32, #tpu.memory_space<vmem>>, vector<16x8xf32>
      %c128_307 = arith.constant 128 : index
      %c16_308 = arith.constant 16 : index
      %174 = vector.load %arg13[%c128_307, %c16_308] : memref<256x64xf32, #tpu.memory_space<vmem>>, vector<16x8xf32>
      tpu.vector_store %arg13[%c128_307, %c16_308], %173 {strides = array<i32>} : memref<256x64xf32, #tpu.memory_space<vmem>>, vector<16x8xf32>,
      %c48_309 = arith.constant 48 : index
      %c64_310 = arith.constant 64 : index
      %175 = vector.load %arg11[%c48_309, %c64_310] : memref<128x128xf32, #tpu.memory_space<vmem>>, vector<16x8xf32>
      %c128_311 = arith.constant 128 : index
      %c24_312 = arith.constant 24 : index
      %176 = vector.load %arg13[%c128_311, %c24_312] : memref<256x64xf32, #tpu.memory_space<vmem>>, vector<16x8xf32>
      tpu.vector_store %arg13[%c128_311, %c24_312], %175 {strides = array<i32>} : memref<256x64xf32, #tpu.memory_space<vmem>>, vector<16x8xf32>,
      %c64_313 = arith.constant 64 : index
      %c64_314 = arith.constant 64 : index
      %177 = vector.load %arg11[%c64_313, %c64_314] : memref<128x128xf32, #tpu.memory_space<vmem>>, vector<16x8xf32>
      %c128_315 = arith.constant 128 : index
      %c32_316 = arith.constant 32 : index
      %178 = vector.load %arg13[%c128_315, %c32_316] : memref<256x64xf32, #tpu.memory_space<vmem>>, vector<16x8xf32>
      tpu.vector_store %arg13[%c128_315, %c32_316], %177 {strides = array<i32>} : memref<256x64xf32, #tpu.memory_space<vmem>>, vector<16x8xf32>,
      %c80_317 = arith.constant 80 : index
      %c64_318 = arith.constant 64 : index
      %179 = vector.load %arg11[%c80_317, %c64_318] : memref<128x128xf32, #tpu.memory_space<vmem>>, vector<16x8xf32>
      %c128_319 = arith.constant 128 : index
      %c40_320 = arith.constant 40 : index
      %180 = vector.load %arg13[%c128_319, %c40_320] : memref<256x64xf32, #tpu.memory_space<vmem>>, vector<16x8xf32>
      tpu.vector_store %arg13[%c128_319, %c40_320], %179 {strides = array<i32>} : memref<256x64xf32, #tpu.memory_space<vmem>>, vector<16x8xf32>,
      %c96_321 = arith.constant 96 : index
      %c64_322 = arith.constant 64 : index
      %181 = vector.load %arg11[%c96_321, %c64_322] : memref<128x128xf32, #tpu.memory_space<vmem>>, vector<16x8xf32>
      %c128_323 = arith.constant 128 : index
      %c48_324 = arith.constant 48 : index
      %182 = vector.load %arg13[%c128_323, %c48_324] : memref<256x64xf32, #tpu.memory_space<vmem>>, vector<16x8xf32>
      tpu.vector_store %arg13[%c128_323, %c48_324], %181 {strides = array<i32>} : memref<256x64xf32, #tpu.memory_space<vmem>>, vector<16x8xf32>,
      %c112_325 = arith.constant 112 : index
      %c64_326 = arith.constant 64 : index
      %183 = vector.load %arg11[%c112_325, %c64_326] : memref<128x128xf32, #tpu.memory_space<vmem>>, vector<16x8xf32>
      %c128_327 = arith.constant 128 : index
      %c56_328 = arith.constant 56 : index
      %184 = vector.load %arg13[%c128_327, %c56_328] : memref<256x64xf32, #tpu.memory_space<vmem>>, vector<16x8xf32>
      tpu.vector_store %arg13[%c128_327, %c56_328], %183 {strides = array<i32>} : memref<256x64xf32, #tpu.memory_space<vmem>>, vector<16x8xf32>,
      %c0_329 = arith.constant 0 : index
      %c9 = arith.constant 9 : index
      %185 = vector.load %arg12[%c0_329, %c9] : memref<16x16xf32, #tpu.memory_space<vmem>>, vector<16x1xf32>
      %c144 = arith.constant 144 : index
      %c0_330 = arith.constant 0 : index
      %186 = vector.load %arg14[%c144, %c0_330] : memref<256x1xf32, #tpu.memory_space<vmem>>, vector<16x1xf32>
      tpu.vector_store %arg14[%c144, %c0_330], %185 {strides = array<i32>} : memref<256x1xf32, #tpu.memory_space<vmem>>, vector<16x1xf32>,
      %c0_331 = arith.constant 0 : index
      %c72 = arith.constant 72 : index
      %187 = vector.load %arg11[%c0_331, %c72] : memref<128x128xf32, #tpu.memory_space<vmem>>, vector<16x8xf32>
      %c144_332 = arith.constant 144 : index
      %c0_333 = arith.constant 0 : index
      %188 = vector.load %arg13[%c144_332, %c0_333] : memref<256x64xf32, #tpu.memory_space<vmem>>, vector<16x8xf32>
      tpu.vector_store %arg13[%c144_332, %c0_333], %187 {strides = array<i32>} : memref<256x64xf32, #tpu.memory_space<vmem>>, vector<16x8xf32>,
      %c16_334 = arith.constant 16 : index
      %c72_335 = arith.constant 72 : index
      %189 = vector.load %arg11[%c16_334, %c72_335] : memref<128x128xf32, #tpu.memory_space<vmem>>, vector<16x8xf32>
      %c144_336 = arith.constant 144 : index
      %c8_337 = arith.constant 8 : index
      %190 = vector.load %arg13[%c144_336, %c8_337] : memref<256x64xf32, #tpu.memory_space<vmem>>, vector<16x8xf32>
      tpu.vector_store %arg13[%c144_336, %c8_337], %189 {strides = array<i32>} : memref<256x64xf32, #tpu.memory_space<vmem>>, vector<16x8xf32>,
      %c32_338 = arith.constant 32 : index
      %c72_339 = arith.constant 72 : index
      %191 = vector.load %arg11[%c32_338, %c72_339] : memref<128x128xf32, #tpu.memory_space<vmem>>, vector<16x8xf32>
      %c144_340 = arith.constant 144 : index
      %c16_341 = arith.constant 16 : index
      %192 = vector.load %arg13[%c144_340, %c16_341] : memref<256x64xf32, #tpu.memory_space<vmem>>, vector<16x8xf32>
      tpu.vector_store %arg13[%c144_340, %c16_341], %191 {strides = array<i32>} : memref<256x64xf32, #tpu.memory_space<vmem>>, vector<16x8xf32>,
      %c48_342 = arith.constant 48 : index
      %c72_343 = arith.constant 72 : index
      %193 = vector.load %arg11[%c48_342, %c72_343] : memref<128x128xf32, #tpu.memory_space<vmem>>, vector<16x8xf32>
      %c144_344 = arith.constant 144 : index
      %c24_345 = arith.constant 24 : index
      %194 = vector.load %arg13[%c144_344, %c24_345] : memref<256x64xf32, #tpu.memory_space<vmem>>, vector<16x8xf32>
      tpu.vector_store %arg13[%c144_344, %c24_345], %193 {strides = array<i32>} : memref<256x64xf32, #tpu.memory_space<vmem>>, vector<16x8xf32>,
      %c64_346 = arith.constant 64 : index
      %c72_347 = arith.constant 72 : index
      %195 = vector.load %arg11[%c64_346, %c72_347] : memref<128x128xf32, #tpu.memory_space<vmem>>, vector<16x8xf32>
      %c144_348 = arith.constant 144 : index
      %c32_349 = arith.constant 32 : index
      %196 = vector.load %arg13[%c144_348, %c32_349] : memref<256x64xf32, #tpu.memory_space<vmem>>, vector<16x8xf32>
      tpu.vector_store %arg13[%c144_348, %c32_349], %195 {strides = array<i32>} : memref<256x64xf32, #tpu.memory_space<vmem>>, vector<16x8xf32>,
      %c80_350 = arith.constant 80 : index
      %c72_351 = arith.constant 72 : index
      %197 = vector.load %arg11[%c80_350, %c72_351] : memref<128x128xf32, #tpu.memory_space<vmem>>, vector<16x8xf32>
      %c144_352 = arith.constant 144 : index
      %c40_353 = arith.constant 40 : index
      %198 = vector.load %arg13[%c144_352, %c40_353] : memref<256x64xf32, #tpu.memory_space<vmem>>, vector<16x8xf32>
      tpu.vector_store %arg13[%c144_352, %c40_353], %197 {strides = array<i32>} : memref<256x64xf32, #tpu.memory_space<vmem>>, vector<16x8xf32>,
      %c96_354 = arith.constant 96 : index
      %c72_355 = arith.constant 72 : index
      %199 = vector.load %arg11[%c96_354, %c72_355] : memref<128x128xf32, #tpu.memory_space<vmem>>, vector<16x8xf32>
      %c144_356 = arith.constant 144 : index
      %c48_357 = arith.constant 48 : index
      %200 = vector.load %arg13[%c144_356, %c48_357] : memref<256x64xf32, #tpu.memory_space<vmem>>, vector<16x8xf32>
      tpu.vector_store %arg13[%c144_356, %c48_357], %199 {strides = array<i32>} : memref<256x64xf32, #tpu.memory_space<vmem>>, vector<16x8xf32>,
      %c112_358 = arith.constant 112 : index
      %c72_359 = arith.constant 72 : index
      %201 = vector.load %arg11[%c112_358, %c72_359] : memref<128x128xf32, #tpu.memory_space<vmem>>, vector<16x8xf32>
      %c144_360 = arith.constant 144 : index
      %c56_361 = arith.constant 56 : index
      %202 = vector.load %arg13[%c144_360, %c56_361] : memref<256x64xf32, #tpu.memory_space<vmem>>, vector<16x8xf32>
      tpu.vector_store %arg13[%c144_360, %c56_361], %201 {strides = array<i32>} : memref<256x64xf32, #tpu.memory_space<vmem>>, vector<16x8xf32>,
      %c0_362 = arith.constant 0 : index
      %c10 = arith.constant 10 : index
      %203 = vector.load %arg12[%c0_362, %c10] : memref<16x16xf32, #tpu.memory_space<vmem>>, vector<16x1xf32>
      %c160 = arith.constant 160 : index
      %c0_363 = arith.constant 0 : index
      %204 = vector.load %arg14[%c160, %c0_363] : memref<256x1xf32, #tpu.memory_space<vmem>>, vector<16x1xf32>
      tpu.vector_store %arg14[%c160, %c0_363], %203 {strides = array<i32>} : memref<256x1xf32, #tpu.memory_space<vmem>>, vector<16x1xf32>,
      %c0_364 = arith.constant 0 : index
      %c80_365 = arith.constant 80 : index
      %205 = vector.load %arg11[%c0_364, %c80_365] : memref<128x128xf32, #tpu.memory_space<vmem>>, vector<16x8xf32>
      %c160_366 = arith.constant 160 : index
      %c0_367 = arith.constant 0 : index
      %206 = vector.load %arg13[%c160_366, %c0_367] : memref<256x64xf32, #tpu.memory_space<vmem>>, vector<16x8xf32>
      tpu.vector_store %arg13[%c160_366, %c0_367], %205 {strides = array<i32>} : memref<256x64xf32, #tpu.memory_space<vmem>>, vector<16x8xf32>,
      %c16_368 = arith.constant 16 : index
      %c80_369 = arith.constant 80 : index
      %207 = vector.load %arg11[%c16_368, %c80_369] : memref<128x128xf32, #tpu.memory_space<vmem>>, vector<16x8xf32>
      %c160_370 = arith.constant 160 : index
      %c8_371 = arith.constant 8 : index
      %208 = vector.load %arg13[%c160_370, %c8_371] : memref<256x64xf32, #tpu.memory_space<vmem>>, vector<16x8xf32>
      tpu.vector_store %arg13[%c160_370, %c8_371], %207 {strides = array<i32>} : memref<256x64xf32, #tpu.memory_space<vmem>>, vector<16x8xf32>,
      %c32_372 = arith.constant 32 : index
      %c80_373 = arith.constant 80 : index
      %209 = vector.load %arg11[%c32_372, %c80_373] : memref<128x128xf32, #tpu.memory_space<vmem>>, vector<16x8xf32>
      %c160_374 = arith.constant 160 : index
      %c16_375 = arith.constant 16 : index
      %210 = vector.load %arg13[%c160_374, %c16_375] : memref<256x64xf32, #tpu.memory_space<vmem>>, vector<16x8xf32>
      tpu.vector_store %arg13[%c160_374, %c16_375], %209 {strides = array<i32>} : memref<256x64xf32, #tpu.memory_space<vmem>>, vector<16x8xf32>,
      %c48_376 = arith.constant 48 : index
      %c80_377 = arith.constant 80 : index
      %211 = vector.load %arg11[%c48_376, %c80_377] : memref<128x128xf32, #tpu.memory_space<vmem>>, vector<16x8xf32>
      %c160_378 = arith.constant 160 : index
      %c24_379 = arith.constant 24 : index
      %212 = vector.load %arg13[%c160_378, %c24_379] : memref<256x64xf32, #tpu.memory_space<vmem>>, vector<16x8xf32>
      tpu.vector_store %arg13[%c160_378, %c24_379], %211 {strides = array<i32>} : memref<256x64xf32, #tpu.memory_space<vmem>>, vector<16x8xf32>,
      %c64_380 = arith.constant 64 : index
      %c80_381 = arith.constant 80 : index
      %213 = vector.load %arg11[%c64_380, %c80_381] : memref<128x128xf32, #tpu.memory_space<vmem>>, vector<16x8xf32>
      %c160_382 = arith.constant 160 : index
      %c32_383 = arith.constant 32 : index
      %214 = vector.load %arg13[%c160_382, %c32_383] : memref<256x64xf32, #tpu.memory_space<vmem>>, vector<16x8xf32>
      tpu.vector_store %arg13[%c160_382, %c32_383], %213 {strides = array<i32>} : memref<256x64xf32, #tpu.memory_space<vmem>>, vector<16x8xf32>,
      %c80_384 = arith.constant 80 : index
      %c80_385 = arith.constant 80 : index
      %215 = vector.load %arg11[%c80_384, %c80_385] : memref<128x128xf32, #tpu.memory_space<vmem>>, vector<16x8xf32>
      %c160_386 = arith.constant 160 : index
      %c40_387 = arith.constant 40 : index
      %216 = vector.load %arg13[%c160_386, %c40_387] : memref<256x64xf32, #tpu.memory_space<vmem>>, vector<16x8xf32>
      tpu.vector_store %arg13[%c160_386, %c40_387], %215 {strides = array<i32>} : memref<256x64xf32, #tpu.memory_space<vmem>>, vector<16x8xf32>,
      %c96_388 = arith.constant 96 : index
      %c80_389 = arith.constant 80 : index
      %217 = vector.load %arg11[%c96_388, %c80_389] : memref<128x128xf32, #tpu.memory_space<vmem>>, vector<16x8xf32>
      %c160_390 = arith.constant 160 : index
      %c48_391 = arith.constant 48 : index
      %218 = vector.load %arg13[%c160_390, %c48_391] : memref<256x64xf32, #tpu.memory_space<vmem>>, vector<16x8xf32>
      tpu.vector_store %arg13[%c160_390, %c48_391], %217 {strides = array<i32>} : memref<256x64xf32, #tpu.memory_space<vmem>>, vector<16x8xf32>,
      %c112_392 = arith.constant 112 : index
      %c80_393 = arith.constant 80 : index
      %219 = vector.load %arg11[%c112_392, %c80_393] : memref<128x128xf32, #tpu.memory_space<vmem>>, vector<16x8xf32>
      %c160_394 = arith.constant 160 : index
      %c56_395 = arith.constant 56 : index
      %220 = vector.load %arg13[%c160_394, %c56_395] : memref<256x64xf32, #tpu.memory_space<vmem>>, vector<16x8xf32>
      tpu.vector_store %arg13[%c160_394, %c56_395], %219 {strides = array<i32>} : memref<256x64xf32, #tpu.memory_space<vmem>>, vector<16x8xf32>,
      %c0_396 = arith.constant 0 : index
      %c11 = arith.constant 11 : index
      %221 = vector.load %arg12[%c0_396, %c11] : memref<16x16xf32, #tpu.memory_space<vmem>>, vector<16x1xf32>
      %c176 = arith.constant 176 : index
      %c0_397 = arith.constant 0 : index
      %222 = vector.load %arg14[%c176, %c0_397] : memref<256x1xf32, #tpu.memory_space<vmem>>, vector<16x1xf32>
      tpu.vector_store %arg14[%c176, %c0_397], %221 {strides = array<i32>} : memref<256x1xf32, #tpu.memory_space<vmem>>, vector<16x1xf32>,
      %c0_398 = arith.constant 0 : index
      %c88 = arith.constant 88 : index
      %223 = vector.load %arg11[%c0_398, %c88] : memref<128x128xf32, #tpu.memory_space<vmem>>, vector<16x8xf32>
      %c176_399 = arith.constant 176 : index
      %c0_400 = arith.constant 0 : index
      %224 = vector.load %arg13[%c176_399, %c0_400] : memref<256x64xf32, #tpu.memory_space<vmem>>, vector<16x8xf32>
      tpu.vector_store %arg13[%c176_399, %c0_400], %223 {strides = array<i32>} : memref<256x64xf32, #tpu.memory_space<vmem>>, vector<16x8xf32>,
      %c16_401 = arith.constant 16 : index
      %c88_402 = arith.constant 88 : index
      %225 = vector.load %arg11[%c16_401, %c88_402] : memref<128x128xf32, #tpu.memory_space<vmem>>, vector<16x8xf32>
      %c176_403 = arith.constant 176 : index
      %c8_404 = arith.constant 8 : index
      %226 = vector.load %arg13[%c176_403, %c8_404] : memref<256x64xf32, #tpu.memory_space<vmem>>, vector<16x8xf32>
      tpu.vector_store %arg13[%c176_403, %c8_404], %225 {strides = array<i32>} : memref<256x64xf32, #tpu.memory_space<vmem>>, vector<16x8xf32>,
      %c32_405 = arith.constant 32 : index
      %c88_406 = arith.constant 88 : index
      %227 = vector.load %arg11[%c32_405, %c88_406] : memref<128x128xf32, #tpu.memory_space<vmem>>, vector<16x8xf32>
      %c176_407 = arith.constant 176 : index
      %c16_408 = arith.constant 16 : index
      %228 = vector.load %arg13[%c176_407, %c16_408] : memref<256x64xf32, #tpu.memory_space<vmem>>, vector<16x8xf32>
      tpu.vector_store %arg13[%c176_407, %c16_408], %227 {strides = array<i32>} : memref<256x64xf32, #tpu.memory_space<vmem>>, vector<16x8xf32>,
      %c48_409 = arith.constant 48 : index
      %c88_410 = arith.constant 88 : index
      %229 = vector.load %arg11[%c48_409, %c88_410] : memref<128x128xf32, #tpu.memory_space<vmem>>, vector<16x8xf32>
      %c176_411 = arith.constant 176 : index
      %c24_412 = arith.constant 24 : index
      %230 = vector.load %arg13[%c176_411, %c24_412] : memref<256x64xf32, #tpu.memory_space<vmem>>, vector<16x8xf32>
      tpu.vector_store %arg13[%c176_411, %c24_412], %229 {strides = array<i32>} : memref<256x64xf32, #tpu.memory_space<vmem>>, vector<16x8xf32>,
      %c64_413 = arith.constant 64 : index
      %c88_414 = arith.constant 88 : index
      %231 = vector.load %arg11[%c64_413, %c88_414] : memref<128x128xf32, #tpu.memory_space<vmem>>, vector<16x8xf32>
      %c176_415 = arith.constant 176 : index
      %c32_416 = arith.constant 32 : index
      %232 = vector.load %arg13[%c176_415, %c32_416] : memref<256x64xf32, #tpu.memory_space<vmem>>, vector<16x8xf32>
      tpu.vector_store %arg13[%c176_415, %c32_416], %231 {strides = array<i32>} : memref<256x64xf32, #tpu.memory_space<vmem>>, vector<16x8xf32>,
      %c80_417 = arith.constant 80 : index
      %c88_418 = arith.constant 88 : index
      %233 = vector.load %arg11[%c80_417, %c88_418] : memref<128x128xf32, #tpu.memory_space<vmem>>, vector<16x8xf32>
      %c176_419 = arith.constant 176 : index
      %c40_420 = arith.constant 40 : index
      %234 = vector.load %arg13[%c176_419, %c40_420] : memref<256x64xf32, #tpu.memory_space<vmem>>, vector<16x8xf32>
      tpu.vector_store %arg13[%c176_419, %c40_420], %233 {strides = array<i32>} : memref<256x64xf32, #tpu.memory_space<vmem>>, vector<16x8xf32>,
      %c96_421 = arith.constant 96 : index
      %c88_422 = arith.constant 88 : index
      %235 = vector.load %arg11[%c96_421, %c88_422] : memref<128x128xf32, #tpu.memory_space<vmem>>, vector<16x8xf32>
      %c176_423 = arith.constant 176 : index
      %c48_424 = arith.constant 48 : index
      %236 = vector.load %arg13[%c176_423, %c48_424] : memref<256x64xf32, #tpu.memory_space<vmem>>, vector<16x8xf32>
      tpu.vector_store %arg13[%c176_423, %c48_424], %235 {strides = array<i32>} : memref<256x64xf32, #tpu.memory_space<vmem>>, vector<16x8xf32>,
      %c112_425 = arith.constant 112 : index
      %c88_426 = arith.constant 88 : index
      %237 = vector.load %arg11[%c112_425, %c88_426] : memref<128x128xf32, #tpu.memory_space<vmem>>, vector<16x8xf32>
      %c176_427 = arith.constant 176 : index
      %c56_428 = arith.constant 56 : index
      %238 = vector.load %arg13[%c176_427, %c56_428] : memref<256x64xf32, #tpu.memory_space<vmem>>, vector<16x8xf32>
      tpu.vector_store %arg13[%c176_427, %c56_428], %237 {strides = array<i32>} : memref<256x64xf32, #tpu.memory_space<vmem>>, vector<16x8xf32>,
      %c0_429 = arith.constant 0 : index
      %c12 = arith.constant 12 : index
      %239 = vector.load %arg12[%c0_429, %c12] : memref<16x16xf32, #tpu.memory_space<vmem>>, vector<16x1xf32>
      %c192 = arith.constant 192 : index
      %c0_430 = arith.constant 0 : index
      %240 = vector.load %arg14[%c192, %c0_430] : memref<256x1xf32, #tpu.memory_space<vmem>>, vector<16x1xf32>
      tpu.vector_store %arg14[%c192, %c0_430], %239 {strides = array<i32>} : memref<256x1xf32, #tpu.memory_space<vmem>>, vector<16x1xf32>,
      %c0_431 = arith.constant 0 : index
      %c96_432 = arith.constant 96 : index
      %241 = vector.load %arg11[%c0_431, %c96_432] : memref<128x128xf32, #tpu.memory_space<vmem>>, vector<16x8xf32>
      %c192_433 = arith.constant 192 : index
      %c0_434 = arith.constant 0 : index
      %242 = vector.load %arg13[%c192_433, %c0_434] : memref<256x64xf32, #tpu.memory_space<vmem>>, vector<16x8xf32>
      tpu.vector_store %arg13[%c192_433, %c0_434], %241 {strides = array<i32>} : memref<256x64xf32, #tpu.memory_space<vmem>>, vector<16x8xf32>,
      %c16_435 = arith.constant 16 : index
      %c96_436 = arith.constant 96 : index
      %243 = vector.load %arg11[%c16_435, %c96_436] : memref<128x128xf32, #tpu.memory_space<vmem>>, vector<16x8xf32>
      %c192_437 = arith.constant 192 : index
      %c8_438 = arith.constant 8 : index
      %244 = vector.load %arg13[%c192_437, %c8_438] : memref<256x64xf32, #tpu.memory_space<vmem>>, vector<16x8xf32>
      tpu.vector_store %arg13[%c192_437, %c8_438], %243 {strides = array<i32>} : memref<256x64xf32, #tpu.memory_space<vmem>>, vector<16x8xf32>,
      %c32_439 = arith.constant 32 : index
      %c96_440 = arith.constant 96 : index
      %245 = vector.load %arg11[%c32_439, %c96_440] : memref<128x128xf32, #tpu.memory_space<vmem>>, vector<16x8xf32>
      %c192_441 = arith.constant 192 : index
      %c16_442 = arith.constant 16 : index
      %246 = vector.load %arg13[%c192_441, %c16_442] : memref<256x64xf32, #tpu.memory_space<vmem>>, vector<16x8xf32>
      tpu.vector_store %arg13[%c192_441, %c16_442], %245 {strides = array<i32>} : memref<256x64xf32, #tpu.memory_space<vmem>>, vector<16x8xf32>,
      %c48_443 = arith.constant 48 : index
      %c96_444 = arith.constant 96 : index
      %247 = vector.load %arg11[%c48_443, %c96_444] : memref<128x128xf32, #tpu.memory_space<vmem>>, vector<16x8xf32>
      %c192_445 = arith.constant 192 : index
      %c24_446 = arith.constant 24 : index
      %248 = vector.load %arg13[%c192_445, %c24_446] : memref<256x64xf32, #tpu.memory_space<vmem>>, vector<16x8xf32>
      tpu.vector_store %arg13[%c192_445, %c24_446], %247 {strides = array<i32>} : memref<256x64xf32, #tpu.memory_space<vmem>>, vector<16x8xf32>,
      %c64_447 = arith.constant 64 : index
      %c96_448 = arith.constant 96 : index
      %249 = vector.load %arg11[%c64_447, %c96_448] : memref<128x128xf32, #tpu.memory_space<vmem>>, vector<16x8xf32>
      %c192_449 = arith.constant 192 : index
      %c32_450 = arith.constant 32 : index
      %250 = vector.load %arg13[%c192_449, %c32_450] : memref<256x64xf32, #tpu.memory_space<vmem>>, vector<16x8xf32>
      tpu.vector_store %arg13[%c192_449, %c32_450], %249 {strides = array<i32>} : memref<256x64xf32, #tpu.memory_space<vmem>>, vector<16x8xf32>,
      %c80_451 = arith.constant 80 : index
      %c96_452 = arith.constant 96 : index
      %251 = vector.load %arg11[%c80_451, %c96_452] : memref<128x128xf32, #tpu.memory_space<vmem>>, vector<16x8xf32>
      %c192_453 = arith.constant 192 : index
      %c40_454 = arith.constant 40 : index
      %252 = vector.load %arg13[%c192_453, %c40_454] : memref<256x64xf32, #tpu.memory_space<vmem>>, vector<16x8xf32>
      tpu.vector_store %arg13[%c192_453, %c40_454], %251 {strides = array<i32>} : memref<256x64xf32, #tpu.memory_space<vmem>>, vector<16x8xf32>,
      %c96_455 = arith.constant 96 : index
      %c96_456 = arith.constant 96 : index
      %253 = vector.load %arg11[%c96_455, %c96_456] : memref<128x128xf32, #tpu.memory_space<vmem>>, vector<16x8xf32>
      %c192_457 = arith.constant 192 : index
      %c48_458 = arith.constant 48 : index
      %254 = vector.load %arg13[%c192_457, %c48_458] : memref<256x64xf32, #tpu.memory_space<vmem>>, vector<16x8xf32>
      tpu.vector_store %arg13[%c192_457, %c48_458], %253 {strides = array<i32>} : memref<256x64xf32, #tpu.memory_space<vmem>>, vector<16x8xf32>,
      %c112_459 = arith.constant 112 : index
      %c96_460 = arith.constant 96 : index
      %255 = vector.load %arg11[%c112_459, %c96_460] : memref<128x128xf32, #tpu.memory_space<vmem>>, vector<16x8xf32>
      %c192_461 = arith.constant 192 : index
      %c56_462 = arith.constant 56 : index
      %256 = vector.load %arg13[%c192_461, %c56_462] : memref<256x64xf32, #tpu.memory_space<vmem>>, vector<16x8xf32>
      tpu.vector_store %arg13[%c192_461, %c56_462], %255 {strides = array<i32>} : memref<256x64xf32, #tpu.memory_space<vmem>>, vector<16x8xf32>,
      %c0_463 = arith.constant 0 : index
      %c13 = arith.constant 13 : index
      %257 = vector.load %arg12[%c0_463, %c13] : memref<16x16xf32, #tpu.memory_space<vmem>>, vector<16x1xf32>
      %c208 = arith.constant 208 : index
      %c0_464 = arith.constant 0 : index
      %258 = vector.load %arg14[%c208, %c0_464] : memref<256x1xf32, #tpu.memory_space<vmem>>, vector<16x1xf32>
      tpu.vector_store %arg14[%c208, %c0_464], %257 {strides = array<i32>} : memref<256x1xf32, #tpu.memory_space<vmem>>, vector<16x1xf32>,
      %c0_465 = arith.constant 0 : index
      %c104 = arith.constant 104 : index
      %259 = vector.load %arg11[%c0_465, %c104] : memref<128x128xf32, #tpu.memory_space<vmem>>, vector<16x8xf32>
      %c208_466 = arith.constant 208 : index
      %c0_467 = arith.constant 0 : index
      %260 = vector.load %arg13[%c208_466, %c0_467] : memref<256x64xf32, #tpu.memory_space<vmem>>, vector<16x8xf32>
      tpu.vector_store %arg13[%c208_466, %c0_467], %259 {strides = array<i32>} : memref<256x64xf32, #tpu.memory_space<vmem>>, vector<16x8xf32>,
      %c16_468 = arith.constant 16 : index
      %c104_469 = arith.constant 104 : index
      %261 = vector.load %arg11[%c16_468, %c104_469] : memref<128x128xf32, #tpu.memory_space<vmem>>, vector<16x8xf32>
      %c208_470 = arith.constant 208 : index
      %c8_471 = arith.constant 8 : index
      %262 = vector.load %arg13[%c208_470, %c8_471] : memref<256x64xf32, #tpu.memory_space<vmem>>, vector<16x8xf32>
      tpu.vector_store %arg13[%c208_470, %c8_471], %261 {strides = array<i32>} : memref<256x64xf32, #tpu.memory_space<vmem>>, vector<16x8xf32>,
      %c32_472 = arith.constant 32 : index
      %c104_473 = arith.constant 104 : index
      %263 = vector.load %arg11[%c32_472, %c104_473] : memref<128x128xf32, #tpu.memory_space<vmem>>, vector<16x8xf32>
      %c208_474 = arith.constant 208 : index
      %c16_475 = arith.constant 16 : index
      %264 = vector.load %arg13[%c208_474, %c16_475] : memref<256x64xf32, #tpu.memory_space<vmem>>, vector<16x8xf32>
      tpu.vector_store %arg13[%c208_474, %c16_475], %263 {strides = array<i32>} : memref<256x64xf32, #tpu.memory_space<vmem>>, vector<16x8xf32>,
      %c48_476 = arith.constant 48 : index
      %c104_477 = arith.constant 104 : index
      %265 = vector.load %arg11[%c48_476, %c104_477] : memref<128x128xf32, #tpu.memory_space<vmem>>, vector<16x8xf32>
      %c208_478 = arith.constant 208 : index
      %c24_479 = arith.constant 24 : index
      %266 = vector.load %arg13[%c208_478, %c24_479] : memref<256x64xf32, #tpu.memory_space<vmem>>, vector<16x8xf32>
      tpu.vector_store %arg13[%c208_478, %c24_479], %265 {strides = array<i32>} : memref<256x64xf32, #tpu.memory_space<vmem>>, vector<16x8xf32>,
      %c64_480 = arith.constant 64 : index
      %c104_481 = arith.constant 104 : index
      %267 = vector.load %arg11[%c64_480, %c104_481] : memref<128x128xf32, #tpu.memory_space<vmem>>, vector<16x8xf32>
      %c208_482 = arith.constant 208 : index
      %c32_483 = arith.constant 32 : index
      %268 = vector.load %arg13[%c208_482, %c32_483] : memref<256x64xf32, #tpu.memory_space<vmem>>, vector<16x8xf32>
      tpu.vector_store %arg13[%c208_482, %c32_483], %267 {strides = array<i32>} : memref<256x64xf32, #tpu.memory_space<vmem>>, vector<16x8xf32>,
      %c80_484 = arith.constant 80 : index
      %c104_485 = arith.constant 104 : index
      %269 = vector.load %arg11[%c80_484, %c104_485] : memref<128x128xf32, #tpu.memory_space<vmem>>, vector<16x8xf32>
      %c208_486 = arith.constant 208 : index
      %c40_487 = arith.constant 40 : index
      %270 = vector.load %arg13[%c208_486, %c40_487] : memref<256x64xf32, #tpu.memory_space<vmem>>, vector<16x8xf32>
      tpu.vector_store %arg13[%c208_486, %c40_487], %269 {strides = array<i32>} : memref<256x64xf32, #tpu.memory_space<vmem>>, vector<16x8xf32>,
      %c96_488 = arith.constant 96 : index
      %c104_489 = arith.constant 104 : index
      %271 = vector.load %arg11[%c96_488, %c104_489] : memref<128x128xf32, #tpu.memory_space<vmem>>, vector<16x8xf32>
      %c208_490 = arith.constant 208 : index
      %c48_491 = arith.constant 48 : index
      %272 = vector.load %arg13[%c208_490, %c48_491] : memref<256x64xf32, #tpu.memory_space<vmem>>, vector<16x8xf32>
      tpu.vector_store %arg13[%c208_490, %c48_491], %271 {strides = array<i32>} : memref<256x64xf32, #tpu.memory_space<vmem>>, vector<16x8xf32>,
      %c112_492 = arith.constant 112 : index
      %c104_493 = arith.constant 104 : index
      %273 = vector.load %arg11[%c112_492, %c104_493] : memref<128x128xf32, #tpu.memory_space<vmem>>, vector<16x8xf32>
      %c208_494 = arith.constant 208 : index
      %c56_495 = arith.constant 56 : index
      %274 = vector.load %arg13[%c208_494, %c56_495] : memref<256x64xf32, #tpu.memory_space<vmem>>, vector<16x8xf32>
      tpu.vector_store %arg13[%c208_494, %c56_495], %273 {strides = array<i32>} : memref<256x64xf32, #tpu.memory_space<vmem>>, vector<16x8xf32>,
      %c0_496 = arith.constant 0 : index
      %c14 = arith.constant 14 : index
      %275 = vector.load %arg12[%c0_496, %c14] : memref<16x16xf32, #tpu.memory_space<vmem>>, vector<16x1xf32>
      %c224 = arith.constant 224 : index
      %c0_497 = arith.constant 0 : index
      %276 = vector.load %arg14[%c224, %c0_497] : memref<256x1xf32, #tpu.memory_space<vmem>>, vector<16x1xf32>
      tpu.vector_store %arg14[%c224, %c0_497], %275 {strides = array<i32>} : memref<256x1xf32, #tpu.memory_space<vmem>>, vector<16x1xf32>,
      %c0_498 = arith.constant 0 : index
      %c112_499 = arith.constant 112 : index
      %277 = vector.load %arg11[%c0_498, %c112_499] : memref<128x128xf32, #tpu.memory_space<vmem>>, vector<16x8xf32>
      %c224_500 = arith.constant 224 : index
      %c0_501 = arith.constant 0 : index
      %278 = vector.load %arg13[%c224_500, %c0_501] : memref<256x64xf32, #tpu.memory_space<vmem>>, vector<16x8xf32>
      tpu.vector_store %arg13[%c224_500, %c0_501], %277 {strides = array<i32>} : memref<256x64xf32, #tpu.memory_space<vmem>>, vector<16x8xf32>,
      %c16_502 = arith.constant 16 : index
      %c112_503 = arith.constant 112 : index
      %279 = vector.load %arg11[%c16_502, %c112_503] : memref<128x128xf32, #tpu.memory_space<vmem>>, vector<16x8xf32>
      %c224_504 = arith.constant 224 : index
      %c8_505 = arith.constant 8 : index
      %280 = vector.load %arg13[%c224_504, %c8_505] : memref<256x64xf32, #tpu.memory_space<vmem>>, vector<16x8xf32>
      tpu.vector_store %arg13[%c224_504, %c8_505], %279 {strides = array<i32>} : memref<256x64xf32, #tpu.memory_space<vmem>>, vector<16x8xf32>,
      %c32_506 = arith.constant 32 : index
      %c112_507 = arith.constant 112 : index
      %281 = vector.load %arg11[%c32_506, %c112_507] : memref<128x128xf32, #tpu.memory_space<vmem>>, vector<16x8xf32>
      %c224_508 = arith.constant 224 : index
      %c16_509 = arith.constant 16 : index
      %282 = vector.load %arg13[%c224_508, %c16_509] : memref<256x64xf32, #tpu.memory_space<vmem>>, vector<16x8xf32>
      tpu.vector_store %arg13[%c224_508, %c16_509], %281 {strides = array<i32>} : memref<256x64xf32, #tpu.memory_space<vmem>>, vector<16x8xf32>,
      %c48_510 = arith.constant 48 : index
      %c112_511 = arith.constant 112 : index
      %283 = vector.load %arg11[%c48_510, %c112_511] : memref<128x128xf32, #tpu.memory_space<vmem>>, vector<16x8xf32>
      %c224_512 = arith.constant 224 : index
      %c24_513 = arith.constant 24 : index
      %284 = vector.load %arg13[%c224_512, %c24_513] : memref<256x64xf32, #tpu.memory_space<vmem>>, vector<16x8xf32>
      tpu.vector_store %arg13[%c224_512, %c24_513], %283 {strides = array<i32>} : memref<256x64xf32, #tpu.memory_space<vmem>>, vector<16x8xf32>,
      %c64_514 = arith.constant 64 : index
      %c112_515 = arith.constant 112 : index
      %285 = vector.load %arg11[%c64_514, %c112_515] : memref<128x128xf32, #tpu.memory_space<vmem>>, vector<16x8xf32>
      %c224_516 = arith.constant 224 : index
      %c32_517 = arith.constant 32 : index
      %286 = vector.load %arg13[%c224_516, %c32_517] : memref<256x64xf32, #tpu.memory_space<vmem>>, vector<16x8xf32>
      tpu.vector_store %arg13[%c224_516, %c32_517], %285 {strides = array<i32>} : memref<256x64xf32, #tpu.memory_space<vmem>>, vector<16x8xf32>,
      %c80_518 = arith.constant 80 : index
      %c112_519 = arith.constant 112 : index
      %287 = vector.load %arg11[%c80_518, %c112_519] : memref<128x128xf32, #tpu.memory_space<vmem>>, vector<16x8xf32>
      %c224_520 = arith.constant 224 : index
      %c40_521 = arith.constant 40 : index
      %288 = vector.load %arg13[%c224_520, %c40_521] : memref<256x64xf32, #tpu.memory_space<vmem>>, vector<16x8xf32>
      tpu.vector_store %arg13[%c224_520, %c40_521], %287 {strides = array<i32>} : memref<256x64xf32, #tpu.memory_space<vmem>>, vector<16x8xf32>,
      %c96_522 = arith.constant 96 : index
      %c112_523 = arith.constant 112 : index
      %289 = vector.load %arg11[%c96_522, %c112_523] : memref<128x128xf32, #tpu.memory_space<vmem>>, vector<16x8xf32>
      %c224_524 = arith.constant 224 : index
      %c48_525 = arith.constant 48 : index
      %290 = vector.load %arg13[%c224_524, %c48_525] : memref<256x64xf32, #tpu.memory_space<vmem>>, vector<16x8xf32>
      tpu.vector_store %arg13[%c224_524, %c48_525], %289 {strides = array<i32>} : memref<256x64xf32, #tpu.memory_space<vmem>>, vector<16x8xf32>,
      %c112_526 = arith.constant 112 : index
      %c112_527 = arith.constant 112 : index
      %291 = vector.load %arg11[%c112_526, %c112_527] : memref<128x128xf32, #tpu.memory_space<vmem>>, vector<16x8xf32>
      %c224_528 = arith.constant 224 : index
      %c56_529 = arith.constant 56 : index
      %292 = vector.load %arg13[%c224_528, %c56_529] : memref<256x64xf32, #tpu.memory_space<vmem>>, vector<16x8xf32>
      tpu.vector_store %arg13[%c224_528, %c56_529], %291 {strides = array<i32>} : memref<256x64xf32, #tpu.memory_space<vmem>>, vector<16x8xf32>,
      %c0_530 = arith.constant 0 : index
      %c15 = arith.constant 15 : index
      %293 = vector.load %arg12[%c0_530, %c15] : memref<16x16xf32, #tpu.memory_space<vmem>>, vector<16x1xf32>
      %c240 = arith.constant 240 : index
      %c0_531 = arith.constant 0 : index
      %294 = vector.load %arg14[%c240, %c0_531] : memref<256x1xf32, #tpu.memory_space<vmem>>, vector<16x1xf32>
      tpu.vector_store %arg14[%c240, %c0_531], %293 {strides = array<i32>} : memref<256x1xf32, #tpu.memory_space<vmem>>, vector<16x1xf32>,
      %c0_532 = arith.constant 0 : index
      %c120 = arith.constant 120 : index
      %295 = vector.load %arg11[%c0_532, %c120] : memref<128x128xf32, #tpu.memory_space<vmem>>, vector<16x8xf32>
      %c240_533 = arith.constant 240 : index
      %c0_534 = arith.constant 0 : index
      %296 = vector.load %arg13[%c240_533, %c0_534] : memref<256x64xf32, #tpu.memory_space<vmem>>, vector<16x8xf32>
      tpu.vector_store %arg13[%c240_533, %c0_534], %295 {strides = array<i32>} : memref<256x64xf32, #tpu.memory_space<vmem>>, vector<16x8xf32>,
      %c16_535 = arith.constant 16 : index
      %c120_536 = arith.constant 120 : index
      %297 = vector.load %arg11[%c16_535, %c120_536] : memref<128x128xf32, #tpu.memory_space<vmem>>, vector<16x8xf32>
      %c240_537 = arith.constant 240 : index
      %c8_538 = arith.constant 8 : index
      %298 = vector.load %arg13[%c240_537, %c8_538] : memref<256x64xf32, #tpu.memory_space<vmem>>, vector<16x8xf32>
      tpu.vector_store %arg13[%c240_537, %c8_538], %297 {strides = array<i32>} : memref<256x64xf32, #tpu.memory_space<vmem>>, vector<16x8xf32>,
      %c32_539 = arith.constant 32 : index
      %c120_540 = arith.constant 120 : index
      %299 = vector.load %arg11[%c32_539, %c120_540] : memref<128x128xf32, #tpu.memory_space<vmem>>, vector<16x8xf32>
      %c240_541 = arith.constant 240 : index
      %c16_542 = arith.constant 16 : index
      %300 = vector.load %arg13[%c240_541, %c16_542] : memref<256x64xf32, #tpu.memory_space<vmem>>, vector<16x8xf32>
      tpu.vector_store %arg13[%c240_541, %c16_542], %299 {strides = array<i32>} : memref<256x64xf32, #tpu.memory_space<vmem>>, vector<16x8xf32>,
      %c48_543 = arith.constant 48 : index
      %c120_544 = arith.constant 120 : index
      %301 = vector.load %arg11[%c48_543, %c120_544] : memref<128x128xf32, #tpu.memory_space<vmem>>, vector<16x8xf32>
      %c240_545 = arith.constant 240 : index
      %c24_546 = arith.constant 24 : index
      %302 = vector.load %arg13[%c240_545, %c24_546] : memref<256x64xf32, #tpu.memory_space<vmem>>, vector<16x8xf32>
      tpu.vector_store %arg13[%c240_545, %c24_546], %301 {strides = array<i32>} : memref<256x64xf32, #tpu.memory_space<vmem>>, vector<16x8xf32>,
      %c64_547 = arith.constant 64 : index
      %c120_548 = arith.constant 120 : index
      %303 = vector.load %arg11[%c64_547, %c120_548] : memref<128x128xf32, #tpu.memory_space<vmem>>, vector<16x8xf32>
      %c240_549 = arith.constant 240 : index
      %c32_550 = arith.constant 32 : index
      %304 = vector.load %arg13[%c240_549, %c32_550] : memref<256x64xf32, #tpu.memory_space<vmem>>, vector<16x8xf32>
      tpu.vector_store %arg13[%c240_549, %c32_550], %303 {strides = array<i32>} : memref<256x64xf32, #tpu.memory_space<vmem>>, vector<16x8xf32>,
      %c80_551 = arith.constant 80 : index
      %c120_552 = arith.constant 120 : index
      %305 = vector.load %arg11[%c80_551, %c120_552] : memref<128x128xf32, #tpu.memory_space<vmem>>, vector<16x8xf32>
      %c240_553 = arith.constant 240 : index
      %c40_554 = arith.constant 40 : index
      %306 = vector.load %arg13[%c240_553, %c40_554] : memref<256x64xf32, #tpu.memory_space<vmem>>, vector<16x8xf32>
      tpu.vector_store %arg13[%c240_553, %c40_554], %305 {strides = array<i32>} : memref<256x64xf32, #tpu.memory_space<vmem>>, vector<16x8xf32>,
      %c96_555 = arith.constant 96 : index
      %c120_556 = arith.constant 120 : index
      %307 = vector.load %arg11[%c96_555, %c120_556] : memref<128x128xf32, #tpu.memory_space<vmem>>, vector<16x8xf32>
      %c240_557 = arith.constant 240 : index
      %c48_558 = arith.constant 48 : index
      %308 = vector.load %arg13[%c240_557, %c48_558] : memref<256x64xf32, #tpu.memory_space<vmem>>, vector<16x8xf32>
      tpu.vector_store %arg13[%c240_557, %c48_558], %307 {strides = array<i32>} : memref<256x64xf32, #tpu.memory_space<vmem>>, vector<16x8xf32>,
      %c112_559 = arith.constant 112 : index
      %c120_560 = arith.constant 120 : index
      %309 = vector.load %arg11[%c112_559, %c120_560] : memref<128x128xf32, #tpu.memory_space<vmem>>, vector<16x8xf32>
      %c240_561 = arith.constant 240 : index
      %c56_562 = arith.constant 56 : index
      %310 = vector.load %arg13[%c240_561, %c56_562] : memref<256x64xf32, #tpu.memory_space<vmem>>, vector<16x8xf32>
      tpu.vector_store %arg13[%c240_561, %c56_562], %309 {strides = array<i32>} : memref<256x64xf32, #tpu.memory_space<vmem>>, vector<16x8xf32>,
      %c0_563 = arith.constant 0 : index
      %c0_564 = arith.constant 0 : index
      %311 = vector.load %arg13[%c0_563, %c0_564] : memref<256x64xf32, #tpu.memory_space<vmem>>, vector<256x64xf32>
      %312 = arith.truncf %311 : vector<256x64xf32> to vector<256x64xbf16>
      %c0_565 = arith.constant 0 : index
      %c0_566 = arith.constant 0 : index
      %313 = vector.load %arg8[%c0_565, %c0_566] : memref<64x32xbf16, #tpu.memory_space<vmem>>, vector<64x32xbf16>
      %cst_567 = arith.constant dense<0.000000e+00> : vector<256x32xf32>
      %314 = tpu.matmul %312, %313, %cst_567 {dimension_numbers = #tpu.dot_dimension_numbers<[1], [0], [0], [1], [0, 0, 1, 1], [], []>} : vector<256x64xbf16>, vector<64x32xbf16>, vector<256x32xf32> -> vector<256x32xf32>
      %c0_568 = arith.constant 0 : index
      %c0_569 = arith.constant 0 : index
      %315 = vector.load %arg14[%c0_568, %c0_569] : memref<256x1xf32, #tpu.memory_space<vmem>>, vector<256x1xf32>
      %cst_570 = arith.constant 1.000000e-03 : f32
      %316 = vector.broadcast %cst_570 : f32 to vector<256x1xf32>
      %317 = arith.addf %315, %316 : vector<256x1xf32>
      %318 = tpu.reciprocal %317 {approx = true} : vector<256x1xf32> -> vector<256x1xf32>
      %c0_571 = arith.constant 0 : index
      %c0_572 = arith.constant 0 : index
      %319 = vector.load %arg9[%c0_571, %c0_572] : memref<1x32xf32, #tpu.memory_space<vmem>>, vector<1x32xf32>
      %320 = vector.broadcast %319 : vector<1x32xf32> to vector<256x32xf32>
      %321 = arith.addf %314, %320 : vector<256x32xf32>
      %322 = vector.broadcast %318 : vector<256x1xf32> to vector<256x32xf32>
      %323 = arith.mulf %321, %322 : vector<256x32xf32>
      %324 = vector.shape_cast %323 : vector<256x32xf32> to vector<16x16x32xf32>
      %c0_573 = arith.constant 0 : index
      %c0_574 = arith.constant 0 : index
      %c0_575 = arith.constant 0 : index
      %c0_576 = arith.constant 0 : index
      %325 = vector.load %arg10[%c0_573, %c0_574, %c0_575, %c0_576] : memref<1x16x16x32xf32, #tpu.memory_space<vmem>>, vector<1x16x16x32xf32>
      %326 = vector.shape_cast %325 : vector<1x16x16x32xf32> to vector<16x16x32xf32>
      %327 = vector.shape_cast %324 : vector<16x16x32xf32> to vector<1x16x16x32xf32>
      tpu.vector_store %arg10[%c0_573, %c0_574, %c0_575, %c0_576], %327 {strides = array<i32>} : memref<1x16x16x32xf32, #tpu.memory_space<vmem>>, vector<1x16x16x32xf32>,
    } else {
    }
    return
  }
  func.func @transform_0(%arg0: i32, %arg1: i32, %arg2: i32, %arg3: i32) -> (i32, i32, i32, i32) {
    %c0_i32 = arith.constant 0 : i32
    %c0_i32_0 = arith.constant 0 : i32
    return %arg0, %c0_i32, %arg2, %arg3 : i32, i32, i32, i32
  }
  func.func @transform_1(%arg0: i32, %arg1: i32, %arg2: i32, %arg3: i32) -> (i32, i32, i32) {
    %c0_i32 = arith.constant 0 : i32
    return %arg0, %arg3, %arg1 : i32, i32, i32
  }
  func.func @transform_2(%arg0: i32, %arg1: i32, %arg2: i32, %arg3: i32) -> (i32, i32, i32) {
    %c0_i32 = arith.constant 0 : i32
    return %arg0, %arg2, %arg3 : i32, i32, i32
  }
  func.func @transform_3(%arg0: i32, %arg1: i32, %arg2: i32, %arg3: i32) -> (i32, i32, i32) {
    %c0_i32 = arith.constant 0 : i32
    return %arg0, %arg3, %arg1 : i32, i32, i32
  }
  func.func @transform_4(%arg0: i32, %arg1: i32, %arg2: i32, %arg3: i32) -> (i32, i32) {
    %c0_i32 = arith.constant 0 : i32
    %c0_i32_0 = arith.constant 0 : i32
    %c0_i32_1 = arith.constant 0 : i32
    return %c0_i32, %c0_i32_0 : i32, i32
  }
  func.func @transform_5(%arg0: i32, %arg1: i32, %arg2: i32, %arg3: i32) -> (i32, i32) {
    %c0_i32 = arith.constant 0 : i32
    %c0_i32_0 = arith.constant 0 : i32
    %c0_i32_1 = arith.constant 0 : i32
    return %c0_i32, %c0_i32_0 : i32, i32
  }
  func.func @transform_6(%arg0: i32, %arg1: i32, %arg2: i32, %arg3: i32) -> (i32, i32, i32, i32) {
    %c0_i32 = arith.constant 0 : i32
    %c0_i32_0 = arith.constant 0 : i32
    return %arg0, %arg1, %arg2, %c0_i32 : i32, i32, i32, i32
  }
}

</mosaic_0001>

<llo_original>
// kernel: outer_product_mean.2
$region0: #{outer_product_mean.2}
  #allocation0 [shape = 'u32[]', space=smem, size = 0x4, offset = 0x4, fixed_abs, tag = 'smem constant byte address 0x4 - core index']
  #allocation1 [shape = 'u32[72,128]{1,0:T(1,128)}', space=vmem, size = 0x9000, scoped, tag = 'internal scratch']
  %s0 = inlined_call_operand.vmem [shape: f32[2,8,16,32], index: 0, kind: input, shape index: {}]
  %s1 = inlined_call_operand.vmem [shape: f32[2,8,16,1], index: 1, kind: input, shape index: {}]
  %s2 = inlined_call_operand.vmem [shape: f32[2,32], index: 2, kind: input, shape index: {}]
  %s3 = inlined_call_operand.vmem [shape: bf16[32,16], index: 3, kind: input, shape index: {}]
  %s4 = inlined_call_operand.vmem [shape: f32[1,16], index: 4, kind: input, shape index: {}]
  %s5 = inlined_call_operand.vmem [shape: bf16[2,8,16,8], index: 5, kind: output, shape index: {0}]
  %s6 = inlined_call_operand.vmem [shape: bf16[2,8,16,8], index: 6, kind: output, shape index: {1}]
  %7 = xla_tuple %s5, %s6
  %s8 = sld [smem:[#allocation0]]
  $region61: #{outer_product_mean.2} parent=0
    _
  %s10 = ssub.s32 1, %s8
  %s11 = scalar_select 0, %s10, %s8
  loop: start=0, step=1, limit=4
  $region2: #{outer_product_mean.2} parent=0 // loop_pre_header
    _
  $region3: #{outer_product_mean.2} parent=0 // loop_header
    %s13 = sphi 0, %s17
    %p14 = scmp.ge.s32.totalorder %s13, 4
    %s20 = sphi 0, %s32
    %s21 = sphi 0, %s28
    %s22 = sphi 0, %s20
    %s23 = sphi 0, %s21
    %s24 = sphi 0, %s22
    %s25 = sphi 0, %s23
    %s37 = sphi 0, %s39
    %s40 = sphi 0, %s37
    %s41 = sphi 0, %s40
    %s57 = sphi 0, %s41
    %s65 = sphi 0, %s67
    %s68 = sphi 0, %s65
    %s69 = sphi 0, %s68
    %s85 = sphi 0, %s69
    %s89 = sphi 0, %s89
    %s91 = sphi 0, %s89
    %s92 = sphi 0, %s91
    %s106 = sphi 0, %s92
    %s110 = sphi 0, %s110
    %s112 = sphi 0, %s110
    %s113 = sphi 0, %s112
    %s127 = sphi 0, %s113
    %s131 = sphi 0, %s131
    %s133 = sphi 0, %s131
    %s134 = sphi 0, %s133
    %s148 = sphi 0, %s134
    %s156 = sphi 0, %s158
    %s159 = sphi 0, %s156
    %s160 = sphi 0, %s159
    %s176 = sphi 0, %s160
    %s184 = sphi 0, %s186
    %s187 = sphi 0, %s184
    %s188 = sphi 0, %s187
    %s204 = sphi 0, %s188
  $region4: #{outer_product_mean.2} parent=0 // loop_header_branch
    %16 = sbr.rel (%p14) target = $region8
  $region5: #{outer_product_mean.2} parent=0 // loop_body
    %s18 = ssub.s32 %s13, 1
    %s19 = ssub.s32 %s13, 2
    %s26 = sadd.s32 1, %s21
    %p27 = scmp.ge.s32.totalorder %s26, 1
    %s28 = scalar_select %p27, 0, %s26
    %s29 = sadd.s32 1, %s20
    %s30 = scalar_select %p27, %s29, %s20
    %p31 = scmp.ge.s32.totalorder %s30, 2
    %s32 = scalar_select %p31, 0, %s30
    %s33 = ssub.s32 %s20, %s32
    %s34 = ssub.s32 %s21, %s28
    %s35 = sor.u32 %s33, %s34
    %p36 = scmp.eq.s32.totalorder %s35, 0
    %s38 = sadd.s32 %s37, 1
    %s39 = scalar_select %p36, %s37, %s38
    %p42 = pneg %p36
    %p43 = scmp.eq.s32.totalorder %s13, 1
    %p44 = por %p42, %p43
    %p45 = scmp.ne.s32.totalorder %s37, %s40
    %p46 = scmp.eq.s32.totalorder %s13, 0
    %p47 = por %p45, %p46
    %p48 = scmp.ne.s32.totalorder %s37, %s40
    %p49 = scmp.eq.s32.totalorder %s18, 1
    %p50 = por %p48, %p49
    %p51 = scmp.ne.s32.totalorder %s40, %s41
    %p52 = scmp.eq.s32.totalorder %s18, 0
    %p53 = por %p51, %p52
    %p54 = scmp.ne.s32.totalorder %s40, %s41
    %p55 = scmp.eq.s32.totalorder %s19, 1
    %p56 = por %p54, %p55
    %p58 = scmp.ne.s32.totalorder %s41, %s57
    %p59 = scmp.eq.s32.totalorder %s19, 0
    %p60 = por %p58, %p59
    %s61 = ssub.s32 %s20, %s32
    %s62 = ssub.s32 %s21, %s28
    %s63 = sor.u32 %s61, %s62
    %p64 = scmp.eq.s32.totalorder %s63, 0
    %s66 = sadd.s32 %s65, 1
    %s67 = scalar_select %p64, %s65, %s66
    %p70 = pneg %p64
    %p71 = scmp.eq.s32.totalorder %s13, 1
    %p72 = por %p70, %p71
    %p73 = scmp.ne.s32.totalorder %s65, %s68
    %p74 = scmp.eq.s32.totalorder %s13, 0
    %p75 = por %p73, %p74
    %p76 = scmp.ne.s32.totalorder %s65, %s68
    %p77 = scmp.eq.s32.totalorder %s18, 1
    %p78 = por %p76, %p77
    %p79 = scmp.ne.s32.totalorder %s68, %s69
    %p80 = scmp.eq.s32.totalorder %s18, 0
    %p81 = por %p79, %p80
    %p82 = scmp.ne.s32.totalorder %s68, %s69
    %p83 = scmp.eq.s32.totalorder %s19, 1
    %p84 = por %p82, %p83
    %p86 = scmp.ne.s32.totalorder %s69, %s85
    %p87 = scmp.eq.s32.totalorder %s19, 0
    %p88 = por %p86, %p87
    %s90 = sadd.s32 %s89, 1
    %p93 = scmp.eq.s32.totalorder %s13, 1
    %p94 = scmp.ne.s32.totalorder %s89, %s91
    %p95 = scmp.eq.s32.totalorder %s13, 0
    %p96 = por %p94, %p95
    %p97 = scmp.ne.s32.totalorder %s89, %s91
    %p98 = scmp.eq.s32.totalorder %s18, 1
    %p99 = por %p97, %p98
    %p100 = scmp.ne.s32.totalorder %s91, %s92
    %p101 = scmp.eq.s32.totalorder %s18, 0
    %p102 = por %p100, %p101
    %p103 = scmp.ne.s32.totalorder %s91, %s92
    %p104 = scmp.eq.s32.totalorder %s19, 1
    %p105 = por %p103, %p104
    %p107 = scmp.ne.s32.totalorder %s92, %s106
    %p108 = scmp.eq.s32.totalorder %s19, 0
    %p109 = por %p107, %p108
    %s111 = sadd.s32 %s110, 1
    %p114 = scmp.eq.s32.totalorder %s13, 1
    %p115 = scmp.ne.s32.totalorder %s110, %s112
    %p116 = scmp.eq.s32.totalorder %s13, 0
    %p117 = por %p115, %p116
    %p118 = scmp.ne.s32.totalorder %s110, %s112
    %p119 = scmp.eq.s32.totalorder %s18, 1
    %p120 = por %p118, %p119
    %p121 = scmp.ne.s32.totalorder %s112, %s113
    %p122 = scmp.eq.s32.totalorder %s18, 0
    %p123 = por %p121, %p122
    %p124 = scmp.ne.s32.totalorder %s112, %s113
    %p125 = scmp.eq.s32.totalorder %s19, 1
    %p126 = por %p124, %p125
    %p128 = scmp.ne.s32.totalorder %s113, %s127
    %p129 = scmp.eq.s32.totalorder %s19, 0
    %p130 = por %p128, %p129
    %s132 = sadd.s32 %s131, 1
    %p135 = scmp.eq.s32.totalorder %s13, 1
    %p136 = scmp.ne.s32.totalorder %s131, %s133
    %p137 = scmp.eq.s32.totalorder %s13, 0
    %p138 = por %p136, %p137
    %p139 = scmp.ne.s32.totalorder %s131, %s133
    %p140 = scmp.eq.s32.totalorder %s18, 1
    %p141 = por %p139, %p140
    %p142 = scmp.ne.s32.totalorder %s133, %s134
    %p143 = scmp.eq.s32.totalorder %s18, 0
    %p144 = por %p142, %p143
    %p145 = scmp.ne.s32.totalorder %s133, %s134
    %p146 = scmp.eq.s32.totalorder %s19, 1
    %p147 = por %p145, %p146
    %p149 = scmp.ne.s32.totalorder %s134, %s148
    %p150 = scmp.eq.s32.totalorder %s19, 0
    %p151 = por %p149, %p150
    %s152 = ssub.s32 %s20, %s32
    %s153 = ssub.s32 %s21, %s28
    %s154 = sor.u32 %s152, %s153
    %p155 = scmp.eq.s32.totalorder %s154, 0
    %s157 = sadd.s32 %s156, 1
    %s158 = scalar_select %p155, %s156, %s157
    %p161 = pneg %p155
    %p162 = scmp.eq.s32.totalorder %s13, 1
    %p163 = por %p161, %p162
    %p164 = scmp.ne.s32.totalorder %s156, %s159
    %p165 = scmp.eq.s32.totalorder %s13, 0
    %p166 = por %p164, %p165
    %p167 = scmp.ne.s32.totalorder %s156, %s159
    %p168 = scmp.eq.s32.totalorder %s18, 1
    %p169 = por %p167, %p168
    %p170 = scmp.ne.s32.totalorder %s159, %s160
    %p171 = scmp.eq.s32.totalorder %s18, 0
    %p172 = por %p170, %p171
    %p173 = scmp.ne.s32.totalorder %s159, %s160
    %p174 = scmp.eq.s32.totalorder %s19, 1
    %p175 = por %p173, %p174
    %p177 = scmp.ne.s32.totalorder %s160, %s176
    %p178 = scmp.eq.s32.totalorder %s19, 0
    %p179 = por %p177, %p178
    %s180 = ssub.s32 %s20, %s32
    %s181 = ssub.s32 %s21, %s28
    %s182 = sor.u32 %s180, %s181
    %p183 = scmp.eq.s32.totalorder %s182, 0
    %s185 = sadd.s32 %s184, 1
    %s186 = scalar_select %p183, %s184, %s185
    %p189 = pneg %p183
    %p190 = scmp.eq.s32.totalorder %s13, 1
    %p191 = por %p189, %p190
    %p192 = scmp.ne.s32.totalorder %s184, %s187
    %p193 = scmp.eq.s32.totalorder %s13, 0
    %p194 = por %p192, %p193
    %p195 = scmp.ne.s32.totalorder %s184, %s187
    %p196 = scmp.eq.s32.totalorder %s18, 1
    %p197 = por %p195, %p196
    %p198 = scmp.ne.s32.totalorder %s187, %s188
    %p199 = scmp.eq.s32.totalorder %s18, 0
    %p200 = por %p198, %p199
    %p201 = scmp.ne.s32.totalorder %s187, %s188
    %p202 = scmp.eq.s32.totalorder %s19, 1
    %p203 = por %p201, %p202
    %p205 = scmp.ne.s32.totalorder %s188, %s204
    %p206 = scmp.eq.s32.totalorder %s19, 0
    %p207 = por %p205, %p206
    %p208 = scmp.le.s32.totalorder 1, %s13
    %p209 = scmp.lt.s32.totalorder %s13, 3
    %p210 = pnand %p208, %p209
    %p211 = pneg %p210
    // Predicated region
    $region9: #{outer_product_mean.2} parent=5 // pred_check
      _
    $region10: #{outer_product_mean.2} parent=5 // pred_check_branch
      %213 = sbr.rel (%p210) target = $region12
    $region11: #{outer_product_mean.2} parent=5 // pred_region
      %s214 = ssub.s32 %s13, 1
      // Predicated region
      $region13: #{outer_product_mean.2} parent=11 // pred_check
        %p215 = pneg %p102
      $region14: #{outer_product_mean.2} parent=11 // pred_check_branch
        %217 = sbr.rel (%p215) target = $region16
      $region15: #{outer_product_mean.2} parent=11 // pred_region
        _
      $region16: #{outer_product_mean.2} parent=11 // pred_fallthru
        _
      // Predicated region
      $region17: #{outer_product_mean.2} parent=11 // pred_check
        %p218 = pneg %p123
      $region18: #{outer_product_mean.2} parent=11 // pred_check_branch
        %220 = sbr.rel (%p218) target = $region20
      $region19: #{outer_product_mean.2} parent=11 // pred_region
        _
      $region20: #{outer_product_mean.2} parent=11 // pred_fallthru
        _
      // Predicated region
      $region21: #{outer_product_mean.2} parent=11 // pred_check
        %p221 = pneg %p144
      $region22: #{outer_product_mean.2} parent=11 // pred_check_branch
        %223 = sbr.rel (%p221) target = $region24
      $region23: #{outer_product_mean.2} parent=11 // pred_region
        _
      $region24: #{outer_product_mean.2} parent=11 // pred_fallthru
        _
    $region12: #{outer_product_mean.2} parent=5 // pred_fallthru
      _
    %p224 = scmp.lt.s32.totalorder %s13, 2
    // Predicated region
    $region25: #{outer_product_mean.2} parent=5 // pred_check
      %p225 = pneg %p224
    $region26: #{outer_product_mean.2} parent=5 // pred_check_branch
      %227 = sbr.rel (%p225) target = $region28
    $region27: #{outer_product_mean.2} parent=5 // pred_region
      // Predicated region
      $region29: #{outer_product_mean.2} parent=27 // pred_check
        %p228 = pneg %p47
      $region30: #{outer_product_mean.2} parent=27 // pred_check_branch
        %230 = sbr.rel (%p228) target = $region32
      $region31: #{outer_product_mean.2} parent=27 // pred_region
        %s231 = smul.u32 8, %s21
        %p232 = scmp.lt.s32.totalorder %s20, 1
        %s233 = scalar_select %p232, %s20, 1
        %p234 = scmp.lt.s32.totalorder %s231, 7
        %s235 = scalar_select %p234, %s231, 7
        %s236 = smul.addr %s235, 2
        %s237 = smul.addr %s233, 16
        %s238 = sadd.s32 %s236, %s237
        %s239 = smul.addr %s238, 8
        %s240 = scalar_lea.vmem %s0, %s239
        %s241 = smul.u32 8, %s21
      $region32: #{outer_product_mean.2} parent=27 // pred_fallthru
        _
      // Predicated region
      $region33: #{outer_product_mean.2} parent=27 // pred_check
        %p242 = pneg %p75
      $region34: #{outer_product_mean.2} parent=27 // pred_check_branch
        %244 = sbr.rel (%p242) target = $region36
      $region35: #{outer_product_mean.2} parent=27 // pred_region
        %s245 = smul.u32 8, %s21
        %p246 = scmp.lt.s32.totalorder %s20, 1
        %s247 = scalar_select %p246, %s20, 1
        %p248 = scmp.lt.s32.totalorder %s245, 7
        %s249 = scalar_select %p248, %s245, 7
        %s250 = smul.addr %s249, 2
        %s251 = smul.addr %s247, 16
        %s252 = sadd.s32 %s250, %s251
        %s253 = smul.addr %s252, 8
        %s254 = scalar_lea.vmem %s1, %s253
        %s255 = smul.u32 8, %s21
      $region36: #{outer_product_mean.2} parent=27 // pred_fallthru
        _
    $region28: #{outer_product_mean.2} parent=5 // pred_fallthru
      _
    %p256 = scmp.le.s32.totalorder 1, %s13
    %p257 = scmp.lt.s32.totalorder %s13, 3
    %p258 = pnand %p256, %p257
    %p259 = pneg %p258
    // Predicated region
    $region37: #{outer_product_mean.2} parent=5 // pred_check
      _
    $region38: #{outer_product_mean.2} parent=5 // pred_check_branch
      %261 = sbr.rel (%p258) target = $region40
    $region39: #{outer_product_mean.2} parent=5 // pred_region
      %s262 = ssub.s32 %s13, 1
      %s263 = smul.u32 8, %s23
      %p264 = scmp.lt.s32.totalorder %s22, 1
      %s265 = scalar_select %p264, %s22, 1
      %p266 = scmp.lt.s32.totalorder %s263, 7
      %s267 = scalar_select %p266, %s263, 7
      %s268 = smul.addr %s267, 2
      %s269 = smul.addr %s265, 16
      %s270 = sadd.s32 %s268, %s269
      %s271 = smul.addr %s270, 8
      %s272 = scalar_lea.vmem %s0, %s271
      %p273 = pneg %p53
      %p274 = pneg %p50
      %s275 = smul.u32 8, %s23
      %p276 = scmp.lt.s32.totalorder %s22, 1
      %s277 = scalar_select %p276, %s22, 1
      %p278 = scmp.lt.s32.totalorder %s275, 7
      %s279 = scalar_select %p278, %s275, 7
      %s280 = smul.addr %s279, 2
      %s281 = smul.addr %s277, 16
      %s282 = sadd.s32 %s280, %s281
      %s283 = smul.addr %s282, 8
      %s284 = scalar_lea.vmem %s1, %s283
      %p285 = pneg %p81
      %p286 = pneg %p78
      %p287 = pneg %p102
      %p288 = pneg %p99
      %p289 = pneg %p123
      %p290 = pneg %p120
      %p291 = pneg %p144
      %p292 = pneg %p141
      %p293 = pneg %p172
      %p294 = pneg %p169
      %s295 = smul.u32 8, %s23
      %p296 = scmp.lt.s32.totalorder %s22, 1
      %s297 = scalar_select %p296, %s22, 1
      %p298 = scmp.lt.s32.totalorder %s295, 7
      %s299 = scalar_select %p298, %s295, 7
      %s300 = smul.addr %s299, 2
      %s301 = smul.addr %s297, 16
      %s302 = sadd.s32 %s300, %s301
      %s303 = smul.addr %s302, 4
      %s304 = scalar_lea.vmem %s5, %s303
      %p305 = pneg %p200
      %p306 = pneg %p197
      %s307 = smul.u32 8, %s23
      %p308 = scmp.lt.s32.totalorder %s22, 1
      %s309 = scalar_select %p308, %s22, 1
      %p310 = scmp.lt.s32.totalorder %s307, 7
      %s311 = scalar_select %p310, %s307, 7
      %s312 = smul.addr %s311, 2
      %s313 = smul.addr %s309, 16
      %s314 = sadd.s32 %s312, %s313
      %s315 = smul.addr %s314, 4
      %s316 = scalar_lea.vmem %s6, %s315
      %s317 = smul.u32 8, %s23
      %p318 = scmp.lt.s32.totalorder %s22, 1
      %s319 = scalar_select %p318, %s22, 1
      %p320 = scmp.lt.s32.totalorder %s317, 7
      %s321 = scalar_select %p320, %s317, 7
      %s322 = smul.addr %s321, 2
      %s323 = smul.addr %s319, 16
      %s324 = sadd.s32 %s322, %s323
      %s325 = smul.addr %s324, 8
      %s326 = scalar_lea.vmem %s0, %s325
      %s327 = smul.u32 8, %s23
      %s328 = smul.u32 8, %s23
      %p329 = scmp.lt.s32.totalorder %s22, 1
      %s330 = scalar_select %p329, %s22, 1
      %p331 = scmp.lt.s32.totalorder %s328, 7
      %s332 = scalar_select %p331, %s328, 7
      %s333 = smul.addr %s332, 2
      %s334 = smul.addr %s330, 16
      %s335 = sadd.s32 %s333, %s334
      %s336 = smul.addr %s335, 8
      %s337 = scalar_lea.vmem %s1, %s336
      %s338 = smul.u32 8, %s23
      %s339 = smul.u32 8, %s23
      %p340 = scmp.lt.s32.totalorder %s22, 1
      %s341 = scalar_select %p340, %s22, 1
      %p342 = scmp.lt.s32.totalorder %s339, 7
      %s343 = scalar_select %p342, %s339, 7
      %s344 = smul.addr %s343, 2
      %s345 = smul.addr %s341, 16
      %s346 = sadd.s32 %s344, %s345
      %s347 = smul.addr %s346, 4
      %s348 = scalar_lea.vmem %s5, %s347
      %s349 = smul.u32 8, %s23
      %s350 = smul.u32 8, %s23
      %p351 = scmp.lt.s32.totalorder %s22, 1
      %s352 = scalar_select %p351, %s22, 1
      %p353 = scmp.lt.s32.totalorder %s350, 7
      %s354 = scalar_select %p353, %s350, 7
      %s355 = smul.addr %s354, 2
      %s356 = smul.addr %s352, 16
      %s357 = sadd.s32 %s355, %s356
      %s358 = smul.addr %s357, 4
      %s359 = scalar_lea.vmem %s6, %s358
      %s360 = smul.u32 8, %s23
      %v362 = vld [vmem:[%s326] sm:$0xff]
      %v363 = vld [vmem:[%s326 + $0x8] sm:$0xff]
      %v364 = vld [vmem:[%s326 + $0x10] sm:$0xff]
      %v365 = vld [vmem:[%s326 + $0x18] sm:$0xff]
      %v366 = vld [vmem:[%s326 + $0x20] sm:$0xff]
      %v367 = vld [vmem:[%s326 + $0x28] sm:$0xff]
      %v368 = vld [vmem:[%s326 + $0x30] sm:$0xff]
      %v369 = vld [vmem:[%s326 + $0x38] sm:$0xff]
      %v370 = vld [vmem:[%s326 + $0x40] sm:$0xff]
      %v371 = vld [vmem:[%s326 + $0x48] sm:$0xff]
      %v372 = vld [vmem:[%s326 + $0x50] sm:$0xff]
      %v373 = vld [vmem:[%s326 + $0x58] sm:$0xff]
      %v374 = vld [vmem:[%s326 + $0x60] sm:$0xff]
      %v375 = vld [vmem:[%s326 + $0x68] sm:$0xff]
      %v376 = vld [vmem:[%s326 + $0x70] sm:$0xff]
      %v377 = vld [vmem:[%s326 + $0x78] sm:$0xff]
      %v378 = vld [vmem:[%s2] sm:$0x3]
      %vm379 = vcmask 261120
      %v380 = vsel %vm379, %v362, 0.0
      %381 = vadd.xlane.f32.xlu0 %v380
      %v382 = vpop.xlane.xlu0 %381
      %v383 = vsel %vm379, %v363, 0.0
      %384 = vadd.xlane.f32.xlu0 %v383
      %v385 = vpop.xlane.xlu0 %384
      %v386 = vsel %vm379, %v364, 0.0
      %387 = vadd.xlane.f32.xlu0 %v386
      %v388 = vpop.xlane.xlu0 %387
      %v389 = vsel %vm379, %v365, 0.0
      %390 = vadd.xlane.f32.xlu0 %v389
      %v391 = vpop.xlane.xlu0 %390
      %v392 = vsel %vm379, %v366, 0.0
      %393 = vadd.xlane.f32.xlu0 %v392
      %v394 = vpop.xlane.xlu0 %393
      %v395 = vsel %vm379, %v367, 0.0
      %396 = vadd.xlane.f32.xlu0 %v395
      %v397 = vpop.xlane.xlu0 %396
      %v398 = vsel %vm379, %v368, 0.0
      %399 = vadd.xlane.f32.xlu0 %v398
      %v400 = vpop.xlane.xlu0 %399
      %v401 = vsel %vm379, %v369, 0.0
      %402 = vadd.xlane.f32.xlu0 %v401
      %v403 = vpop.xlane.xlu0 %402
      %v404 = vsel %vm379, %v370, 0.0
      %405 = vadd.xlane.f32.xlu0 %v404
      %v406 = vpop.xlane.xlu0 %405
      %v407 = vsel %vm379, %v371, 0.0
      %408 = vadd.xlane.f32.xlu0 %v407
      %v409 = vpop.xlane.xlu0 %408
      %v410 = vsel %vm379, %v372, 0.0
      %411 = vadd.xlane.f32.xlu0 %v410
      %v412 = vpop.xlane.xlu0 %411
      %v413 = vsel %vm379, %v373, 0.0
      %414 = vadd.xlane.f32.xlu0 %v413
      %v415 = vpop.xlane.xlu0 %414
      %v416 = vsel %vm379, %v374, 0.0
      %417 = vadd.xlane.f32.xlu0 %v416
      %v418 = vpop.xlane.xlu0 %417
      %v419 = vsel %vm379, %v375, 0.0
      %420 = vadd.xlane.f32.xlu0 %v419
      %v421 = vpop.xlane.xlu0 %420
      %v422 = vsel %vm379, %v376, 0.0
      %423 = vadd.xlane.f32.xlu0 %v422
      %v424 = vpop.xlane.xlu0 %423
      %v425 = vsel %vm379, %v377, 0.0
      %426 = vadd.xlane.f32.xlu0 %v425
      %v427 = vpop.xlane.xlu0 %426
      %v428 = vrcp.pop 32.0
      %v429 = vmul.f32 32.0, %v428
      %v430 = vsub.f32 1.0, %v429
      %v431 = vmul.f32 %v428, %v430
      %v432 = vadd.f32 %v428, %v431
      %vm433 = vweird.f32 %v428
      %v434 = vsel %vm433, %v428, %v432
      %v435 = vmul.f32 %v382, %v434
      %v436 = vmul.f32 %v385, %v434
      %v437 = vmul.f32 %v388, %v434
      %v438 = vmul.f32 %v391, %v434
      %v439 = vmul.f32 %v394, %v434
      %v440 = vmul.f32 %v397, %v434
      %v441 = vmul.f32 %v400, %v434
      %v442 = vmul.f32 %v403, %v434
      %v443 = vmul.f32 %v406, %v434
      %v444 = vmul.f32 %v409, %v434
      %v445 = vmul.f32 %v412, %v434
      %v446 = vmul.f32 %v415, %v434
      %v447 = vmul.f32 %v418, %v434
      %v448 = vmul.f32 %v421, %v434
      %v449 = vmul.f32 %v424, %v434
      %v450 = vmul.f32 %v427, %v434
      %v451 = vsub.f32 %v362, %v435
      %v452 = vsub.f32 %v363, %v436
      %v453 = vsub.f32 %v364, %v437
      %v454 = vsub.f32 %v365, %v438
      %v455 = vsub.f32 %v366, %v439
      %v456 = vsub.f32 %v367, %v440
      %v457 = vsub.f32 %v368, %v441
      %v458 = vsub.f32 %v369, %v442
      %v459 = vsub.f32 %v370, %v443
      %v460 = vsub.f32 %v371, %v444
      %v461 = vsub.f32 %v372, %v445
      %v462 = vsub.f32 %v373, %v446
      %v463 = vsub.f32 %v374, %v447
      %v464 = vsub.f32 %v375, %v448
      %v465 = vsub.f32 %v376, %v449
      %v466 = vsub.f32 %v377, %v450
      %v467 = vmul.f32 %v451, %v451
      %v468 = vmul.f32 %v452, %v452
      %v469 = vmul.f32 %v453, %v453
      %v470 = vmul.f32 %v454, %v454
      %v471 = vmul.f32 %v455, %v455
      %v472 = vmul.f32 %v456, %v456
      %v473 = vmul.f32 %v457, %v457
      %v474 = vmul.f32 %v458, %v458
      %v475 = vmul.f32 %v459, %v459
      %v476 = vmul.f32 %v460, %v460
      %v477 = vmul.f32 %v461, %v461
      %v478 = vmul.f32 %v462, %v462
      %v479 = vmul.f32 %v463, %v463
      %v480 = vmul.f32 %v464, %v464
      %v481 = vmul.f32 %v465, %v465
      %v482 = vmul.f32 %v466, %v466
      %v483 = vsel %vm379, %v467, 0.0
      %484 = vadd.xlane.f32.xlu0 %v483
      %v485 = vpop.xlane.xlu0 %484
      %v486 = vsel %vm379, %v468, 0.0
      %487 = vadd.xlane.f32.xlu0 %v486
      %v488 = vpop.xlane.xlu0 %487
      %v489 = vsel %vm379, %v469, 0.0
      %490 = vadd.xlane.f32.xlu0 %v489
      %v491 = vpop.xlane.xlu0 %490
      %v492 = vsel %vm379, %v470, 0.0
      %493 = vadd.xlane.f32.xlu0 %v492
      %v494 = vpop.xlane.xlu0 %493
      %v495 = vsel %vm379, %v471, 0.0
      %496 = vadd.xlane.f32.xlu0 %v495
      %v497 = vpop.xlane.xlu0 %496
      %v498 = vsel %vm379, %v472, 0.0
      %499 = vadd.xlane.f32.xlu0 %v498
      %v500 = vpop.xlane.xlu0 %499
      %v501 = vsel %vm379, %v473, 0.0
      %502 = vadd.xlane.f32.xlu0 %v501
      %v503 = vpop.xlane.xlu0 %502
      %v504 = vsel %vm379, %v474, 0.0
      %505 = vadd.xlane.f32.xlu0 %v504
      %v506 = vpop.xlane.xlu0 %505
      %v507 = vsel %vm379, %v475, 0.0
      %508 = vadd.xlane.f32.xlu0 %v507
      %v509 = vpop.xlane.xlu0 %508
      %v510 = vsel %vm379, %v476, 0.0
      %511 = vadd.xlane.f32.xlu0 %v510
      %v512 = vpop.xlane.xlu0 %511
      %v513 = vsel %vm379, %v477, 0.0
      %514 = vadd.xlane.f32.xlu0 %v513
      %v515 = vpop.xlane.xlu0 %514
      %v516 = vsel %vm379, %v478, 0.0
      %517 = vadd.xlane.f32.xlu0 %v516
      %v518 = vpop.xlane.xlu0 %517
      %v519 = vsel %vm379, %v479, 0.0
      %520 = vadd.xlane.f32.xlu0 %v519
      %v521 = vpop.xlane.xlu0 %520
      %v522 = vsel %vm379, %v480, 0.0
      %523 = vadd.xlane.f32.xlu0 %v522
      %v524 = vpop.xlane.xlu0 %523
      %v525 = vsel %vm379, %v481, 0.0
      %526 = vadd.xlane.f32.xlu0 %v525
      %v527 = vpop.xlane.xlu0 %526
      %v528 = vsel %vm379, %v482, 0.0
      %529 = vadd.xlane.f32.xlu0 %v528
      %v530 = vpop.xlane.xlu0 %529
      %v531 = vmul.f32 %v485, %v434
      %v532 = vmul.f32 %v488, %v434
      %v533 = vmul.f32 %v491, %v434
      %v534 = vmul.f32 %v494, %v434
      %v535 = vmul.f32 %v497, %v434
      %v536 = vmul.f32 %v500, %v434
      %v537 = vmul.f32 %v503, %v434
      %v538 = vmul.f32 %v506, %v434
      %v539 = vmul.f32 %v509, %v434
      %v540 = vmul.f32 %v512, %v434
      %v541 = vmul.f32 %v515, %v434
      %v542 = vmul.f32 %v518, %v434
      %v543 = vmul.f32 %v521, %v434
      %v544 = vmul.f32 %v524, %v434
      %v545 = vmul.f32 %v527, %v434
      %v546 = vmul.f32 %v530, %v434
      %v547 = vadd.f32 %v531, 1e-05
      %v548 = vadd.f32 %v532, 1e-05
      %v549 = vadd.f32 %v533, 1e-05
      %v550 = vadd.f32 %v534, 1e-05
      %v551 = vadd.f32 %v535, 1e-05
      %v552 = vadd.f32 %v536, 1e-05
      %v553 = vadd.f32 %v537, 1e-05
      %v554 = vadd.f32 %v538, 1e-05
      %v555 = vadd.f32 %v539, 1e-05
      %v556 = vadd.f32 %v540, 1e-05
      %v557 = vadd.f32 %v541, 1e-05
      %v558 = vadd.f32 %v542, 1e-05
      %v559 = vadd.f32 %v543, 1e-05
      %v560 = vadd.f32 %v544, 1e-05
      %v561 = vadd.f32 %v545, 1e-05
      %v562 = vadd.f32 %v546, 1e-05
      %v563 = vrsqrt.pop %v547
      %v564 = vmul.f32 %v563, %v547
      %v565 = vmul.f32 %v564, %v563
      %v566 = vmul.f32 0.5, %v565
      %v567 = vsub.f32 1.5, %v566
      %v568 = vmul.f32 %v563, %v567
      %vm569 = vweird.f32 %v547
      %vm570 = vweird.f32 %v563
      %vm571 = vmor %vm569, %vm570
      %v572 = vsel %vm571, %v563, %v568
      %v573 = vrsqrt.pop %v548
      %v574 = vmul.f32 %v573, %v548
      %v575 = vmul.f32 %v574, %v573
      %v576 = vmul.f32 0.5, %v575
      %v577 = vsub.f32 1.5, %v576
      %v578 = vmul.f32 %v573, %v577
      %vm579 = vweird.f32 %v548
      %vm580 = vweird.f32 %v573
      %vm581 = vmor %vm579, %vm580
      %v582 = vsel %vm581, %v573, %v578
      %v583 = vrsqrt.pop %v549
      %v584 = vmul.f32 %v583, %v549
      %v585 = vmul.f32 %v584, %v583
      %v586 = vmul.f32 0.5, %v585
      %v587 = vsub.f32 1.5, %v586
      %v588 = vmul.f32 %v583, %v587
      %vm589 = vweird.f32 %v549
      %vm590 = vweird.f32 %v583
      %vm591 = vmor %vm589, %vm590
      %v592 = vsel %vm591, %v583, %v588
      %v593 = vrsqrt.pop %v550
      %v594 = vmul.f32 %v593, %v550
      %v595 = vmul.f32 %v594, %v593
      %v596 = vmul.f32 0.5, %v595
      %v597 = vsub.f32 1.5, %v596
      %v598 = vmul.f32 %v593, %v597
      %vm599 = vweird.f32 %v550
      %vm600 = vweird.f32 %v593
      %vm601 = vmor %vm599, %vm600
      %v602 = vsel %vm601, %v593, %v598
      %v603 = vrsqrt.pop %v551
      %v604 = vmul.f32 %v603, %v551
      %v605 = vmul.f32 %v604, %v603
      %v606 = vmul.f32 0.5, %v605
      %v607 = vsub.f32 1.5, %v606
      %v608 = vmul.f32 %v603, %v607
      %vm609 = vweird.f32 %v551
      %vm610 = vweird.f32 %v603
      %vm611 = vmor %vm609, %vm610
      %v612 = vsel %vm611, %v603, %v608
      %v613 = vrsqrt.pop %v552
      %v614 = vmul.f32 %v613, %v552
      %v615 = vmul.f32 %v614, %v613
      %v616 = vmul.f32 0.5, %v615
      %v617 = vsub.f32 1.5, %v616
      %v618 = vmul.f32 %v613, %v617
      %vm619 = vweird.f32 %v552
      %vm620 = vweird.f32 %v613
      %vm621 = vmor %vm619, %vm620
      %v622 = vsel %vm621, %v613, %v618
      %v623 = vrsqrt.pop %v553
      %v624 = vmul.f32 %v623, %v553
      %v625 = vmul.f32 %v624, %v623
      %v626 = vmul.f32 0.5, %v625
      %v627 = vsub.f32 1.5, %v626
      %v628 = vmul.f32 %v623, %v627
      %vm629 = vweird.f32 %v553
      %vm630 = vweird.f32 %v623
      %vm631 = vmor %vm629, %vm630
      %v632 = vsel %vm631, %v623, %v628
      %v633 = vrsqrt.pop %v554
      %v634 = vmul.f32 %v633, %v554
      %v635 = vmul.f32 %v634, %v633
      %v636 = vmul.f32 0.5, %v635
      %v637 = vsub.f32 1.5, %v636
      %v638 = vmul.f32 %v633, %v637
      %vm639 = vweird.f32 %v554
      %vm640 = vweird.f32 %v633
      %vm641 = vmor %vm639, %vm640
      %v642 = vsel %vm641, %v633, %v638
      %v643 = vrsqrt.pop %v555
      %v644 = vmul.f32 %v643, %v555
      %v645 = vmul.f32 %v644, %v643
      %v646 = vmul.f32 0.5, %v645
      %v647 = vsub.f32 1.5, %v646
      %v648 = vmul.f32 %v643, %v647
      %vm649 = vweird.f32 %v555
      %vm650 = vweird.f32 %v643
      %vm651 = vmor %vm649, %vm650
      %v652 = vsel %vm651, %v643, %v648
      %v653 = vrsqrt.pop %v556
      %v654 = vmul.f32 %v653, %v556
      %v655 = vmul.f32 %v654, %v653
      %v656 = vmul.f32 0.5, %v655
      %v657 = vsub.f32 1.5, %v656
      %v658 = vmul.f32 %v653, %v657
      %vm659 = vweird.f32 %v556
      %vm660 = vweird.f32 %v653
      %vm661 = vmor %vm659, %vm660
      %v662 = vsel %vm661, %v653, %v658
      %v663 = vrsqrt.pop %v557
      %v664 = vmul.f32 %v663, %v557
      %v665 = vmul.f32 %v664, %v663
      %v666 = vmul.f32 0.5, %v665
      %v667 = vsub.f32 1.5, %v666
      %v668 = vmul.f32 %v663, %v667
      %vm669 = vweird.f32 %v557
      %vm670 = vweird.f32 %v663
      %vm671 = vmor %vm669, %vm670
      %v672 = vsel %vm671, %v663, %v668
      %v673 = vrsqrt.pop %v558
      %v674 = vmul.f32 %v673, %v558
      %v675 = vmul.f32 %v674, %v673
      %v676 = vmul.f32 0.5, %v675
      %v677 = vsub.f32 1.5, %v676
      %v678 = vmul.f32 %v673, %v677
      %vm679 = vweird.f32 %v558
      %vm680 = vweird.f32 %v673
      %vm681 = vmor %vm679, %vm680
      %v682 = vsel %vm681, %v673, %v678
      %v683 = vrsqrt.pop %v559
      %v684 = vmul.f32 %v683, %v559
      %v685 = vmul.f32 %v684, %v683
      %v686 = vmul.f32 0.5, %v685
      %v687 = vsub.f32 1.5, %v686
      %v688 = vmul.f32 %v683, %v687
      %vm689 = vweird.f32 %v559
      %vm690 = vweird.f32 %v683
      %vm691 = vmor %vm689, %vm690
      %v692 = vsel %vm691, %v683, %v688
      %v693 = vrsqrt.pop %v560
      %v694 = vmul.f32 %v693, %v560
      %v695 = vmul.f32 %v694, %v693
      %v696 = vmul.f32 0.5, %v695
      %v697 = vsub.f32 1.5, %v696
      %v698 = vmul.f32 %v693, %v697
      %vm699 = vweird.f32 %v560
      %vm700 = vweird.f32 %v693
      %vm701 = vmor %vm699, %vm700
      %v702 = vsel %vm701, %v693, %v698
      %v703 = vrsqrt.pop %v561
      %v704 = vmul.f32 %v703, %v561
      %v705 = vmul.f32 %v704, %v703
      %v706 = vmul.f32 0.5, %v705
      %v707 = vsub.f32 1.5, %v706
      %v708 = vmul.f32 %v703, %v707
      %vm709 = vweird.f32 %v561
      %vm710 = vweird.f32 %v703
      %vm711 = vmor %vm709, %vm710
      %v712 = vsel %vm711, %v703, %v708
      %v713 = vrsqrt.pop %v562
      %v714 = vmul.f32 %v713, %v562
      %v715 = vmul.f32 %v714, %v713
      %v716 = vmul.f32 0.5, %v715
      %v717 = vsub.f32 1.5, %v716
      %v718 = vmul.f32 %v713, %v717
      %vm719 = vweird.f32 %v562
      %vm720 = vweird.f32 %v713
      %vm721 = vmor %vm719, %vm720
      %v722 = vsel %vm721, %v713, %v718
      %v723 = vmul.f32 %v451, %v572
      %v724 = vmul.f32 %v452, %v582
      %v725 = vmul.f32 %v453, %v592
      %v726 = vmul.f32 %v454, %v602
      %v727 = vmul.f32 %v455, %v612
      %v728 = vmul.f32 %v456, %v622
      %v729 = vmul.f32 %v457, %v632
      %v730 = vmul.f32 %v458, %v642
      %v731 = vmul.f32 %v459, %v652
      %v732 = vmul.f32 %v460, %v662
      %v733 = vmul.f32 %v461, %v672
      %v734 = vmul.f32 %v462, %v682
      %v735 = vmul.f32 %v463, %v692
      %v736 = vmul.f32 %v464, %v702
      %v737 = vmul.f32 %v465, %v712
      %v738 = vmul.f32 %v466, %v722
      %v739 = vperm.slane %v378, 0
      %v740 = vmul.f32 %v723, %v739
      %v741 = vmul.f32 %v724, %v739
      %v742 = vmul.f32 %v725, %v739
      %v743 = vmul.f32 %v726, %v739
      %v744 = vmul.f32 %v727, %v739
      %v745 = vmul.f32 %v728, %v739
      %v746 = vmul.f32 %v729, %v739
      %v747 = vmul.f32 %v730, %v739
      %v748 = vmul.f32 %v731, %v739
      %v749 = vmul.f32 %v732, %v739
      %v750 = vmul.f32 %v733, %v739
      %v751 = vmul.f32 %v734, %v739
      %v752 = vmul.f32 %v735, %v739
      %v753 = vmul.f32 %v736, %v739
      %v754 = vmul.f32 %v737, %v739
      %v755 = vmul.f32 %v738, %v739
      %v756 = vperm.slane %v378, 1
      %v757 = vadd.f32 %v740, %v756
      %v758 = vadd.f32 %v741, %v756
      %v759 = vadd.f32 %v742, %v756
      %v760 = vadd.f32 %v743, %v756
      %v761 = vadd.f32 %v744, %v756
      %v762 = vadd.f32 %v745, %v756
      %v763 = vadd.f32 %v746, %v756
      %v764 = vadd.f32 %v747, %v756
      %v765 = vadd.f32 %v748, %v756
      %v766 = vadd.f32 %v749, %v756
      %v767 = vadd.f32 %v750, %v756
      %v768 = vadd.f32 %v751, %v756
      %v769 = vadd.f32 %v752, %v756
      %v770 = vadd.f32 %v753, %v756
      %v771 = vadd.f32 %v754, %v756
      %v772 = vadd.f32 %v755, %v756
      %v773 = vld [vmem:[%s337] sm:$0xff]
      %v774 = vld [vmem:[%s337 + $0x8] sm:$0xff]
      %v775 = vld [vmem:[%s337 + $0x10] sm:$0xff]
      %v776 = vld [vmem:[%s337 + $0x18] sm:$0xff]
      %v777 = vld [vmem:[%s337 + $0x20] sm:$0xff]
      %v778 = vld [vmem:[%s337 + $0x28] sm:$0xff]
      %v779 = vld [vmem:[%s337 + $0x30] sm:$0xff]
      %v780 = vld [vmem:[%s337 + $0x38] sm:$0xff]
      %v781 = vld [vmem:[%s337 + $0x40] sm:$0xff]
      %v782 = vld [vmem:[%s337 + $0x48] sm:$0xff]
      %v783 = vld [vmem:[%s337 + $0x50] sm:$0xff]
      %v784 = vld [vmem:[%s337 + $0x58] sm:$0xff]
      %v785 = vld [vmem:[%s337 + $0x60] sm:$0xff]
      %v786 = vld [vmem:[%s337 + $0x68] sm:$0xff]
      %v787 = vld [vmem:[%s337 + $0x70] sm:$0xff]
      %v788 = vld [vmem:[%s337 + $0x78] sm:$0xff]
      %v789 = vpack.c.bf16 %v758, %v757
      %v790 = vpack.c.bf16 %v760, %v759
      %v791 = vpack.c.bf16 %v762, %v761
      %v792 = vpack.c.bf16 %v764, %v763
      %v793 = vpack.c.bf16 %v766, %v765
      %v794 = vpack.c.bf16 %v768, %v767
      %v795 = vpack.c.bf16 %v770, %v769
      %v796 = vpack.c.bf16 %v772, %v771
      %v797 = vld [vmem:[%s3] sm:$0xf]
      %v798 = vld [vmem:[%s3 + $0x4] sm:$0xf]
      %v799 = vld [vmem:[%s3 + $0x8] sm:$0xf]
      %v800 = vld [vmem:[%s3 + $0xc] sm:$0xf]
      %v801 = vld [vmem:[%s4] sm:$0x1]
      %v803 = vperm.slane %v801, 0
      %v809 = vunpack.c.l.b16 %v797
      %v810 = vunpack.c.l.b16 %v798
      %v811 = vunpack.c.l.b16 %v799
      %v812 = vunpack.c.l.b16 %v800
      %v813 = vpack.c.b16 %v810, %v809
      %v814 = vpack.c.b16 %v812, %v811
      %v818 = vsel %vm379, %v789, 0
      %v821 = vsel %vm379, %v790, 0
      %v824 = vsel %vm379, %v791, 0
      %v827 = vsel %vm379, %v792, 0
      %v830 = vsel %vm379, %v793, 0
      %v833 = vsel %vm379, %v794, 0
      %v836 = vsel %vm379, %v795, 0
      %v839 = vsel %vm379, %v796, 0
      %841 = vmatpush.bf16.msra.mxu0 0
      %842 = vmatpush.bf16.msra.mxu0 0
      %843 = vmatpush.bf16.msra.mxu0 0
      %844 = vmatpush.bf16.msra.mxu0 0
      %845 = vmatpush.bf16.msra.mxu0 0
      %846 = vmatpush.bf16.msra.mxu0 0
      %847 = vmatpush.bf16.msra.mxu0 %v814
      %848 = vmatpush.bf16.msra.mxu0 %v813
      %849 = vmatmul.bf16.gmra.mxu0 %v818
      %v850 = vpop.f32.mrf.mxu0
      %v851 = vadd.f32 %v803, %v850
      %v852 = vpop.f32.mrf.mxu0
      %v853 = vadd.f32 %v803, %v852
      %854 = vmatmul.bf16.gmra.mxu0 %v821
      %v855 = vpop.f32.mrf.mxu0
      %v856 = vadd.f32 %v803, %v855
      %v857 = vpop.f32.mrf.mxu0
      %v858 = vadd.f32 %v803, %v857
      %859 = vmatmul.bf16.gmra.mxu0 %v824
      %v860 = vpop.f32.mrf.mxu0
      %v861 = vadd.f32 %v803, %v860
      %v862 = vpop.f32.mrf.mxu0
      %v863 = vadd.f32 %v803, %v862
      %864 = vmatmul.bf16.gmra.mxu0 %v827
      %v865 = vpop.f32.mrf.mxu0
      %v866 = vadd.f32 %v803, %v865
      %v867 = vpop.f32.mrf.mxu0
      %v868 = vadd.f32 %v803, %v867
      %869 = vmatmul.bf16.gmra.mxu0 %v830
      %v870 = vpop.f32.mrf.mxu0
      %v871 = vadd.f32 %v803, %v870
      %v872 = vpop.f32.mrf.mxu0
      %v873 = vadd.f32 %v803, %v872
      %874 = vmatmul.bf16.gmra.mxu0 %v833
      %v875 = vpop.f32.mrf.mxu0
      %v876 = vadd.f32 %v803, %v875
      %v877 = vpop.f32.mrf.mxu0
      %v878 = vadd.f32 %v803, %v877
      %879 = vmatmul.bf16.gmra.mxu0 %v836
      %v880 = vpop.f32.mrf.mxu0
      %v881 = vadd.f32 %v803, %v880
      %v882 = vpop.f32.mrf.mxu0
      %v883 = vadd.f32 %v803, %v882
      %884 = vmatmul.bf16.gmra.mxu0 %v839
      %v885 = vpop.f32.mrf.mxu0
      %v886 = vadd.f32 %v803, %v885
      %v887 = vpop.f32.mrf.mxu0
      %v888 = vadd.f32 %v803, %v887
      %889 = vdwg.mxu0
      %891 = vset.pattern.permute.xlu0 0
      %892 = vperm.xlu0 %891, %v773
      %v893 = vpop.permute.xlu0 %892
      %896 = vset.pattern.permute.xlu0 0
      %897 = vperm.xlu0 %896, %v774
      %v898 = vpop.permute.xlu0 %897
      %901 = vset.pattern.permute.xlu0 0
      %902 = vperm.xlu0 %901, %v775
      %v903 = vpop.permute.xlu0 %902
      %906 = vset.pattern.permute.xlu0 0
      %907 = vperm.xlu0 %906, %v776
      %v908 = vpop.permute.xlu0 %907
      %911 = vset.pattern.permute.xlu0 0
      %912 = vperm.xlu0 %911, %v777
      %v913 = vpop.permute.xlu0 %912
      %916 = vset.pattern.permute.xlu0 0
      %917 = vperm.xlu0 %916, %v778
      %v918 = vpop.permute.xlu0 %917
      %921 = vset.pattern.permute.xlu0 0
      %922 = vperm.xlu0 %921, %v779
      %v923 = vpop.permute.xlu0 %922
      %926 = vset.pattern.permute.xlu0 0
      %927 = vperm.xlu0 %926, %v780
      %v928 = vpop.permute.xlu0 %927
      %931 = vset.pattern.permute.xlu0 0
      %932 = vperm.xlu0 %931, %v781
      %v933 = vpop.permute.xlu0 %932
      %936 = vset.pattern.permute.xlu0 0
      %937 = vperm.xlu0 %936, %v782
      %v938 = vpop.permute.xlu0 %937
      %941 = vset.pattern.permute.xlu0 0
      %942 = vperm.xlu0 %941, %v783
      %v943 = vpop.permute.xlu0 %942
      %946 = vset.pattern.permute.xlu0 0
      %947 = vperm.xlu0 %946, %v784
      %v948 = vpop.permute.xlu0 %947
      %951 = vset.pattern.permute.xlu0 0
      %952 = vperm.xlu0 %951, %v785
      %v953 = vpop.permute.xlu0 %952
      %956 = vset.pattern.permute.xlu0 0
      %957 = vperm.xlu0 %956, %v786
      %v958 = vpop.permute.xlu0 %957
      %961 = vset.pattern.permute.xlu0 0
      %962 = vperm.xlu0 %961, %v787
      %v963 = vpop.permute.xlu0 %962
      %966 = vset.pattern.permute.xlu0 0
      %967 = vperm.xlu0 %966, %v788
      %v968 = vpop.permute.xlu0 %967
      %v970 = vmul.f32 %v851, %v893
      %v971 = vmul.f32 %v853, %v898
      %v972 = vmul.f32 %v856, %v903
      %v973 = vmul.f32 %v858, %v908
      %v974 = vmul.f32 %v861, %v913
      %v975 = vmul.f32 %v863, %v918
      %v976 = vmul.f32 %v866, %v923
      %v977 = vmul.f32 %v868, %v928
      %v978 = vmul.f32 %v871, %v933
      %v979 = vmul.f32 %v873, %v938
      %v980 = vmul.f32 %v876, %v943
      %v981 = vmul.f32 %v878, %v948
      %v982 = vmul.f32 %v881, %v953
      %v983 = vmul.f32 %v883, %v958
      %v984 = vmul.f32 %v886, %v963
      %v985 = vmul.f32 %v888, %v968
      %v986 = vpack.c.bf16 %v970, %v970
      %v987 = vpack.c.bf16 %v971, %v971
      %v988 = vpack.c.bf16 %v972, %v972
      %v989 = vpack.c.bf16 %v973, %v973
      %v990 = vpack.c.bf16 %v974, %v974
      %v991 = vpack.c.bf16 %v975, %v975
      %v992 = vpack.c.bf16 %v976, %v976
      %v993 = vpack.c.bf16 %v977, %v977
      %v994 = vpack.c.bf16 %v978, %v978
      %v995 = vpack.c.bf16 %v979, %v979
      %v996 = vpack.c.bf16 %v980, %v980
      %v997 = vpack.c.bf16 %v981, %v981
      %v998 = vpack.c.bf16 %v982, %v982
      %v999 = vpack.c.bf16 %v983, %v983
      %v1000 = vpack.c.bf16 %v984, %v984
      %v1001 = vpack.c.bf16 %v985, %v985
      %vm1002 = vcmask 60416
      %1003 = vst.msk [vmem:[%s348] sm:$0xf] %vm1002, %v986
      %1004 = vst.msk [vmem:[%s348 + $0x4] sm:$0xf] %vm1002, %v987
      %1005 = vst.msk [vmem:[%s348 + $0x8] sm:$0xf] %vm1002, %v988
      %1006 = vst.msk [vmem:[%s348 + $0xc] sm:$0xf] %vm1002, %v989
      %1007 = vst.msk [vmem:[%s348 + $0x10] sm:$0xf] %vm1002, %v990
      %1008 = vst.msk [vmem:[%s348 + $0x14] sm:$0xf] %vm1002, %v991
      %1009 = vst.msk [vmem:[%s348 + $0x18] sm:$0xf] %vm1002, %v992
      %1010 = vst.msk [vmem:[%s348 + $0x1c] sm:$0xf] %vm1002, %v993
      %1011 = vst.msk [vmem:[%s348 + $0x20] sm:$0xf] %vm1002, %v994
      %1012 = vst.msk [vmem:[%s348 + $0x24] sm:$0xf] %vm1002, %v995
      %1013 = vst.msk [vmem:[%s348 + $0x28] sm:$0xf] %vm1002, %v996
      %1014 = vst.msk [vmem:[%s348 + $0x2c] sm:$0xf] %vm1002, %v997
      %1015 = vst.msk [vmem:[%s348 + $0x30] sm:$0xf] %vm1002, %v998
      %1016 = vst.msk [vmem:[%s348 + $0x34] sm:$0xf] %vm1002, %v999
      %1017 = vst.msk [vmem:[%s348 + $0x38] sm:$0xf] %vm1002, %v1000
      %1018 = vst.msk [vmem:[%s348 + $0x3c] sm:$0xf] %vm1002, %v1001
      %1035 = vrot.lane.b32.xlu0 %v986, 120
      %v1036 = vpop.permute.xlu0 %1035
      %1037 = vrot.lane.b32.xlu0 %v987, 120
      %v1038 = vpop.permute.xlu0 %1037
      %1039 = vrot.lane.b32.xlu0 %v988, 120
      %v1040 = vpop.permute.xlu0 %1039
      %1041 = vrot.lane.b32.xlu0 %v989, 120
      %v1042 = vpop.permute.xlu0 %1041
      %1043 = vrot.lane.b32.xlu0 %v990, 120
      %v1044 = vpop.permute.xlu0 %1043
      %1045 = vrot.lane.b32.xlu0 %v991, 120
      %v1046 = vpop.permute.xlu0 %1045
      %1047 = vrot.lane.b32.xlu0 %v992, 120
      %v1048 = vpop.permute.xlu0 %1047
      %1049 = vrot.lane.b32.xlu0 %v993, 120
      %v1050 = vpop.permute.xlu0 %1049
      %1051 = vrot.lane.b32.xlu0 %v994, 120
      %v1052 = vpop.permute.xlu0 %1051
      %1053 = vrot.lane.b32.xlu0 %v995, 120
      %v1054 = vpop.permute.xlu0 %1053
      %1055 = vrot.lane.b32.xlu0 %v996, 120
      %v1056 = vpop.permute.xlu0 %1055
      %1057 = vrot.lane.b32.xlu0 %v997, 120
      %v1058 = vpop.permute.xlu0 %1057
      %1059 = vrot.lane.b32.xlu0 %v998, 120
      %v1060 = vpop.permute.xlu0 %1059
      %1061 = vrot.lane.b32.xlu0 %v999, 120
      %v1062 = vpop.permute.xlu0 %1061
      %1063 = vrot.lane.b32.xlu0 %v1000, 120
      %v1064 = vpop.permute.xlu0 %1063
      %1065 = vrot.lane.b32.xlu0 %v1001, 120
      %v1066 = vpop.permute.xlu0 %1065
      %1083 = vst.msk [vmem:[%s359] sm:$0xf] %vm1002, %v1036
      %1084 = vst.msk [vmem:[%s359 + $0x4] sm:$0xf] %vm1002, %v1038
      %1085 = vst.msk [vmem:[%s359 + $0x8] sm:$0xf] %vm1002, %v1040
      %1086 = vst.msk [vmem:[%s359 + $0xc] sm:$0xf] %vm1002, %v1042
      %1087 = vst.msk [vmem:[%s359 + $0x10] sm:$0xf] %vm1002, %v1044
      %1088 = vst.msk [vmem:[%s359 + $0x14] sm:$0xf] %vm1002, %v1046
      %1089 = vst.msk [vmem:[%s359 + $0x18] sm:$0xf] %vm1002, %v1048
      %1090 = vst.msk [vmem:[%s359 + $0x1c] sm:$0xf] %vm1002, %v1050
      %1091 = vst.msk [vmem:[%s359 + $0x20] sm:$0xf] %vm1002, %v1052
      %1092 = vst.msk [vmem:[%s359 + $0x24] sm:$0xf] %vm1002, %v1054
      %1093 = vst.msk [vmem:[%s359 + $0x28] sm:$0xf] %vm1002, %v1056
      %1094 = vst.msk [vmem:[%s359 + $0x2c] sm:$0xf] %vm1002, %v1058
      %1095 = vst.msk [vmem:[%s359 + $0x30] sm:$0xf] %vm1002, %v1060
      %1096 = vst.msk [vmem:[%s359 + $0x34] sm:$0xf] %vm1002, %v1062
      %1097 = vst.msk [vmem:[%s359 + $0x38] sm:$0xf] %vm1002, %v1064
      %1098 = vst.msk [vmem:[%s359 + $0x3c] sm:$0xf] %vm1002, %v1066
      %s1099 = smul.u32 8, %s23
      %p1100 = scmp.lt.s32.totalorder %s22, 1
      %s1101 = scalar_select %p1100, %s22, 1
      %p1102 = scmp.lt.s32.totalorder %s1099, 7
      %s1103 = scalar_select %p1102, %s1099, 7
      %s1104 = smul.addr %s1103, 2
      %s1105 = smul.addr %s1101, 16
      %s1106 = sadd.s32 %s1104, %s1105
      %s1107 = smul.addr %s1106, 4
      %s1108 = scalar_lea.vmem %s5, %s1107
      %s1109 = smul.u32 8, %s23
      %p1110 = scmp.lt.s32.totalorder %s22, 1
      %s1111 = scalar_select %p1110, %s22, 1
      %p1112 = scmp.lt.s32.totalorder %s1109, 7
      %s1113 = scalar_select %p1112, %s1109, 7
      %s1114 = smul.addr %s1113, 2
      %s1115 = smul.addr %s1111, 16
      %s1116 = sadd.s32 %s1114, %s1115
      %s1117 = smul.addr %s1116, 4
      %s1118 = scalar_lea.vmem %s6, %s1117
      // Predicated region
      $region41: #{outer_product_mean.2} parent=39 // pred_check
        %p1119 = pneg %p169
      $region42: #{outer_product_mean.2} parent=39 // pred_check_branch
        %1121 = sbr.rel (%p1119) target = $region44
      $region43: #{outer_product_mean.2} parent=39 // pred_region
        %s1122 = smul.u32 8, %s23
      $region44: #{outer_product_mean.2} parent=39 // pred_fallthru
        _
      // Predicated region
      $region45: #{outer_product_mean.2} parent=39 // pred_check
        %p1123 = pneg %p197
      $region46: #{outer_product_mean.2} parent=39 // pred_check_branch
        %1125 = sbr.rel (%p1123) target = $region48
      $region47: #{outer_product_mean.2} parent=39 // pred_region
        %s1126 = smul.u32 8, %s23
      $region48: #{outer_product_mean.2} parent=39 // pred_fallthru
        _
    $region40: #{outer_product_mean.2} parent=5 // pred_fallthru
      _
    %p1127 = scmp.le.s32.totalorder 2, %s13
    // Predicated region
    $region49: #{outer_product_mean.2} parent=5 // pred_check
      %p1128 = pneg %p1127
    $region50: #{outer_product_mean.2} parent=5 // pred_check_branch
      %1130 = sbr.rel (%p1128) target = $region52
    $region51: #{outer_product_mean.2} parent=5 // pred_region
      %s1131 = ssub.s32 %s13, 2
      // Predicated region
      $region53: #{outer_product_mean.2} parent=51 // pred_check
        %p1132 = pneg %p175
      $region54: #{outer_product_mean.2} parent=51 // pred_check_branch
        %1134 = sbr.rel (%p1132) target = $region56
      $region55: #{outer_product_mean.2} parent=51 // pred_region
        %s1135 = smul.u32 8, %s25
        %p1136 = scmp.lt.s32.totalorder %s24, 1
        %s1137 = scalar_select %p1136, %s24, 1
        %p1138 = scmp.lt.s32.totalorder %s1135, 7
        %s1139 = scalar_select %p1138, %s1135, 7
        %s1140 = smul.addr %s1139, 2
        %s1141 = smul.addr %s1137, 16
        %s1142 = sadd.s32 %s1140, %s1141
        %s1143 = smul.addr %s1142, 4
        %s1144 = scalar_lea.vmem %s5, %s1143
      $region56: #{outer_product_mean.2} parent=51 // pred_fallthru
        _
      // Predicated region
      $region57: #{outer_product_mean.2} parent=51 // pred_check
        %p1145 = pneg %p203
      $region58: #{outer_product_mean.2} parent=51 // pred_check_branch
        %1147 = sbr.rel (%p1145) target = $region60
      $region59: #{outer_product_mean.2} parent=51 // pred_region
        %s1148 = smul.u32 8, %s25
        %p1149 = scmp.lt.s32.totalorder %s24, 1
        %s1150 = scalar_select %p1149, %s24, 1
        %p1151 = scmp.lt.s32.totalorder %s1148, 7
        %s1152 = scalar_select %p1151, %s1148, 7
        %s1153 = smul.addr %s1152, 2
        %s1154 = smul.addr %s1150, 16
        %s1155 = sadd.s32 %s1153, %s1154
        %s1156 = smul.addr %s1155, 4
        %s1157 = scalar_lea.vmem %s6, %s1156
      $region60: #{outer_product_mean.2} parent=51 // pred_fallthru
        _
    $region52: #{outer_product_mean.2} parent=5 // pred_fallthru
      _
  $region6: #{outer_product_mean.2} parent=0 // loop_footer
    %s17 = sadd.s32 1, %s13
  $region7: #{outer_product_mean.2} parent=0 // loop_footer_branch
    %12 = sbr.rel target = $region3
  $region8: #{outer_product_mean.2} parent=0 // loop_exit
    _

// kernel: outer_product_mean.3
$region0: #{outer_product_mean.3}
  #allocation0 [shape = 'u32[]', space=smem, size = 0x4, offset = 0x4, fixed_abs, tag = 'smem constant byte address 0x4 - core index']
  #allocation1 [shape = 'u32[72,128]{1,0:T(1,128)}', space=vmem, size = 0x9000, scoped, tag = 'internal scratch']
  #allocation2 [shape = 'f32[128,128]{1,0:T(8,128)}', space=vmem, size = 0x10000, scoped, tag = 'scratch operand']
  #allocation3 [shape = 'f32[16,16]{1,0:T(8,128)}', space=vmem, size = 0x2000, scoped, tag = 'scratch operand']
  #allocation4 [shape = 'f32[256,64]{1,0:T(8,128)}', space=vmem, size = 0x20000, scoped, tag = 'scratch operand']
  #allocation5 [shape = 'f32[256,1]{1,0:T(8,128)}', space=vmem, size = 0x20000, scoped, tag = 'scratch operand']
  %s0 = inlined_call_operand.vmem [shape: bf16[2,8,16,8], index: 0, kind: input, shape index: {}]
  %s1 = inlined_call_operand.vmem [shape: bf16[2,8,128], index: 1, kind: input, shape index: {}]
  %s2 = inlined_call_operand.vmem [shape: f32[2,16,8], index: 2, kind: input, shape index: {}]
  %s3 = inlined_call_operand.vmem [shape: f32[2,8,16], index: 3, kind: input, shape index: {}]
  %s4 = inlined_call_operand.vmem [shape: bf16[64,32], index: 4, kind: input, shape index: {}]
  %s5 = inlined_call_operand.vmem [shape: f32[1,32], index: 5, kind: input, shape index: {}]
  %s6 = inlined_call_operand.hbm [shape: f32[2,16,16,32], index: 6, kind: output, shape index: {}]
  %s7 = sld [smem:[#allocation0]]
  $region65: #{outer_product_mean.3} parent=0
    _
  %s9 = ssub.s32 1, %s7
  %s10 = scalar_select 0, %s9, %s7
  $region1: #{outer_product_mean.3} parent=0
    #allocation6 [shape = 'u8[262144]{0}', space=vmem, size = 0x40000, scoped, tag = 'output window, operand 0']
    #allocation7 [shape = 's32[2]{0}', space=sflag, size = 0x8, scoped, tag = 'scoped memory for outer_product_mean.3']
    %11 = vsyncpa [#allocation7], 0
    %s12 = scalar_lea.sflag [#allocation7], 1
    %13 = vsyncpa %s12, 0
    loop: start=0, step=1, limit=4
    $region2: #{outer_product_mean.3} parent=1 // loop_pre_header
      _
    $region3: #{outer_product_mean.3} parent=1 // loop_header
      %s15 = sphi 0, %s19
      %p16 = scmp.ge.s32.totalorder %s15, 4
      %s22 = sphi 0, %s48
      %s23 = sphi 0, %s44
      %s24 = sphi 0, %s40
      %s25 = sphi 0, %s36
      %s26 = sphi 0, %s22
      %s27 = sphi 0, %s23
      %s28 = sphi 0, %s24
      %s29 = sphi 0, %s25
      %s30 = sphi 0, %s26
      %s31 = sphi 0, %s27
      %s32 = sphi 0, %s28
      %s33 = sphi 0, %s29
      %s55 = sphi 0, %s57
      %s58 = sphi 0, %s55
      %s59 = sphi 0, %s58
      %s75 = sphi 0, %s59
      %s85 = sphi 0, %s87
      %s88 = sphi 0, %s85
      %s89 = sphi 0, %s88
      %s105 = sphi 0, %s89
      %s115 = sphi 0, %s117
      %s118 = sphi 0, %s115
      %s119 = sphi 0, %s118
      %s135 = sphi 0, %s119
      %s145 = sphi 0, %s147
      %s148 = sphi 0, %s145
      %s149 = sphi 0, %s148
      %s165 = sphi 0, %s149
      %s169 = sphi 0, %s169
      %s171 = sphi 0, %s169
      %s172 = sphi 0, %s171
      %s186 = sphi 0, %s172
      %s190 = sphi 0, %s190
      %s192 = sphi 0, %s190
      %s193 = sphi 0, %s192
      %s207 = sphi 0, %s193
      %s217 = sphi 0, %s219
      %s220 = sphi 0, %s217
      %s221 = sphi 0, %s220
      %s237 = sphi 0, %s221
    $region4: #{outer_product_mean.3} parent=1 // loop_header_branch
      %18 = sbr.rel (%p16) target = $region8
    $region5: #{outer_product_mean.3} parent=1 // loop_body
      %s20 = ssub.s32 %s15, 1
      %s21 = ssub.s32 %s15, 2
      %s34 = sadd.s32 1, %s25
      %p35 = scmp.ge.s32.totalorder %s34, 1
      %s36 = scalar_select %p35, 0, %s34
      %s37 = sadd.s32 1, %s24
      %s38 = scalar_select %p35, %s37, %s24
      %p39 = scmp.ge.s32.totalorder %s38, 1
      %s40 = scalar_select %p39, 0, %s38
      %s41 = sadd.s32 1, %s23
      %s42 = scalar_select %p39, %s41, %s23
      %p43 = scmp.ge.s32.totalorder %s42, 1
      %s44 = scalar_select %p43, 0, %s42
      %s45 = sadd.s32 1, %s22
      %s46 = scalar_select %p43, %s45, %s22
      %p47 = scmp.ge.s32.totalorder %s46, 2
      %s48 = scalar_select %p47, 0, %s46
      %s49 = ssub.s32 %s22, %s48
      %s50 = ssub.s32 %s24, %s40
      %s51 = sor.u32 %s49, %s50
      %s52 = ssub.s32 %s25, %s36
      %s53 = sor.u32 %s51, %s52
      %p54 = scmp.eq.s32.totalorder %s53, 0
      %s56 = sadd.s32 %s55, 1
      %s57 = scalar_select %p54, %s55, %s56
      %p60 = pneg %p54
      %p61 = scmp.eq.s32.totalorder %s15, 1
      %p62 = por %p60, %p61
      %p63 = scmp.ne.s32.totalorder %s55, %s58
      %p64 = scmp.eq.s32.totalorder %s15, 0
      %p65 = por %p63, %p64
      %p66 = scmp.ne.s32.totalorder %s55, %s58
      %p67 = scmp.eq.s32.totalorder %s20, 1
      %p68 = por %p66, %p67
      %p69 = scmp.ne.s32.totalorder %s58, %s59
      %p70 = scmp.eq.s32.totalorder %s20, 0
      %p71 = por %p69, %p70
      %p72 = scmp.ne.s32.totalorder %s58, %s59
      %p73 = scmp.eq.s32.totalorder %s21, 1
      %p74 = por %p72, %p73
      %p76 = scmp.ne.s32.totalorder %s59, %s75
      %p77 = scmp.eq.s32.totalorder %s21, 0
      %p78 = por %p76, %p77
      %s79 = ssub.s32 %s22, %s48
      %s80 = ssub.s32 %s25, %s36
      %s81 = sor.u32 %s79, %s80
      %s82 = ssub.s32 %s23, %s44
      %s83 = sor.u32 %s81, %s82
      %p84 = scmp.eq.s32.totalorder %s83, 0
      %s86 = sadd.s32 %s85, 1
      %s87 = scalar_select %p84, %s85, %s86
      %p90 = pneg %p84
      %p91 = scmp.eq.s32.totalorder %s15, 1
      %p92 = por %p90, %p91
      %p93 = scmp.ne.s32.totalorder %s85, %s88
      %p94 = scmp.eq.s32.totalorder %s15, 0
      %p95 = por %p93, %p94
      %p96 = scmp.ne.s32.totalorder %s85, %s88
      %p97 = scmp.eq.s32.totalorder %s20, 1
      %p98 = por %p96, %p97
      %p99 = scmp.ne.s32.totalorder %s88, %s89
      %p100 = scmp.eq.s32.totalorder %s20, 0
      %p101 = por %p99, %p100
      %p102 = scmp.ne.s32.totalorder %s88, %s89
      %p103 = scmp.eq.s32.totalorder %s21, 1
      %p104 = por %p102, %p103
      %p106 = scmp.ne.s32.totalorder %s89, %s105
      %p107 = scmp.eq.s32.totalorder %s21, 0
      %p108 = por %p106, %p107
      %s109 = ssub.s32 %s22, %s48
      %s110 = ssub.s32 %s24, %s40
      %s111 = sor.u32 %s109, %s110
      %s112 = ssub.s32 %s25, %s36
      %s113 = sor.u32 %s111, %s112
      %p114 = scmp.eq.s32.totalorder %s113, 0
      %s116 = sadd.s32 %s115, 1
      %s117 = scalar_select %p114, %s115, %s116
      %p120 = pneg %p114
      %p121 = scmp.eq.s32.totalorder %s15, 1
      %p122 = por %p120, %p121
      %p123 = scmp.ne.s32.totalorder %s115, %s118
      %p124 = scmp.eq.s32.totalorder %s15, 0
      %p125 = por %p123, %p124
      %p126 = scmp.ne.s32.totalorder %s115, %s118
      %p127 = scmp.eq.s32.totalorder %s20, 1
      %p128 = por %p126, %p127
      %p129 = scmp.ne.s32.totalorder %s118, %s119
      %p130 = scmp.eq.s32.totalorder %s20, 0
      %p131 = por %p129, %p130
      %p132 = scmp.ne.s32.totalorder %s118, %s119
      %p133 = scmp.eq.s32.totalorder %s21, 1
      %p134 = por %p132, %p133
      %p136 = scmp.ne.s32.totalorder %s119, %s135
      %p137 = scmp.eq.s32.totalorder %s21, 0
      %p138 = por %p136, %p137
      %s139 = ssub.s32 %s22, %s48
      %s140 = ssub.s32 %s25, %s36
      %s141 = sor.u32 %s139, %s140
      %s142 = ssub.s32 %s23, %s44
      %s143 = sor.u32 %s141, %s142
      %p144 = scmp.eq.s32.totalorder %s143, 0
      %s146 = sadd.s32 %s145, 1
      %s147 = scalar_select %p144, %s145, %s146
      %p150 = pneg %p144
      %p151 = scmp.eq.s32.totalorder %s15, 1
      %p152 = por %p150, %p151
      %p153 = scmp.ne.s32.totalorder %s145, %s148
      %p154 = scmp.eq.s32.totalorder %s15, 0
      %p155 = por %p153, %p154
      %p156 = scmp.ne.s32.totalorder %s145, %s148
      %p157 = scmp.eq.s32.totalorder %s20, 1
      %p158 = por %p156, %p157
      %p159 = scmp.ne.s32.totalorder %s148, %s149
      %p160 = scmp.eq.s32.totalorder %s20, 0
      %p161 = por %p159, %p160
      %p162 = scmp.ne.s32.totalorder %s148, %s149
      %p163 = scmp.eq.s32.totalorder %s21, 1
      %p164 = por %p162, %p163
      %p166 = scmp.ne.s32.totalorder %s149, %s165
      %p167 = scmp.eq.s32.totalorder %s21, 0
      %p168 = por %p166, %p167
      %s170 = sadd.s32 %s169, 1
      %p173 = scmp.eq.s32.totalorder %s15, 1
      %p174 = scmp.ne.s32.totalorder %s169, %s171
      %p175 = scmp.eq.s32.totalorder %s15, 0
      %p176 = por %p174, %p175
      %p177 = scmp.ne.s32.totalorder %s169, %s171
      %p178 = scmp.eq.s32.totalorder %s20, 1
      %p179 = por %p177, %p178
      %p180 = scmp.ne.s32.totalorder %s171, %s172
      %p181 = scmp.eq.s32.totalorder %s20, 0
      %p182 = por %p180, %p181
      %p183 = scmp.ne.s32.totalorder %s171, %s172
      %p184 = scmp.eq.s32.totalorder %s21, 1
      %p185 = por %p183, %p184
      %p187 = scmp.ne.s32.totalorder %s172, %s186
      %p188 = scmp.eq.s32.totalorder %s21, 0
      %p189 = por %p187, %p188
      %s191 = sadd.s32 %s190, 1
      %p194 = scmp.eq.s32.totalorder %s15, 1
      %p195 = scmp.ne.s32.totalorder %s190, %s192
      %p196 = scmp.eq.s32.totalorder %s15, 0
      %p197 = por %p195, %p196
      %p198 = scmp.ne.s32.totalorder %s190, %s192
      %p199 = scmp.eq.s32.totalorder %s20, 1
      %p200 = por %p198, %p199
      %p201 = scmp.ne.s32.totalorder %s192, %s193
      %p202 = scmp.eq.s32.totalorder %s20, 0
      %p203 = por %p201, %p202
      %p204 = scmp.ne.s32.totalorder %s192, %s193
      %p205 = scmp.eq.s32.totalorder %s21, 1
      %p206 = por %p204, %p205
      %p208 = scmp.ne.s32.totalorder %s193, %s207
      %p209 = scmp.eq.s32.totalorder %s21, 0
      %p210 = por %p208, %p209
      %s211 = ssub.s32 %s22, %s48
      %s212 = ssub.s32 %s23, %s44
      %s213 = sor.u32 %s211, %s212
      %s214 = ssub.s32 %s24, %s40
      %s215 = sor.u32 %s213, %s214
      %p216 = scmp.eq.s32.totalorder %s215, 0
      %s218 = sadd.s32 %s217, 1
      %s219 = scalar_select %p216, %s217, %s218
      %p222 = pneg %p216
      %p223 = scmp.eq.s32.totalorder %s15, 1
      %p224 = por %p222, %p223
      %p225 = scmp.ne.s32.totalorder %s217, %s220
      %p226 = scmp.eq.s32.totalorder %s15, 0
      %p227 = por %p225, %p226
      %p228 = scmp.ne.s32.totalorder %s217, %s220
      %p229 = scmp.eq.s32.totalorder %s20, 1
      %p230 = por %p228, %p229
      %p231 = scmp.ne.s32.totalorder %s220, %s221
      %p232 = scmp.eq.s32.totalorder %s20, 0
      %p233 = por %p231, %p232
      %p234 = scmp.ne.s32.totalorder %s220, %s221
      %p235 = scmp.eq.s32.totalorder %s21, 1
      %p236 = por %p234, %p235
      %p238 = scmp.ne.s32.totalorder %s221, %s237
      %p239 = scmp.eq.s32.totalorder %s21, 0
      %p240 = por %p238, %p239
      %p241 = scmp.le.s32.totalorder 1, %s15
      %p242 = scmp.lt.s32.totalorder %s15, 3
      %p243 = pnand %p241, %p242
      %p244 = pneg %p243
      // Predicated region
      $region9: #{outer_product_mean.3} parent=5 // pred_check
        _
      $region10: #{outer_product_mean.3} parent=5 // pred_check_branch
        %246 = sbr.rel (%p243) target = $region12
      $region11: #{outer_product_mean.3} parent=5 // pred_region
        %s247 = ssub.s32 %s15, 1
        // Predicated region
        $region13: #{outer_product_mean.3} parent=11 // pred_check
          %p248 = pneg %p182
        $region14: #{outer_product_mean.3} parent=11 // pred_check_branch
          %250 = sbr.rel (%p248) target = $region16
        $region15: #{outer_product_mean.3} parent=11 // pred_region
          _
        $region16: #{outer_product_mean.3} parent=11 // pred_fallthru
          _
        // Predicated region
        $region17: #{outer_product_mean.3} parent=11 // pred_check
          %p251 = pneg %p203
        $region18: #{outer_product_mean.3} parent=11 // pred_check_branch
          %253 = sbr.rel (%p251) target = $region20
        $region19: #{outer_product_mean.3} parent=11 // pred_region
          _
        $region20: #{outer_product_mean.3} parent=11 // pred_fallthru
          _
      $region12: #{outer_product_mean.3} parent=5 // pred_fallthru
        _
      %p254 = scmp.lt.s32.totalorder %s15, 2
      // Predicated region
      $region21: #{outer_product_mean.3} parent=5 // pred_check
        %p255 = pneg %p254
      $region22: #{outer_product_mean.3} parent=5 // pred_check_branch
        %257 = sbr.rel (%p255) target = $region24
      $region23: #{outer_product_mean.3} parent=5 // pred_region
        // Predicated region
        $region25: #{outer_product_mean.3} parent=23 // pred_check
          %p258 = pneg %p65
        $region26: #{outer_product_mean.3} parent=23 // pred_check_branch
          %260 = sbr.rel (%p258) target = $region28
        $region27: #{outer_product_mean.3} parent=23 // pred_region
          %s261 = smul.u32 2, %s24
          %p262 = scmp.lt.s32.totalorder %s22, 1
          %s263 = scalar_select %p262, %s22, 1
          %p264 = scmp.lt.s32.totalorder %s261, 1
          %s265 = scalar_select %p264, %s261, 1
          %p266 = scmp.lt.s32.totalorder %s25, 0
          %s267 = scalar_select %p266, %s25, 0
          %s268 = sadd.s32 %s267, %s265
          %s269 = smul.addr %s263, 16
          %s270 = sadd.s32 %s268, %s269
          %s271 = smul.addr %s270, 4
          %s272 = scalar_lea.vmem %s0, %s271
          %s273 = smul.u32 2, %s24
        $region28: #{outer_product_mean.3} parent=23 // pred_fallthru
          _
        // Predicated region
        $region29: #{outer_product_mean.3} parent=23 // pred_check
          %p274 = pneg %p95
        $region30: #{outer_product_mean.3} parent=23 // pred_check_branch
          %276 = sbr.rel (%p274) target = $region32
        $region31: #{outer_product_mean.3} parent=23 // pred_region
          %p277 = scmp.lt.s32.totalorder %s22, 1
          %s278 = scalar_select %p277, %s22, 1
          %p279 = scmp.lt.s32.totalorder %s25, 0
          %s280 = scalar_select %p279, %s25, 0
          %p281 = scmp.lt.s32.totalorder %s23, 0
          %s282 = scalar_select %p281, %s23, 0
          %s283 = sadd.s32 %s282, %s280
          %s284 = sadd.s32 %s283, %s278
          %s285 = smul.addr %s284, 4
          %s286 = scalar_lea.vmem %s1, %s285
        $region32: #{outer_product_mean.3} parent=23 // pred_fallthru
          _
        // Predicated region
        $region33: #{outer_product_mean.3} parent=23 // pred_check
          %p287 = pneg %p125
        $region34: #{outer_product_mean.3} parent=23 // pred_check_branch
          %289 = sbr.rel (%p287) target = $region36
        $region35: #{outer_product_mean.3} parent=23 // pred_region
          %s290 = smul.u32 2, %s24
          %p291 = scmp.lt.s32.totalorder %s22, 1
          %s292 = scalar_select %p291, %s22, 1
          %p293 = scmp.lt.s32.totalorder %s290, 1
          %s294 = scalar_select %p293, %s290, 1
          %p295 = scmp.lt.s32.totalorder %s25, 0
          %s296 = scalar_select %p295, %s25, 0
          %s297 = sadd.s32 %s296, %s294
          %s298 = smul.addr %s292, 2
          %s299 = sadd.s32 %s297, %s298
          %s300 = smul.addr %s299, 8
          %s301 = scalar_lea.vmem %s2, %s300
          %s302 = smul.u32 2, %s24
        $region36: #{outer_product_mean.3} parent=23 // pred_fallthru
          _
        // Predicated region
        $region37: #{outer_product_mean.3} parent=23 // pred_check
          %p303 = pneg %p155
        $region38: #{outer_product_mean.3} parent=23 // pred_check_branch
          %305 = sbr.rel (%p303) target = $region40
        $region39: #{outer_product_mean.3} parent=23 // pred_region
          %p306 = scmp.lt.s32.totalorder %s22, 1
          %s307 = scalar_select %p306, %s22, 1
          %p308 = scmp.lt.s32.totalorder %s25, 0
          %s309 = scalar_select %p308, %s25, 0
          %p310 = scmp.lt.s32.totalorder %s23, 0
          %s311 = scalar_select %p310, %s23, 0
          %s312 = sadd.s32 %s311, %s309
          %s313 = sadd.s32 %s312, %s307
          %s314 = smul.addr %s313, 8
          %s315 = scalar_lea.vmem %s3, %s314
        $region40: #{outer_product_mean.3} parent=23 // pred_fallthru
          _
      $region24: #{outer_product_mean.3} parent=5 // pred_fallthru
        _
      %p316 = scmp.le.s32.totalorder 1, %s15
      %p317 = scmp.lt.s32.totalorder %s15, 3
      %p318 = pnand %p316, %p317
      %p319 = pneg %p318
      // Predicated region
      $region41: #{outer_product_mean.3} parent=5 // pred_check
        _
      $region42: #{outer_product_mean.3} parent=5 // pred_check_branch
        %321 = sbr.rel (%p318) target = $region44
      $region43: #{outer_product_mean.3} parent=5 // pred_region
        %s322 = ssub.s32 %s15, 1
        %s323 = smul.u32 2, %s28
        %p324 = scmp.lt.s32.totalorder %s26, 1
        %s325 = scalar_select %p324, %s26, 1
        %p326 = scmp.lt.s32.totalorder %s323, 1
        %s327 = scalar_select %p326, %s323, 1
        %p328 = scmp.lt.s32.totalorder %s29, 0
        %s329 = scalar_select %p328, %s29, 0
        %s330 = sadd.s32 %s329, %s327
        %s331 = smul.addr %s325, 16
        %s332 = sadd.s32 %s330, %s331
        %s333 = smul.addr %s332, 4
        %s334 = scalar_lea.vmem %s0, %s333
        %p335 = pneg %p71
        %p336 = pneg %p68
        %p337 = scmp.lt.s32.totalorder %s26, 1
        %s338 = scalar_select %p337, %s26, 1
        %p339 = scmp.lt.s32.totalorder %s29, 0
        %s340 = scalar_select %p339, %s29, 0
        %p341 = scmp.lt.s32.totalorder %s27, 0
        %s342 = scalar_select %p341, %s27, 0
        %s343 = sadd.s32 %s342, %s340
        %s344 = sadd.s32 %s343, %s338
        %s345 = smul.addr %s344, 4
        %s346 = scalar_lea.vmem %s1, %s345
        %p347 = pneg %p101
        %p348 = pneg %p98
        %s349 = smul.u32 2, %s28
        %p350 = scmp.lt.s32.totalorder %s26, 1
        %s351 = scalar_select %p350, %s26, 1
        %p352 = scmp.lt.s32.totalorder %s349, 1
        %s353 = scalar_select %p352, %s349, 1
        %p354 = scmp.lt.s32.totalorder %s29, 0
        %s355 = scalar_select %p354, %s29, 0
        %s356 = sadd.s32 %s355, %s353
        %s357 = smul.addr %s351, 2
        %s358 = sadd.s32 %s356, %s357
        %s359 = smul.addr %s358, 8
        %s360 = scalar_lea.vmem %s2, %s359
        %p361 = pneg %p131
        %p362 = pneg %p128
        %p363 = scmp.lt.s32.totalorder %s26, 1
        %s364 = scalar_select %p363, %s26, 1
        %p365 = scmp.lt.s32.totalorder %s29, 0
        %s366 = scalar_select %p365, %s29, 0
        %p367 = scmp.lt.s32.totalorder %s27, 0
        %s368 = scalar_select %p367, %s27, 0
        %s369 = sadd.s32 %s368, %s366
        %s370 = sadd.s32 %s369, %s364
        %s371 = smul.addr %s370, 8
        %s372 = scalar_lea.vmem %s3, %s371
        %p373 = pneg %p161
        %p374 = pneg %p158
        %p375 = pneg %p182
        %p376 = pneg %p179
        %p377 = pneg %p203
        %p378 = pneg %p200
        %p379 = pneg %p233
        %p380 = pneg %p230
        %s381 = sand.u32 %s220, 1
        %s382 = scalar_lea.sflag [#allocation7], %s381
        %s383 = sand.u32 %s220, 1
        %s384 = smul.addr %s383, 256
        %s385 = scalar_lea.vmem [#allocation6], %s384
        %s386 = smul.u32 2, %s28
        %p387 = scmp.lt.s32.totalorder %s26, 1
        %s388 = scalar_select %p387, %s26, 1
        %p389 = scmp.lt.s32.totalorder %s386, 1
        %s390 = scalar_select %p389, %s386, 1
        %p391 = scmp.lt.s32.totalorder %s29, 0
        %s392 = scalar_select %p391, %s29, 0
        %s393 = sadd.s32 %s392, %s390
        %s394 = smul.addr %s388, 16
        %s395 = sadd.s32 %s393, %s394
        %s396 = smul.addr %s395, 4
        %s397 = scalar_lea.vmem %s0, %s396
        %s398 = smul.u32 2, %s28
        %p399 = scmp.lt.s32.totalorder %s26, 1
        %s400 = scalar_select %p399, %s26, 1
        %p401 = scmp.lt.s32.totalorder %s29, 0
        %s402 = scalar_select %p401, %s29, 0
        %p403 = scmp.lt.s32.totalorder %s27, 0
        %s404 = scalar_select %p403, %s27, 0
        %s405 = sadd.s32 %s404, %s402
        %s406 = sadd.s32 %s405, %s400
        %s407 = smul.addr %s406, 4
        %s408 = scalar_lea.vmem %s1, %s407
        %s409 = smul.u32 2, %s28
        %p410 = scmp.lt.s32.totalorder %s26, 1
        %s411 = scalar_select %p410, %s26, 1
        %p412 = scmp.lt.s32.totalorder %s409, 1
        %s413 = scalar_select %p412, %s409, 1
        %p414 = scmp.lt.s32.totalorder %s29, 0
        %s415 = scalar_select %p414, %s29, 0
        %s416 = sadd.s32 %s415, %s413
        %s417 = smul.addr %s411, 2
        %s418 = sadd.s32 %s416, %s417
        %s419 = smul.addr %s418, 8
        %s420 = scalar_lea.vmem %s2, %s419
        %s421 = smul.u32 2, %s28
        %p422 = scmp.lt.s32.totalorder %s26, 1
        %s423 = scalar_select %p422, %s26, 1
        %p424 = scmp.lt.s32.totalorder %s29, 0
        %s425 = scalar_select %p424, %s29, 0
        %p426 = scmp.lt.s32.totalorder %s27, 0
        %s427 = scalar_select %p426, %s27, 0
        %s428 = sadd.s32 %s427, %s425
        %s429 = sadd.s32 %s428, %s423
        %s430 = smul.addr %s429, 8
        %s431 = scalar_lea.vmem %s3, %s430
        %s432 = smul.u32 16, %s27
        %s433 = smul.u32 2, %s28
        %p435 = scmp.eq.s32.totalorder %s29, 0
        // Predicated region
        $region45: #{outer_product_mean.3} parent=43 // pred_check
          %p436 = pneg %p435
        $region46: #{outer_product_mean.3} parent=43 // pred_check_branch
          %438 = sbr.rel (%p436) target = $region48
        $region47: #{outer_product_mean.3} parent=43 // pred_region
          %439 = vst [vmem:[#allocation2] sm:$0xff] 0.0
          %440 = vst [vmem:[#allocation2 + $0x8] sm:$0xff] 0.0
          %441 = vst [vmem:[#allocation2 + $0x10] sm:$0xff] 0.0
          %442 = vst [vmem:[#allocation2 + $0x18] sm:$0xff] 0.0
          %443 = vst [vmem:[#allocation2 + $0x20] sm:$0xff] 0.0
          %444 = vst [vmem:[#allocation2 + $0x28] sm:$0xff] 0.0
          %445 = vst [vmem:[#allocation2 + $0x30] sm:$0xff] 0.0
          %446 = vst [vmem:[#allocation2 + $0x38] sm:$0xff] 0.0
          %447 = vst [vmem:[#allocation2 + $0x40] sm:$0xff] 0.0
          %448 = vst [vmem:[#allocation2 + $0x48] sm:$0xff] 0.0
          %449 = vst [vmem:[#allocation2 + $0x50] sm:$0xff] 0.0
          %450 = vst [vmem:[#allocation2 + $0x58] sm:$0xff] 0.0
          %451 = vst [vmem:[#allocation2 + $0x60] sm:$0xff] 0.0
          %452 = vst [vmem:[#allocation2 + $0x68] sm:$0xff] 0.0
          %453 = vst [vmem:[#allocation2 + $0x70] sm:$0xff] 0.0
          %454 = vst [vmem:[#allocation2 + $0x78] sm:$0xff] 0.0
          %vm455 = vcmask 130048
          %456 = vst.msk [vmem:[#allocation3] sm:$0xff] %vm455, 0.0
          %457 = vst.msk [vmem:[#allocation3 + $0x8] sm:$0xff] %vm455, 0.0
        $region48: #{outer_product_mean.3} parent=43 // pred_fallthru
          _
        %v458 = vld [vmem:[%s397] sm:$0xf]
        %v459 = vld [vmem:[%s397 + $0x4] sm:$0xf]
        %v460 = vld [vmem:[%s397 + $0x8] sm:$0xf]
        %v461 = vld [vmem:[%s397 + $0xc] sm:$0xf]
        %v462 = vld [vmem:[%s397 + $0x10] sm:$0xf]
        %v463 = vld [vmem:[%s397 + $0x14] sm:$0xf]
        %v464 = vld [vmem:[%s397 + $0x18] sm:$0xf]
        %v465 = vld [vmem:[%s397 + $0x1c] sm:$0xf]
        %v466 = vld [vmem:[%s397 + $0x20] sm:$0xf]
        %v467 = vld [vmem:[%s397 + $0x24] sm:$0xf]
        %v468 = vld [vmem:[%s397 + $0x28] sm:$0xf]
        %v469 = vld [vmem:[%s397 + $0x2c] sm:$0xf]
        %v470 = vld [vmem:[%s397 + $0x30] sm:$0xf]
        %v471 = vld [vmem:[%s397 + $0x34] sm:$0xf]
        %v472 = vld [vmem:[%s397 + $0x38] sm:$0xf]
        %v473 = vld [vmem:[%s397 + $0x3c] sm:$0xf]
        %v474 = vld [vmem:[%s408] sm:$0xf]
        %v475 = vld [vmem:[#allocation2] sm:$0xff]
        %v476 = vld [vmem:[#allocation2 + $0x8] sm:$0xff]
        %v477 = vld [vmem:[#allocation2 + $0x10] sm:$0xff]
        %v478 = vld [vmem:[#allocation2 + $0x18] sm:$0xff]
        %v479 = vld [vmem:[#allocation2 + $0x20] sm:$0xff]
        %v480 = vld [vmem:[#allocation2 + $0x28] sm:$0xff]
        %v481 = vld [vmem:[#allocation2 + $0x30] sm:$0xff]
        %v482 = vld [vmem:[#allocation2 + $0x38] sm:$0xff]
        %v483 = vld [vmem:[#allocation2 + $0x40] sm:$0xff]
        %v484 = vld [vmem:[#allocation2 + $0x48] sm:$0xff]
        %v485 = vld [vmem:[#allocation2 + $0x50] sm:$0xff]
        %v486 = vld [vmem:[#allocation2 + $0x58] sm:$0xff]
        %v487 = vld [vmem:[#allocation2 + $0x60] sm:$0xff]
        %v488 = vld [vmem:[#allocation2 + $0x68] sm:$0xff]
        %v489 = vld [vmem:[#allocation2 + $0x70] sm:$0xff]
        %v490 = vld [vmem:[#allocation2 + $0x78] sm:$0xff]
        %v507 = vunpack.c.l.b16 %v458
        %v508 = vunpack.c.l.b16 %v459
        %v509 = vunpack.c.l.b16 %v460
        %v510 = vunpack.c.l.b16 %v461
        %v511 = vunpack.c.l.b16 %v462
        %v512 = vunpack.c.l.b16 %v463
        %v513 = vunpack.c.l.b16 %v464
        %v514 = vunpack.c.l.b16 %v465
        %v515 = vunpack.c.l.b16 %v466
        %v516 = vunpack.c.l.b16 %v467
        %v517 = vunpack.c.l.b16 %v468
        %v518 = vunpack.c.l.b16 %v469
        %v519 = vunpack.c.l.b16 %v470
        %v520 = vunpack.c.l.b16 %v471
        %v521 = vunpack.c.l.b16 %v472
        %v522 = vunpack.c.l.b16 %v473
        %v523 = vpack.c.b16 %v508, %v507
        %v524 = vpack.c.b16 %v510, %v509
        %v525 = vpack.c.b16 %v512, %v511
        %v526 = vpack.c.b16 %v514, %v513
        %v527 = vpack.c.b16 %v516, %v515
        %v528 = vpack.c.b16 %v518, %v517
        %v529 = vpack.c.b16 %v520, %v519
        %v530 = vpack.c.b16 %v522, %v521
        %vm531 = vcmask 64512
        %v533 = vsel %vm531, %v523, 0
        %v536 = vsel %vm531, %v524, 0
        %v539 = vsel %vm531, %v525, 0
        %v542 = vsel %vm531, %v526, 0
        %v545 = vsel %vm531, %v527, 0
        %v548 = vsel %vm531, %v528, 0
        %v551 = vsel %vm531, %v529, 0
        %v554 = vsel %vm531, %v530, 0
        %vm556 = vcmask 1043456
        %v558 = vsel %vm556, %v474, 0
        %560 = vmatpush.bf16.msra.mxu0 0
        %561 = vmatpush.bf16.msra.mxu0 0
        %562 = vmatpush.bf16.msra.mxu0 0
        %563 = vmatpush.bf16.msra.mxu0 0
        %564 = vmatpush.bf16.msra.mxu0 0
        %565 = vmatpush.bf16.msra.mxu0 0
        %566 = vmatpush.bf16.msra.mxu0 0
        %567 = vmatpush.bf16.msra.mxu0 %v558
        %568 = vmatmul.bf16.gmra.mxu0 %v533
        %v569 = vpop.f32.mrf.mxu0
        %v570 = vadd.f32 0.0, %v569
        %v571 = vpop.f32.mrf.mxu0
        %v572 = vadd.f32 0.0, %v571
        %573 = vmatmul.bf16.gmra.mxu0 %v536
        %v574 = vpop.f32.mrf.mxu0
        %v575 = vadd.f32 0.0, %v574
        %v576 = vpop.f32.mrf.mxu0
        %v577 = vadd.f32 0.0, %v576
        %578 = vmatmul.bf16.gmra.mxu0 %v539
        %v579 = vpop.f32.mrf.mxu0
        %v580 = vadd.f32 0.0, %v579
        %v581 = vpop.f32.mrf.mxu0
        %v582 = vadd.f32 0.0, %v581
        %583 = vmatmul.bf16.gmra.mxu0 %v542
        %v584 = vpop.f32.mrf.mxu0
        %v585 = vadd.f32 0.0, %v584
        %v586 = vpop.f32.mrf.mxu0
        %v587 = vadd.f32 0.0, %v586
        %588 = vmatmul.bf16.gmra.mxu0 %v545
        %v589 = vpop.f32.mrf.mxu0
        %v590 = vadd.f32 0.0, %v589
        %v591 = vpop.f32.mrf.mxu0
        %v592 = vadd.f32 0.0, %v591
        %593 = vmatmul.bf16.gmra.mxu0 %v548
        %v594 = vpop.f32.mrf.mxu0
        %v595 = vadd.f32 0.0, %v594
        %v596 = vpop.f32.mrf.mxu0
        %v597 = vadd.f32 0.0, %v596
        %598 = vmatmul.bf16.gmra.mxu0 %v551
        %v599 = vpop.f32.mrf.mxu0
        %v600 = vadd.f32 0.0, %v599
        %v601 = vpop.f32.mrf.mxu0
        %v602 = vadd.f32 0.0, %v601
        %603 = vmatmul.bf16.gmra.mxu0 %v554
        %v604 = vpop.f32.mrf.mxu0
        %v605 = vadd.f32 0.0, %v604
        %v606 = vpop.f32.mrf.mxu0
        %v607 = vadd.f32 0.0, %v606
        %608 = vdwg.mxu0
        %v609 = vadd.f32 %v475, %v570
        %v610 = vadd.f32 %v476, %v572
        %v611 = vadd.f32 %v477, %v575
        %v612 = vadd.f32 %v478, %v577
        %v613 = vadd.f32 %v479, %v580
        %v614 = vadd.f32 %v480, %v582
        %v615 = vadd.f32 %v481, %v585
        %v616 = vadd.f32 %v482, %v587
        %v617 = vadd.f32 %v483, %v590
        %v618 = vadd.f32 %v484, %v592
        %v619 = vadd.f32 %v485, %v595
        %v620 = vadd.f32 %v486, %v597
        %v621 = vadd.f32 %v487, %v600
        %v622 = vadd.f32 %v488, %v602
        %v623 = vadd.f32 %v489, %v605
        %v624 = vadd.f32 %v490, %v607
        %625 = vst [vmem:[#allocation2] sm:$0xff] %v609
        %626 = vst [vmem:[#allocation2 + $0x8] sm:$0xff] %v610
        %627 = vst [vmem:[#allocation2 + $0x10] sm:$0xff] %v611
        %628 = vst [vmem:[#allocation2 + $0x18] sm:$0xff] %v612
        %629 = vst [vmem:[#allocation2 + $0x20] sm:$0xff] %v613
        %630 = vst [vmem:[#allocation2 + $0x28] sm:$0xff] %v614
        %631 = vst [vmem:[#allocation2 + $0x30] sm:$0xff] %v615
        %632 = vst [vmem:[#allocation2 + $0x38] sm:$0xff] %v616
        %633 = vst [vmem:[#allocation2 + $0x40] sm:$0xff] %v617
        %634 = vst [vmem:[#allocation2 + $0x48] sm:$0xff] %v618
        %635 = vst [vmem:[#allocation2 + $0x50] sm:$0xff] %v619
        %636 = vst [vmem:[#allocation2 + $0x58] sm:$0xff] %v620
        %637 = vst [vmem:[#allocation2 + $0x60] sm:$0xff] %v621
        %638 = vst [vmem:[#allocation2 + $0x68] sm:$0xff] %v622
        %639 = vst [vmem:[#allocation2 + $0x70] sm:$0xff] %v623
        %640 = vst [vmem:[#allocation2 + $0x78] sm:$0xff] %v624
        %v641 = vld [vmem:[#allocation3] sm:$0xff]
        %v642 = vld [vmem:[#allocation3 + $0x8] sm:$0xff]
        %v643 = vld [vmem:[%s420] sm:$0xff]
        %v644 = vld [vmem:[%s420 + $0x8] sm:$0xff]
        %v645 = vld [vmem:[%s431] sm:$0xff]
        %v647 = vsel %vm531, %v643, 0
        %v650 = vsel %vm531, %v644, 0
        %652 = vmatpush.msra.mxu0 0.0
        %653 = vmatpush.msra.mxu0 0.0
        %654 = vmatpush.msra.mxu0 0.0
        %655 = vmatpush.msra.mxu0 0.0
        %656 = vmatpush.msra.mxu0 0.0
        %657 = vmatpush.msra.mxu0 0.0
        %658 = vmatpush.msra.mxu0 0.0
        %659 = vmatpush.msra.mxu0 0.0
        %660 = vmatpush.msra.mxu0 0.0
        %661 = vmatpush.msra.mxu0 0.0
        %662 = vmatpush.msra.mxu0 0.0
        %663 = vmatpush.msra.mxu0 0.0
        %664 = vmatpush.msra.mxu0 0.0
        %665 = vmatpush.msra.mxu0 0.0
        %666 = vmatpush.msra.mxu0 0.0
        %667 = vmatpush.msra.mxu0 %v645
        %668 = vmatmul.f32.gmra.mxu0 %v647
        %v669 = vpop.f32.mrf.mxu0
        %v670 = vadd.f32 0.0, %v669
        %671 = vmatmul.f32.gmra.mxu0 %v650
        %v672 = vpop.f32.mrf.mxu0
        %v673 = vadd.f32 0.0, %v672
        %674 = vdwg.mxu0
        %v675 = vadd.f32 %v641, %v670
        %v676 = vadd.f32 %v642, %v673
        %vm677 = vcmask 130048
        %678 = vst.msk [vmem:[#allocation3] sm:$0xff] %vm677, %v675
        %679 = vst.msk [vmem:[#allocation3 + $0x8] sm:$0xff] %vm677, %v676
        // Predicated region
        $region49: #{outer_product_mean.3} parent=43 // pred_check
          %p680 = pneg %p435
        $region50: #{outer_product_mean.3} parent=43 // pred_check_branch
          %682 = sbr.rel (%p680) target = $region52
        $region51: #{outer_product_mean.3} parent=43 // pred_region
          %v683 = vld [vmem:[#allocation3] sm:$0xff]
          %v684 = vld [vmem:[#allocation3 + $0x8] sm:$0xff]
          %vm685 = vcmask 7168
          %686 = vst.msk [vmem:[#allocation5] sm:$0xff] %vm685, %v683
          %687 = vst.msk [vmem:[#allocation5 + $0x8] sm:$0xff] %vm685, %v684
          %v688 = vld [vmem:[#allocation2] sm:$0xff]
          %v689 = vld [vmem:[#allocation2 + $0x8] sm:$0xff]
          %690 = vst.msk [vmem:[#allocation4] sm:$0xff] %vm531, %v688
          %691 = vst.msk [vmem:[#allocation4 + $0x8] sm:$0xff] %vm531, %v689
          %v692 = vld [vmem:[#allocation2 + $0x10] sm:$0xff]
          %v693 = vld [vmem:[#allocation2 + $0x18] sm:$0xff]
          %696 = vrot.lane.b32.xlu0 %v692, 8
          %v697 = vpop.permute.xlu0 %696
          %698 = vrot.lane.b32.xlu0 %v693, 8
          %v699 = vpop.permute.xlu0 %698
          %vm702 = vcmask 130112
          %703 = vst.msk [vmem:[#allocation4] sm:$0xff] %vm702, %v697
          %704 = vst.msk [vmem:[#allocation4 + $0x8] sm:$0xff] %vm702, %v699
          %v705 = vld [vmem:[#allocation2 + $0x20] sm:$0xff]
          %v706 = vld [vmem:[#allocation2 + $0x28] sm:$0xff]
          %709 = vrot.lane.b32.xlu0 %v705, 16
          %v710 = vpop.permute.xlu0 %709
          %711 = vrot.lane.b32.xlu0 %v706, 16
          %v712 = vpop.permute.xlu0 %711
          %vm715 = vcmask 195712
          %716 = vst.msk [vmem:[#allocation4] sm:$0xff] %vm715, %v710
          %717 = vst.msk [vmem:[#allocation4 + $0x8] sm:$0xff] %vm715, %v712
          %v718 = vld [vmem:[#allocation2 + $0x30] sm:$0xff]
          %v719 = vld [vmem:[#allocation2 + $0x38] sm:$0xff]
          %722 = vrot.lane.b32.xlu0 %v718, 24
          %v723 = vpop.permute.xlu0 %722
          %724 = vrot.lane.b32.xlu0 %v719, 24
          %v725 = vpop.permute.xlu0 %724
          %vm728 = vcmask 261312
          %729 = vst.msk [vmem:[#allocation4] sm:$0xff] %vm728, %v723
          %730 = vst.msk [vmem:[#allocation4 + $0x8] sm:$0xff] %vm728, %v725
          %v731 = vld [vmem:[#allocation2 + $0x40] sm:$0xff]
          %v732 = vld [vmem:[#allocation2 + $0x48] sm:$0xff]
          %735 = vrot.lane.b32.xlu0 %v731, 32
          %v736 = vpop.permute.xlu0 %735
          %737 = vrot.lane.b32.xlu0 %v732, 32
          %v738 = vpop.permute.xlu0 %737
          %vm741 = vcmask 326912
          %742 = vst.msk [vmem:[#allocation4] sm:$0xff] %vm741, %v736
          %743 = vst.msk [vmem:[#allocation4 + $0x8] sm:$0xff] %vm741, %v738
          %v744 = vld [vmem:[#allocation2 + $0x50] sm:$0xff]
          %v745 = vld [vmem:[#allocation2 + $0x58] sm:$0xff]
          %748 = vrot.lane.b32.xlu0 %v744, 40
          %v749 = vpop.permute.xlu0 %748
          %750 = vrot.lane.b32.xlu0 %v745, 40
          %v751 = vpop.permute.xlu0 %750
          %vm754 = vcmask 392512
          %755 = vst.msk [vmem:[#allocation4] sm:$0xff] %vm754, %v749
          %756 = vst.msk [vmem:[#allocation4 + $0x8] sm:$0xff] %vm754, %v751
          %v757 = vld [vmem:[#allocation2 + $0x60] sm:$0xff]
          %v758 = vld [vmem:[#allocation2 + $0x68] sm:$0xff]
          %761 = vrot.lane.b32.xlu0 %v757, 48
          %v762 = vpop.permute.xlu0 %761
          %763 = vrot.lane.b32.xlu0 %v758, 48
          %v764 = vpop.permute.xlu0 %763
          %vm767 = vcmask 458112
          %768 = vst.msk [vmem:[#allocation4] sm:$0xff] %vm767, %v762
          %769 = vst.msk [vmem:[#allocation4 + $0x8] sm:$0xff] %vm767, %v764
          %v770 = vld [vmem:[#allocation2 + $0x70] sm:$0xff]
          %v771 = vld [vmem:[#allocation2 + $0x78] sm:$0xff]
          %774 = vrot.lane.b32.xlu0 %v770, 56
          %v775 = vpop.permute.xlu0 %774
          %776 = vrot.lane.b32.xlu0 %v771, 56
          %v777 = vpop.permute.xlu0 %776
          %vm780 = vcmask 523712
          %781 = vst.msk [vmem:[#allocation4] sm:$0xff] %vm780, %v775
          %782 = vst.msk [vmem:[#allocation4 + $0x8] sm:$0xff] %vm780, %v777
          %v783 = vld [vmem:[#allocation3] sm:$0xff]
          %v784 = vld [vmem:[#allocation3 + $0x8] sm:$0xff]
          %787 = vrot.lane.b32.xlu0 %v783, 127
          %v788 = vpop.permute.xlu0 %787
          %789 = vrot.lane.b32.xlu0 %v784, 127
          %v790 = vpop.permute.xlu0 %789
          %793 = vst.msk [vmem:[#allocation5 + $0x10] sm:$0xff] %vm685, %v788
          %794 = vst.msk [vmem:[#allocation5 + $0x18] sm:$0xff] %vm685, %v790
          %v795 = vld [vmem:[#allocation2] sm:$0xff]
          %v796 = vld [vmem:[#allocation2 + $0x8] sm:$0xff]
          %799 = vrot.lane.b32.xlu0 %v795, 120
          %v800 = vpop.permute.xlu0 %799
          %801 = vrot.lane.b32.xlu0 %v796, 120
          %v802 = vpop.permute.xlu0 %801
          %805 = vst.msk [vmem:[#allocation4 + $0x10] sm:$0xff] %vm531, %v800
          %806 = vst.msk [vmem:[#allocation4 + $0x18] sm:$0xff] %vm531, %v802
          %v807 = vld [vmem:[#allocation2 + $0x10] sm:$0xff]
          %v808 = vld [vmem:[#allocation2 + $0x18] sm:$0xff]
          %809 = vst.msk [vmem:[#allocation4 + $0x10] sm:$0xff] %vm702, %v807
          %810 = vst.msk [vmem:[#allocation4 + $0x18] sm:$0xff] %vm702, %v808
          %v811 = vld [vmem:[#allocation2 + $0x20] sm:$0xff]
          %v812 = vld [vmem:[#allocation2 + $0x28] sm:$0xff]
          %815 = vrot.lane.b32.xlu0 %v811, 8
          %v816 = vpop.permute.xlu0 %815
          %817 = vrot.lane.b32.xlu0 %v812, 8
          %v818 = vpop.permute.xlu0 %817
          %821 = vst.msk [vmem:[#allocation4 + $0x10] sm:$0xff] %vm715, %v816
          %822 = vst.msk [vmem:[#allocation4 + $0x18] sm:$0xff] %vm715, %v818
          %v823 = vld [vmem:[#allocation2 + $0x30] sm:$0xff]
          %v824 = vld [vmem:[#allocation2 + $0x38] sm:$0xff]
          %827 = vrot.lane.b32.xlu0 %v823, 16
          %v828 = vpop.permute.xlu0 %827
          %829 = vrot.lane.b32.xlu0 %v824, 16
          %v830 = vpop.permute.xlu0 %829
          %833 = vst.msk [vmem:[#allocation4 + $0x10] sm:$0xff] %vm728, %v828
          %834 = vst.msk [vmem:[#allocation4 + $0x18] sm:$0xff] %vm728, %v830
          %v835 = vld [vmem:[#allocation2 + $0x40] sm:$0xff]
          %v836 = vld [vmem:[#allocation2 + $0x48] sm:$0xff]
          %839 = vrot.lane.b32.xlu0 %v835, 24
          %v840 = vpop.permute.xlu0 %839
          %841 = vrot.lane.b32.xlu0 %v836, 24
          %v842 = vpop.permute.xlu0 %841
          %845 = vst.msk [vmem:[#allocation4 + $0x10] sm:$0xff] %vm741, %v840
          %846 = vst.msk [vmem:[#allocation4 + $0x18] sm:$0xff] %vm741, %v842
          %v847 = vld [vmem:[#allocation2 + $0x50] sm:$0xff]
          %v848 = vld [vmem:[#allocation2 + $0x58] sm:$0xff]
          %851 = vrot.lane.b32.xlu0 %v847, 32
          %v852 = vpop.permute.xlu0 %851
          %853 = vrot.lane.b32.xlu0 %v848, 32
          %v854 = vpop.permute.xlu0 %853
          %857 = vst.msk [vmem:[#allocation4 + $0x10] sm:$0xff] %vm754, %v852
          %858 = vst.msk [vmem:[#allocation4 + $0x18] sm:$0xff] %vm754, %v854
          %v859 = vld [vmem:[#allocation2 + $0x60] sm:$0xff]
          %v860 = vld [vmem:[#allocation2 + $0x68] sm:$0xff]
          %863 = vrot.lane.b32.xlu0 %v859, 40
          %v864 = vpop.permute.xlu0 %863
          %865 = vrot.lane.b32.xlu0 %v860, 40
          %v866 = vpop.permute.xlu0 %865
          %869 = vst.msk [vmem:[#allocation4 + $0x10] sm:$0xff] %vm767, %v864
          %870 = vst.msk [vmem:[#allocation4 + $0x18] sm:$0xff] %vm767, %v866
          %v871 = vld [vmem:[#allocation2 + $0x70] sm:$0xff]
          %v872 = vld [vmem:[#allocation2 + $0x78] sm:$0xff]
          %875 = vrot.lane.b32.xlu0 %v871, 48
          %v876 = vpop.permute.xlu0 %875
          %877 = vrot.lane.b32.xlu0 %v872, 48
          %v878 = vpop.permute.xlu0 %877
          %881 = vst.msk [vmem:[#allocation4 + $0x10] sm:$0xff] %vm780, %v876
          %882 = vst.msk [vmem:[#allocation4 + $0x18] sm:$0xff] %vm780, %v878
          %v883 = vld [vmem:[#allocation3] sm:$0xff]
          %v884 = vld [vmem:[#allocation3 + $0x8] sm:$0xff]
          %887 = vrot.lane.b32.xlu0 %v883, 126
          %v888 = vpop.permute.xlu0 %887
          %889 = vrot.lane.b32.xlu0 %v884, 126
          %v890 = vpop.permute.xlu0 %889
          %893 = vst.msk [vmem:[#allocation5 + $0x20] sm:$0xff] %vm685, %v888
          %894 = vst.msk [vmem:[#allocation5 + $0x28] sm:$0xff] %vm685, %v890
          %v895 = vld [vmem:[#allocation2] sm:$0xff]
          %v896 = vld [vmem:[#allocation2 + $0x8] sm:$0xff]
          %899 = vrot.lane.b32.xlu0 %v895, 112
          %v900 = vpop.permute.xlu0 %899
          %901 = vrot.lane.b32.xlu0 %v896, 112
          %v902 = vpop.permute.xlu0 %901
          %905 = vst.msk [vmem:[#allocation4 + $0x20] sm:$0xff] %vm531, %v900
          %906 = vst.msk [vmem:[#allocation4 + $0x28] sm:$0xff] %vm531, %v902
          %v907 = vld [vmem:[#allocation2 + $0x10] sm:$0xff]
          %v908 = vld [vmem:[#allocation2 + $0x18] sm:$0xff]
          %911 = vrot.lane.b32.xlu0 %v907, 120
          %v912 = vpop.permute.xlu0 %911
          %913 = vrot.lane.b32.xlu0 %v908, 120
          %v914 = vpop.permute.xlu0 %913
          %917 = vst.msk [vmem:[#allocation4 + $0x20] sm:$0xff] %vm702, %v912
          %918 = vst.msk [vmem:[#allocation4 + $0x28] sm:$0xff] %vm702, %v914
          %v919 = vld [vmem:[#allocation2 + $0x20] sm:$0xff]
          %v920 = vld [vmem:[#allocation2 + $0x28] sm:$0xff]
          %921 = vst.msk [vmem:[#allocation4 + $0x20] sm:$0xff] %vm715, %v919
          %922 = vst.msk [vmem:[#allocation4 + $0x28] sm:$0xff] %vm715, %v920
          %v923 = vld [vmem:[#allocation2 + $0x30] sm:$0xff]
          %v924 = vld [vmem:[#allocation2 + $0x38] sm:$0xff]
          %927 = vrot.lane.b32.xlu0 %v923, 8
          %v928 = vpop.permute.xlu0 %927
          %929 = vrot.lane.b32.xlu0 %v924, 8
          %v930 = vpop.permute.xlu0 %929
          %933 = vst.msk [vmem:[#allocation4 + $0x20] sm:$0xff] %vm728, %v928
          %934 = vst.msk [vmem:[#allocation4 + $0x28] sm:$0xff] %vm728, %v930
          %v935 = vld [vmem:[#allocation2 + $0x40] sm:$0xff]
          %v936 = vld [vmem:[#allocation2 + $0x48] sm:$0xff]
          %939 = vrot.lane.b32.xlu0 %v935, 16
          %v940 = vpop.permute.xlu0 %939
          %941 = vrot.lane.b32.xlu0 %v936, 16
          %v942 = vpop.permute.xlu0 %941
          %945 = vst.msk [vmem:[#allocation4 + $0x20] sm:$0xff] %vm741, %v940
          %946 = vst.msk [vmem:[#allocation4 + $0x28] sm:$0xff] %vm741, %v942
          %v947 = vld [vmem:[#allocation2 + $0x50] sm:$0xff]
          %v948 = vld [vmem:[#allocation2 + $0x58] sm:$0xff]
          %951 = vrot.lane.b32.xlu0 %v947, 24
          %v952 = vpop.permute.xlu0 %951
          %953 = vrot.lane.b32.xlu0 %v948, 24
          %v954 = vpop.permute.xlu0 %953
          %957 = vst.msk [vmem:[#allocation4 + $0x20] sm:$0xff] %vm754, %v952
          %958 = vst.msk [vmem:[#allocation4 + $0x28] sm:$0xff] %vm754, %v954
          %v959 = vld [vmem:[#allocation2 + $0x60] sm:$0xff]
          %v960 = vld [vmem:[#allocation2 + $0x68] sm:$0xff]
          %963 = vrot.lane.b32.xlu0 %v959, 32
          %v964 = vpop.permute.xlu0 %963
          %965 = vrot.lane.b32.xlu0 %v960, 32
          %v966 = vpop.permute.xlu0 %965
          %969 = vst.msk [vmem:[#allocation4 + $0x20] sm:$0xff] %vm767, %v964
          %970 = vst.msk [vmem:[#allocation4 + $0x28] sm:$0xff] %vm767, %v966
          %v971 = vld [vmem:[#allocation2 + $0x70] sm:$0xff]
          %v972 = vld [vmem:[#allocation2 + $0x78] sm:$0xff]
          %975 = vrot.lane.b32.xlu0 %v971, 40
          %v976 = vpop.permute.xlu0 %975
          %977 = vrot.lane.b32.xlu0 %v972, 40
          %v978 = vpop.permute.xlu0 %977
          %981 = vst.msk [vmem:[#allocation4 + $0x20] sm:$0xff] %vm780, %v976
          %982 = vst.msk [vmem:[#allocation4 + $0x28] sm:$0xff] %vm780, %v978
          %v983 = vld [vmem:[#allocation3] sm:$0xff]
          %v984 = vld [vmem:[#allocation3 + $0x8] sm:$0xff]
          %987 = vrot.lane.b32.xlu0 %v983, 125
          %v988 = vpop.permute.xlu0 %987
          %989 = vrot.lane.b32.xlu0 %v984, 125
          %v990 = vpop.permute.xlu0 %989
          %993 = vst.msk [vmem:[#allocation5 + $0x30] sm:$0xff] %vm685, %v988
          %994 = vst.msk [vmem:[#allocation5 + $0x38] sm:$0xff] %vm685, %v990
          %v995 = vld [vmem:[#allocation2] sm:$0xff]
          %v996 = vld [vmem:[#allocation2 + $0x8] sm:$0xff]
          %999 = vrot.lane.b32.xlu0 %v995, 104
          %v1000 = vpop.permute.xlu0 %999
          %1001 = vrot.lane.b32.xlu0 %v996, 104
          %v1002 = vpop.permute.xlu0 %1001
          %1005 = vst.msk [vmem:[#allocation4 + $0x30] sm:$0xff] %vm531, %v1000
          %1006 = vst.msk [vmem:[#allocation4 + $0x38] sm:$0xff] %vm531, %v1002
          %v1007 = vld [vmem:[#allocation2 + $0x10] sm:$0xff]
          %v1008 = vld [vmem:[#allocation2 + $0x18] sm:$0xff]
          %1011 = vrot.lane.b32.xlu0 %v1007, 112
          %v1012 = vpop.permute.xlu0 %1011
          %1013 = vrot.lane.b32.xlu0 %v1008, 112
          %v1014 = vpop.permute.xlu0 %1013
          %1017 = vst.msk [vmem:[#allocation4 + $0x30] sm:$0xff] %vm702, %v1012
          %1018 = vst.msk [vmem:[#allocation4 + $0x38] sm:$0xff] %vm702, %v1014
          %v1019 = vld [vmem:[#allocation2 + $0x20] sm:$0xff]
          %v1020 = vld [vmem:[#allocation2 + $0x28] sm:$0xff]
          %1023 = vrot.lane.b32.xlu0 %v1019, 120
          %v1024 = vpop.permute.xlu0 %1023
          %1025 = vrot.lane.b32.xlu0 %v1020, 120
          %v1026 = vpop.permute.xlu0 %1025
          %1029 = vst.msk [vmem:[#allocation4 + $0x30] sm:$0xff] %vm715, %v1024
          %1030 = vst.msk [vmem:[#allocation4 + $0x38] sm:$0xff] %vm715, %v1026
          %v1031 = vld [vmem:[#allocation2 + $0x30] sm:$0xff]
          %v1032 = vld [vmem:[#allocation2 + $0x38] sm:$0xff]
          %1033 = vst.msk [vmem:[#allocation4 + $0x30] sm:$0xff] %vm728, %v1031
          %1034 = vst.msk [vmem:[#allocation4 + $0x38] sm:$0xff] %vm728, %v1032
          %v1035 = vld [vmem:[#allocation2 + $0x40] sm:$0xff]
          %v1036 = vld [vmem:[#allocation2 + $0x48] sm:$0xff]
          %1039 = vrot.lane.b32.xlu0 %v1035, 8
          %v1040 = vpop.permute.xlu0 %1039
          %1041 = vrot.lane.b32.xlu0 %v1036, 8
          %v1042 = vpop.permute.xlu0 %1041
          %1045 = vst.msk [vmem:[#allocation4 + $0x30] sm:$0xff] %vm741, %v1040
          %1046 = vst.msk [vmem:[#allocation4 + $0x38] sm:$0xff] %vm741, %v1042
          %v1047 = vld [vmem:[#allocation2 + $0x50] sm:$0xff]
          %v1048 = vld [vmem:[#allocation2 + $0x58] sm:$0xff]
          %1051 = vrot.lane.b32.xlu0 %v1047, 16
          %v1052 = vpop.permute.xlu0 %1051
          %1053 = vrot.lane.b32.xlu0 %v1048, 16
          %v1054 = vpop.permute.xlu0 %1053
          %1057 = vst.msk [vmem:[#allocation4 + $0x30] sm:$0xff] %vm754, %v1052
          %1058 = vst.msk [vmem:[#allocation4 + $0x38] sm:$0xff] %vm754, %v1054
          %v1059 = vld [vmem:[#allocation2 + $0x60] sm:$0xff]
          %v1060 = vld [vmem:[#allocation2 + $0x68] sm:$0xff]
          %1063 = vrot.lane.b32.xlu0 %v1059, 24
          %v1064 = vpop.permute.xlu0 %1063
          %1065 = vrot.lane.b32.xlu0 %v1060, 24
          %v1066 = vpop.permute.xlu0 %1065
          %1069 = vst.msk [vmem:[#allocation4 + $0x30] sm:$0xff] %vm767, %v1064
          %1070 = vst.msk [vmem:[#allocation4 + $0x38] sm:$0xff] %vm767, %v1066
          %v1071 = vld [vmem:[#allocation2 + $0x70] sm:$0xff]
          %v1072 = vld [vmem:[#allocation2 + $0x78] sm:$0xff]
          %1075 = vrot.lane.b32.xlu0 %v1071, 32
          %v1076 = vpop.permute.xlu0 %1075
          %1077 = vrot.lane.b32.xlu0 %v1072, 32
          %v1078 = vpop.permute.xlu0 %1077
          %1081 = vst.msk [vmem:[#allocation4 + $0x30] sm:$0xff] %vm780, %v1076
          %1082 = vst.msk [vmem:[#allocation4 + $0x38] sm:$0xff] %vm780, %v1078
          %v1083 = vld [vmem:[#allocation3] sm:$0xff]
          %v1084 = vld [vmem:[#allocation3 + $0x8] sm:$0xff]
          %1087 = vrot.lane.b32.xlu0 %v1083, 124
          %v1088 = vpop.permute.xlu0 %1087
          %1089 = vrot.lane.b32.xlu0 %v1084, 124
          %v1090 = vpop.permute.xlu0 %1089
          %1093 = vst.msk [vmem:[#allocation5 + $0x40] sm:$0xff] %vm685, %v1088
          %1094 = vst.msk [vmem:[#allocation5 + $0x48] sm:$0xff] %vm685, %v1090
          %v1095 = vld [vmem:[#allocation2] sm:$0xff]
          %v1096 = vld [vmem:[#allocation2 + $0x8] sm:$0xff]
          %1099 = vrot.lane.b32.xlu0 %v1095, 96
          %v1100 = vpop.permute.xlu0 %1099
          %1101 = vrot.lane.b32.xlu0 %v1096, 96
          %v1102 = vpop.permute.xlu0 %1101
          %1105 = vst.msk [vmem:[#allocation4 + $0x40] sm:$0xff] %vm531, %v1100
          %1106 = vst.msk [vmem:[#allocation4 + $0x48] sm:$0xff] %vm531, %v1102
          %v1107 = vld [vmem:[#allocation2 + $0x10] sm:$0xff]
          %v1108 = vld [vmem:[#allocation2 + $0x18] sm:$0xff]
          %1111 = vrot.lane.b32.xlu0 %v1107, 104
          %v1112 = vpop.permute.xlu0 %1111
          %1113 = vrot.lane.b32.xlu0 %v1108, 104
          %v1114 = vpop.permute.xlu0 %1113
          %1117 = vst.msk [vmem:[#allocation4 + $0x40] sm:$0xff] %vm702, %v1112
          %1118 = vst.msk [vmem:[#allocation4 + $0x48] sm:$0xff] %vm702, %v1114
          %v1119 = vld [vmem:[#allocation2 + $0x20] sm:$0xff]
          %v1120 = vld [vmem:[#allocation2 + $0x28] sm:$0xff]
          %1123 = vrot.lane.b32.xlu0 %v1119, 112
          %v1124 = vpop.permute.xlu0 %1123
          %1125 = vrot.lane.b32.xlu0 %v1120, 112
          %v1126 = vpop.permute.xlu0 %1125
          %1129 = vst.msk [vmem:[#allocation4 + $0x40] sm:$0xff] %vm715, %v1124
          %1130 = vst.msk [vmem:[#allocation4 + $0x48] sm:$0xff] %vm715, %v1126
          %v1131 = vld [vmem:[#allocation2 + $0x30] sm:$0xff]
          %v1132 = vld [vmem:[#allocation2 + $0x38] sm:$0xff]
          %1135 = vrot.lane.b32.xlu0 %v1131, 120
          %v1136 = vpop.permute.xlu0 %1135
          %1137 = vrot.lane.b32.xlu0 %v1132, 120
          %v1138 = vpop.permute.xlu0 %1137
          %1141 = vst.msk [vmem:[#allocation4 + $0x40] sm:$0xff] %vm728, %v1136
          %1142 = vst.msk [vmem:[#allocation4 + $0x48] sm:$0xff] %vm728, %v1138
          %v1143 = vld [vmem:[#allocation2 + $0x40] sm:$0xff]
          %v1144 = vld [vmem:[#allocation2 + $0x48] sm:$0xff]
          %1145 = vst.msk [vmem:[#allocation4 + $0x40] sm:$0xff] %vm741, %v1143
          %1146 = vst.msk [vmem:[#allocation4 + $0x48] sm:$0xff] %vm741, %v1144
          %v1147 = vld [vmem:[#allocation2 + $0x50] sm:$0xff]
          %v1148 = vld [vmem:[#allocation2 + $0x58] sm:$0xff]
          %1151 = vrot.lane.b32.xlu0 %v1147, 8
          %v1152 = vpop.permute.xlu0 %1151
          %1153 = vrot.lane.b32.xlu0 %v1148, 8
          %v1154 = vpop.permute.xlu0 %1153
          %1157 = vst.msk [vmem:[#allocation4 + $0x40] sm:$0xff] %vm754, %v1152
          %1158 = vst.msk [vmem:[#allocation4 + $0x48] sm:$0xff] %vm754, %v1154
          %v1159 = vld [vmem:[#allocation2 + $0x60] sm:$0xff]
          %v1160 = vld [vmem:[#allocation2 + $0x68] sm:$0xff]
          %1163 = vrot.lane.b32.xlu0 %v1159, 16
          %v1164 = vpop.permute.xlu0 %1163
          %1165 = vrot.lane.b32.xlu0 %v1160, 16
          %v1166 = vpop.permute.xlu0 %1165
          %1169 = vst.msk [vmem:[#allocation4 + $0x40] sm:$0xff] %vm767, %v1164
          %1170 = vst.msk [vmem:[#allocation4 + $0x48] sm:$0xff] %vm767, %v1166
          %v1171 = vld [vmem:[#allocation2 + $0x70] sm:$0xff]
          %v1172 = vld [vmem:[#allocation2 + $0x78] sm:$0xff]
          %1175 = vrot.lane.b32.xlu0 %v1171, 24
          %v1176 = vpop.permute.xlu0 %1175
          %1177 = vrot.lane.b32.xlu0 %v1172, 24
          %v1178 = vpop.permute.xlu0 %1177
          %1181 = vst.msk [vmem:[#allocation4 + $0x40] sm:$0xff] %vm780, %v1176
          %1182 = vst.msk [vmem:[#allocation4 + $0x48] sm:$0xff] %vm780, %v1178
          %v1183 = vld [vmem:[#allocation3] sm:$0xff]
          %v1184 = vld [vmem:[#allocation3 + $0x8] sm:$0xff]
          %1187 = vrot.lane.b32.xlu0 %v1183, 123
          %v1188 = vpop.permute.xlu0 %1187
          %1189 = vrot.lane.b32.xlu0 %v1184, 123
          %v1190 = vpop.permute.xlu0 %1189
          %1193 = vst.msk [vmem:[#allocation5 + $0x50] sm:$0xff] %vm685, %v1188
          %1194 = vst.msk [vmem:[#allocation5 + $0x58] sm:$0xff] %vm685, %v1190
          %v1195 = vld [vmem:[#allocation2] sm:$0xff]
          %v1196 = vld [vmem:[#allocation2 + $0x8] sm:$0xff]
          %1199 = vrot.lane.b32.xlu0 %v1195, 88
          %v1200 = vpop.permute.xlu0 %1199
          %1201 = vrot.lane.b32.xlu0 %v1196, 88
          %v1202 = vpop.permute.xlu0 %1201
          %1205 = vst.msk [vmem:[#allocation4 + $0x50] sm:$0xff] %vm531, %v1200
          %1206 = vst.msk [vmem:[#allocation4 + $0x58] sm:$0xff] %vm531, %v1202
          %v1207 = vld [vmem:[#allocation2 + $0x10] sm:$0xff]
          %v1208 = vld [vmem:[#allocation2 + $0x18] sm:$0xff]
          %1211 = vrot.lane.b32.xlu0 %v1207, 96
          %v1212 = vpop.permute.xlu0 %1211
          %1213 = vrot.lane.b32.xlu0 %v1208, 96
          %v1214 = vpop.permute.xlu0 %1213
          %1217 = vst.msk [vmem:[#allocation4 + $0x50] sm:$0xff] %vm702, %v1212
          %1218 = vst.msk [vmem:[#allocation4 + $0x58] sm:$0xff] %vm702, %v1214
          %v1219 = vld [vmem:[#allocation2 + $0x20] sm:$0xff]
          %v1220 = vld [vmem:[#allocation2 + $0x28] sm:$0xff]
          %1223 = vrot.lane.b32.xlu0 %v1219, 104
          %v1224 = vpop.permute.xlu0 %1223
          %1225 = vrot.lane.b32.xlu0 %v1220, 104
          %v1226 = vpop.permute.xlu0 %1225
          %1229 = vst.msk [vmem:[#allocation4 + $0x50] sm:$0xff] %vm715, %v1224
          %1230 = vst.msk [vmem:[#allocation4 + $0x58] sm:$0xff] %vm715, %v1226
          %v1231 = vld [vmem:[#allocation2 + $0x30] sm:$0xff]
          %v1232 = vld [vmem:[#allocation2 + $0x38] sm:$0xff]
          %1235 = vrot.lane.b32.xlu0 %v1231, 112
          %v1236 = vpop.permute.xlu0 %1235
          %1237 = vrot.lane.b32.xlu0 %v1232, 112
          %v1238 = vpop.permute.xlu0 %1237
          %1241 = vst.msk [vmem:[#allocation4 + $0x50] sm:$0xff] %vm728, %v1236
          %1242 = vst.msk [vmem:[#allocation4 + $0x58] sm:$0xff] %vm728, %v1238
          %v1243 = vld [vmem:[#allocation2 + $0x40] sm:$0xff]
          %v1244 = vld [vmem:[#allocation2 + $0x48] sm:$0xff]
          %1247 = vrot.lane.b32.xlu0 %v1243, 120
          %v1248 = vpop.permute.xlu0 %1247
          %1249 = vrot.lane.b32.xlu0 %v1244, 120
          %v1250 = vpop.permute.xlu0 %1249
          %1253 = vst.msk [vmem:[#allocation4 + $0x50] sm:$0xff] %vm741, %v1248
          %1254 = vst.msk [vmem:[#allocation4 + $0x58] sm:$0xff] %vm741, %v1250
          %v1255 = vld [vmem:[#allocation2 + $0x50] sm:$0xff]
          %v1256 = vld [vmem:[#allocation2 + $0x58] sm:$0xff]
          %1257 = vst.msk [vmem:[#allocation4 + $0x50] sm:$0xff] %vm754, %v1255
          %1258 = vst.msk [vmem:[#allocation4 + $0x58] sm:$0xff] %vm754, %v1256
          %v1259 = vld [vmem:[#allocation2 + $0x60] sm:$0xff]
          %v1260 = vld [vmem:[#allocation2 + $0x68] sm:$0xff]
          %1263 = vrot.lane.b32.xlu0 %v1259, 8
          %v1264 = vpop.permute.xlu0 %1263
          %1265 = vrot.lane.b32.xlu0 %v1260, 8
          %v1266 = vpop.permute.xlu0 %1265
          %1269 = vst.msk [vmem:[#allocation4 + $0x50] sm:$0xff] %vm767, %v1264
          %1270 = vst.msk [vmem:[#allocation4 + $0x58] sm:$0xff] %vm767, %v1266
          %v1271 = vld [vmem:[#allocation2 + $0x70] sm:$0xff]
          %v1272 = vld [vmem:[#allocation2 + $0x78] sm:$0xff]
          %1275 = vrot.lane.b32.xlu0 %v1271, 16
          %v1276 = vpop.permute.xlu0 %1275
          %1277 = vrot.lane.b32.xlu0 %v1272, 16
          %v1278 = vpop.permute.xlu0 %1277
          %1281 = vst.msk [vmem:[#allocation4 + $0x50] sm:$0xff] %vm780, %v1276
          %1282 = vst.msk [vmem:[#allocation4 + $0x58] sm:$0xff] %vm780, %v1278
          %v1283 = vld [vmem:[#allocation3] sm:$0xff]
          %v1284 = vld [vmem:[#allocation3 + $0x8] sm:$0xff]
          %1287 = vrot.lane.b32.xlu0 %v1283, 122
          %v1288 = vpop.permute.xlu0 %1287
          %1289 = vrot.lane.b32.xlu0 %v1284, 122
          %v1290 = vpop.permute.xlu0 %1289
          %1293 = vst.msk [vmem:[#allocation5 + $0x60] sm:$0xff] %vm685, %v1288
          %1294 = vst.msk [vmem:[#allocation5 + $0x68] sm:$0xff] %vm685, %v1290
          %v1295 = vld [vmem:[#allocation2] sm:$0xff]
          %v1296 = vld [vmem:[#allocation2 + $0x8] sm:$0xff]
          %1299 = vrot.lane.b32.xlu0 %v1295, 80
          %v1300 = vpop.permute.xlu0 %1299
          %1301 = vrot.lane.b32.xlu0 %v1296, 80
          %v1302 = vpop.permute.xlu0 %1301
          %1305 = vst.msk [vmem:[#allocation4 + $0x60] sm:$0xff] %vm531, %v1300
          %1306 = vst.msk [vmem:[#allocation4 + $0x68] sm:$0xff] %vm531, %v1302
          %v1307 = vld [vmem:[#allocation2 + $0x10] sm:$0xff]
          %v1308 = vld [vmem:[#allocation2 + $0x18] sm:$0xff]
          %1311 = vrot.lane.b32.xlu0 %v1307, 88
          %v1312 = vpop.permute.xlu0 %1311
          %1313 = vrot.lane.b32.xlu0 %v1308, 88
          %v1314 = vpop.permute.xlu0 %1313
          %1317 = vst.msk [vmem:[#allocation4 + $0x60] sm:$0xff] %vm702, %v1312
          %1318 = vst.msk [vmem:[#allocation4 + $0x68] sm:$0xff] %vm702, %v1314
          %v1319 = vld [vmem:[#allocation2 + $0x20] sm:$0xff]
          %v1320 = vld [vmem:[#allocation2 + $0x28] sm:$0xff]
          %1323 = vrot.lane.b32.xlu0 %v1319, 96
          %v1324 = vpop.permute.xlu0 %1323
          %1325 = vrot.lane.b32.xlu0 %v1320, 96
          %v1326 = vpop.permute.xlu0 %1325
          %1329 = vst.msk [vmem:[#allocation4 + $0x60] sm:$0xff] %vm715, %v1324
          %1330 = vst.msk [vmem:[#allocation4 + $0x68] sm:$0xff] %vm715, %v1326
          %v1331 = vld [vmem:[#allocation2 + $0x30] sm:$0xff]
          %v1332 = vld [vmem:[#allocation2 + $0x38] sm:$0xff]
          %1335 = vrot.lane.b32.xlu0 %v1331, 104
          %v1336 = vpop.permute.xlu0 %1335
          %1337 = vrot.lane.b32.xlu0 %v1332, 104
          %v1338 = vpop.permute.xlu0 %1337
          %1341 = vst.msk [vmem:[#allocation4 + $0x60] sm:$0xff] %vm728, %v1336
          %1342 = vst.msk [vmem:[#allocation4 + $0x68] sm:$0xff] %vm728, %v1338
          %v1343 = vld [vmem:[#allocation2 + $0x40] sm:$0xff]
          %v1344 = vld [vmem:[#allocation2 + $0x48] sm:$0xff]
          %1347 = vrot.lane.b32.xlu0 %v1343, 112
          %v1348 = vpop.permute.xlu0 %1347
          %1349 = vrot.lane.b32.xlu0 %v1344, 112
          %v1350 = vpop.permute.xlu0 %1349
          %1353 = vst.msk [vmem:[#allocation4 + $0x60] sm:$0xff] %vm741, %v1348
          %1354 = vst.msk [vmem:[#allocation4 + $0x68] sm:$0xff] %vm741, %v1350
          %v1355 = vld [vmem:[#allocation2 + $0x50] sm:$0xff]
          %v1356 = vld [vmem:[#allocation2 + $0x58] sm:$0xff]
          %1359 = vrot.lane.b32.xlu0 %v1355, 120
          %v1360 = vpop.permute.xlu0 %1359
          %1361 = vrot.lane.b32.xlu0 %v1356, 120
          %v1362 = vpop.permute.xlu0 %1361
          %1365 = vst.msk [vmem:[#allocation4 + $0x60] sm:$0xff] %vm754, %v1360
          %1366 = vst.msk [vmem:[#allocation4 + $0x68] sm:$0xff] %vm754, %v1362
          %v1367 = vld [vmem:[#allocation2 + $0x60] sm:$0xff]
          %v1368 = vld [vmem:[#allocation2 + $0x68] sm:$0xff]
          %1369 = vst.msk [vmem:[#allocation4 + $0x60] sm:$0xff] %vm767, %v1367
          %1370 = vst.msk [vmem:[#allocation4 + $0x68] sm:$0xff] %vm767, %v1368
          %v1371 = vld [vmem:[#allocation2 + $0x70] sm:$0xff]
          %v1372 = vld [vmem:[#allocation2 + $0x78] sm:$0xff]
          %1375 = vrot.lane.b32.xlu0 %v1371, 8
          %v1376 = vpop.permute.xlu0 %1375
          %1377 = vrot.lane.b32.xlu0 %v1372, 8
          %v1378 = vpop.permute.xlu0 %1377
          %1381 = vst.msk [vmem:[#allocation4 + $0x60] sm:$0xff] %vm780, %v1376
          %1382 = vst.msk [vmem:[#allocation4 + $0x68] sm:$0xff] %vm780, %v1378
          %v1383 = vld [vmem:[#allocation3] sm:$0xff]
          %v1384 = vld [vmem:[#allocation3 + $0x8] sm:$0xff]
          %1387 = vrot.lane.b32.xlu0 %v1383, 121
          %v1388 = vpop.permute.xlu0 %1387
          %1389 = vrot.lane.b32.xlu0 %v1384, 121
          %v1390 = vpop.permute.xlu0 %1389
          %1393 = vst.msk [vmem:[#allocation5 + $0x70] sm:$0xff] %vm685, %v1388
          %1394 = vst.msk [vmem:[#allocation5 + $0x78] sm:$0xff] %vm685, %v1390
          %v1395 = vld [vmem:[#allocation2] sm:$0xff]
          %v1396 = vld [vmem:[#allocation2 + $0x8] sm:$0xff]
          %1399 = vrot.lane.b32.xlu0 %v1395, 72
          %v1400 = vpop.permute.xlu0 %1399
          %1401 = vrot.lane.b32.xlu0 %v1396, 72
          %v1402 = vpop.permute.xlu0 %1401
          %1405 = vst.msk [vmem:[#allocation4 + $0x70] sm:$0xff] %vm531, %v1400
          %1406 = vst.msk [vmem:[#allocation4 + $0x78] sm:$0xff] %vm531, %v1402
          %v1407 = vld [vmem:[#allocation2 + $0x10] sm:$0xff]
          %v1408 = vld [vmem:[#allocation2 + $0x18] sm:$0xff]
          %1411 = vrot.lane.b32.xlu0 %v1407, 80
          %v1412 = vpop.permute.xlu0 %1411
          %1413 = vrot.lane.b32.xlu0 %v1408, 80
          %v1414 = vpop.permute.xlu0 %1413
          %1417 = vst.msk [vmem:[#allocation4 + $0x70] sm:$0xff] %vm702, %v1412
          %1418 = vst.msk [vmem:[#allocation4 + $0x78] sm:$0xff] %vm702, %v1414
          %v1419 = vld [vmem:[#allocation2 + $0x20] sm:$0xff]
          %v1420 = vld [vmem:[#allocation2 + $0x28] sm:$0xff]
          %1423 = vrot.lane.b32.xlu0 %v1419, 88
          %v1424 = vpop.permute.xlu0 %1423
          %1425 = vrot.lane.b32.xlu0 %v1420, 88
          %v1426 = vpop.permute.xlu0 %1425
          %1429 = vst.msk [vmem:[#allocation4 + $0x70] sm:$0xff] %vm715, %v1424
          %1430 = vst.msk [vmem:[#allocation4 + $0x78] sm:$0xff] %vm715, %v1426
          %v1431 = vld [vmem:[#allocation2 + $0x30] sm:$0xff]
          %v1432 = vld [vmem:[#allocation2 + $0x38] sm:$0xff]
          %1435 = vrot.lane.b32.xlu0 %v1431, 96
          %v1436 = vpop.permute.xlu0 %1435
          %1437 = vrot.lane.b32.xlu0 %v1432, 96
          %v1438 = vpop.permute.xlu0 %1437
          %1441 = vst.msk [vmem:[#allocation4 + $0x70] sm:$0xff] %vm728, %v1436
          %1442 = vst.msk [vmem:[#allocation4 + $0x78] sm:$0xff] %vm728, %v1438
          %v1443 = vld [vmem:[#allocation2 + $0x40] sm:$0xff]
          %v1444 = vld [vmem:[#allocation2 + $0x48] sm:$0xff]
          %1447 = vrot.lane.b32.xlu0 %v1443, 104
          %v1448 = vpop.permute.xlu0 %1447
          %1449 = vrot.lane.b32.xlu0 %v1444, 104
          %v1450 = vpop.permute.xlu0 %1449
          %1453 = vst.msk [vmem:[#allocation4 + $0x70] sm:$0xff] %vm741, %v1448
          %1454 = vst.msk [vmem:[#allocation4 + $0x78] sm:$0xff] %vm741, %v1450
          %v1455 = vld [vmem:[#allocation2 + $0x50] sm:$0xff]
          %v1456 = vld [vmem:[#allocation2 + $0x58] sm:$0xff]
          %1459 = vrot.lane.b32.xlu0 %v1455, 112
          %v1460 = vpop.permute.xlu0 %1459
          %1461 = vrot.lane.b32.xlu0 %v1456, 112
          %v1462 = vpop.permute.xlu0 %1461
          %1465 = vst.msk [vmem:[#allocation4 + $0x70] sm:$0xff] %vm754, %v1460
          %1466 = vst.msk [vmem:[#allocation4 + $0x78] sm:$0xff] %vm754, %v1462
          %v1467 = vld [vmem:[#allocation2 + $0x60] sm:$0xff]
          %v1468 = vld [vmem:[#allocation2 + $0x68] sm:$0xff]
          %1471 = vrot.lane.b32.xlu0 %v1467, 120
          %v1472 = vpop.permute.xlu0 %1471
          %1473 = vrot.lane.b32.xlu0 %v1468, 120
          %v1474 = vpop.permute.xlu0 %1473
          %1477 = vst.msk [vmem:[#allocation4 + $0x70] sm:$0xff] %vm767, %v1472
          %1478 = vst.msk [vmem:[#allocation4 + $0x78] sm:$0xff] %vm767, %v1474
          %v1479 = vld [vmem:[#allocation2 + $0x70] sm:$0xff]
          %v1480 = vld [vmem:[#allocation2 + $0x78] sm:$0xff]
          %1481 = vst.msk [vmem:[#allocation4 + $0x70] sm:$0xff] %vm780, %v1479
          %1482 = vst.msk [vmem:[#allocation4 + $0x78] sm:$0xff] %vm780, %v1480
          %v1483 = vld [vmem:[#allocation3] sm:$0xff]
          %v1484 = vld [vmem:[#allocation3 + $0x8] sm:$0xff]
          %1487 = vrot.lane.b32.xlu0 %v1483, 120
          %v1488 = vpop.permute.xlu0 %1487
          %1489 = vrot.lane.b32.xlu0 %v1484, 120
          %v1490 = vpop.permute.xlu0 %1489
          %1493 = vst.msk [vmem:[#allocation5 + $0x80] sm:$0xff] %vm685, %v1488
          %1494 = vst.msk [vmem:[#allocation5 + $0x88] sm:$0xff] %vm685, %v1490
          %v1495 = vld [vmem:[#allocation2] sm:$0xff]
          %v1496 = vld [vmem:[#allocation2 + $0x8] sm:$0xff]
          %1499 = vrot.lane.b32.xlu0 %v1495, 64
          %v1500 = vpop.permute.xlu0 %1499
          %1501 = vrot.lane.b32.xlu0 %v1496, 64
          %v1502 = vpop.permute.xlu0 %1501
          %1505 = vst.msk [vmem:[#allocation4 + $0x80] sm:$0xff] %vm531, %v1500
          %1506 = vst.msk [vmem:[#allocation4 + $0x88] sm:$0xff] %vm531, %v1502
          %v1507 = vld [vmem:[#allocation2 + $0x10] sm:$0xff]
          %v1508 = vld [vmem:[#allocation2 + $0x18] sm:$0xff]
          %1511 = vrot.lane.b32.xlu0 %v1507, 72
          %v1512 = vpop.permute.xlu0 %1511
          %1513 = vrot.lane.b32.xlu0 %v1508, 72
          %v1514 = vpop.permute.xlu0 %1513
          %1517 = vst.msk [vmem:[#allocation4 + $0x80] sm:$0xff] %vm702, %v1512
          %1518 = vst.msk [vmem:[#allocation4 + $0x88] sm:$0xff] %vm702, %v1514
          %v1519 = vld [vmem:[#allocation2 + $0x20] sm:$0xff]
          %v1520 = vld [vmem:[#allocation2 + $0x28] sm:$0xff]
          %1523 = vrot.lane.b32.xlu0 %v1519, 80
          %v1524 = vpop.permute.xlu0 %1523
          %1525 = vrot.lane.b32.xlu0 %v1520, 80
          %v1526 = vpop.permute.xlu0 %1525
          %1529 = vst.msk [vmem:[#allocation4 + $0x80] sm:$0xff] %vm715, %v1524
          %1530 = vst.msk [vmem:[#allocation4 + $0x88] sm:$0xff] %vm715, %v1526
          %v1531 = vld [vmem:[#allocation2 + $0x30] sm:$0xff]
          %v1532 = vld [vmem:[#allocation2 + $0x38] sm:$0xff]
          %1535 = vrot.lane.b32.xlu0 %v1531, 88
          %v1536 = vpop.permute.xlu0 %1535
          %1537 = vrot.lane.b32.xlu0 %v1532, 88
          %v1538 = vpop.permute.xlu0 %1537
          %1541 = vst.msk [vmem:[#allocation4 + $0x80] sm:$0xff] %vm728, %v1536
          %1542 = vst.msk [vmem:[#allocation4 + $0x88] sm:$0xff] %vm728, %v1538
          %v1543 = vld [vmem:[#allocation2 + $0x40] sm:$0xff]
          %v1544 = vld [vmem:[#allocation2 + $0x48] sm:$0xff]
          %1547 = vrot.lane.b32.xlu0 %v1543, 96
          %v1548 = vpop.permute.xlu0 %1547
          %1549 = vrot.lane.b32.xlu0 %v1544, 96
          %v1550 = vpop.permute.xlu0 %1549
          %1553 = vst.msk [vmem:[#allocation4 + $0x80] sm:$0xff] %vm741, %v1548
          %1554 = vst.msk [vmem:[#allocation4 + $0x88] sm:$0xff] %vm741, %v1550
          %v1555 = vld [vmem:[#allocation2 + $0x50] sm:$0xff]
          %v1556 = vld [vmem:[#allocation2 + $0x58] sm:$0xff]
          %1559 = vrot.lane.b32.xlu0 %v1555, 104
          %v1560 = vpop.permute.xlu0 %1559
          %1561 = vrot.lane.b32.xlu0 %v1556, 104
          %v1562 = vpop.permute.xlu0 %1561
          %1565 = vst.msk [vmem:[#allocation4 + $0x80] sm:$0xff] %vm754, %v1560
          %1566 = vst.msk [vmem:[#allocation4 + $0x88] sm:$0xff] %vm754, %v1562
          %v1567 = vld [vmem:[#allocation2 + $0x60] sm:$0xff]
          %v1568 = vld [vmem:[#allocation2 + $0x68] sm:$0xff]
          %1571 = vrot.lane.b32.xlu0 %v1567, 112
          %v1572 = vpop.permute.xlu0 %1571
          %1573 = vrot.lane.b32.xlu0 %v1568, 112
          %v1574 = vpop.permute.xlu0 %1573
          %1577 = vst.msk [vmem:[#allocation4 + $0x80] sm:$0xff] %vm767, %v1572
          %1578 = vst.msk [vmem:[#allocation4 + $0x88] sm:$0xff] %vm767, %v1574
          %v1579 = vld [vmem:[#allocation2 + $0x70] sm:$0xff]
          %v1580 = vld [vmem:[#allocation2 + $0x78] sm:$0xff]
          %1583 = vrot.lane.b32.xlu0 %v1579, 120
          %v1584 = vpop.permute.xlu0 %1583
          %1585 = vrot.lane.b32.xlu0 %v1580, 120
          %v1586 = vpop.permute.xlu0 %1585
          %1589 = vst.msk [vmem:[#allocation4 + $0x80] sm:$0xff] %vm780, %v1584
          %1590 = vst.msk [vmem:[#allocation4 + $0x88] sm:$0xff] %vm780, %v1586
          %v1591 = vld [vmem:[#allocation3] sm:$0xff]
          %v1592 = vld [vmem:[#allocation3 + $0x8] sm:$0xff]
          %1595 = vrot.lane.b32.xlu0 %v1591, 119
          %v1596 = vpop.permute.xlu0 %1595
          %1597 = vrot.lane.b32.xlu0 %v1592, 119
          %v1598 = vpop.permute.xlu0 %1597
          %1601 = vst.msk [vmem:[#allocation5 + $0x90] sm:$0xff] %vm685, %v1596
          %1602 = vst.msk [vmem:[#allocation5 + $0x98] sm:$0xff] %vm685, %v1598
          %v1603 = vld [vmem:[#allocation2] sm:$0xff]
          %v1604 = vld [vmem:[#allocation2 + $0x8] sm:$0xff]
          %1607 = vrot.lane.b32.xlu0 %v1603, 56
          %v1608 = vpop.permute.xlu0 %1607
          %1609 = vrot.lane.b32.xlu0 %v1604, 56
          %v1610 = vpop.permute.xlu0 %1609
          %1613 = vst.msk [vmem:[#allocation4 + $0x90] sm:$0xff] %vm531, %v1608
          %1614 = vst.msk [vmem:[#allocation4 + $0x98] sm:$0xff] %vm531, %v1610
          %v1615 = vld [vmem:[#allocation2 + $0x10] sm:$0xff]
          %v1616 = vld [vmem:[#allocation2 + $0x18] sm:$0xff]
          %1619 = vrot.lane.b32.xlu0 %v1615, 64
          %v1620 = vpop.permute.xlu0 %1619
          %1621 = vrot.lane.b32.xlu0 %v1616, 64
          %v1622 = vpop.permute.xlu0 %1621
          %1625 = vst.msk [vmem:[#allocation4 + $0x90] sm:$0xff] %vm702, %v1620
          %1626 = vst.msk [vmem:[#allocation4 + $0x98] sm:$0xff] %vm702, %v1622
          %v1627 = vld [vmem:[#allocation2 + $0x20] sm:$0xff]
          %v1628 = vld [vmem:[#allocation2 + $0x28] sm:$0xff]
          %1631 = vrot.lane.b32.xlu0 %v1627, 72
          %v1632 = vpop.permute.xlu0 %1631
          %1633 = vrot.lane.b32.xlu0 %v1628, 72
          %v1634 = vpop.permute.xlu0 %1633
          %1637 = vst.msk [vmem:[#allocation4 + $0x90] sm:$0xff] %vm715, %v1632
          %1638 = vst.msk [vmem:[#allocation4 + $0x98] sm:$0xff] %vm715, %v1634
          %v1639 = vld [vmem:[#allocation2 + $0x30] sm:$0xff]
          %v1640 = vld [vmem:[#allocation2 + $0x38] sm:$0xff]
          %1643 = vrot.lane.b32.xlu0 %v1639, 80
          %v1644 = vpop.permute.xlu0 %1643
          %1645 = vrot.lane.b32.xlu0 %v1640, 80
          %v1646 = vpop.permute.xlu0 %1645
          %1649 = vst.msk [vmem:[#allocation4 + $0x90] sm:$0xff] %vm728, %v1644
          %1650 = vst.msk [vmem:[#allocation4 + $0x98] sm:$0xff] %vm728, %v1646
          %v1651 = vld [vmem:[#allocation2 + $0x40] sm:$0xff]
          %v1652 = vld [vmem:[#allocation2 + $0x48] sm:$0xff]
          %1655 = vrot.lane.b32.xlu0 %v1651, 88
          %v1656 = vpop.permute.xlu0 %1655
          %1657 = vrot.lane.b32.xlu0 %v1652, 88
          %v1658 = vpop.permute.xlu0 %1657
          %1661 = vst.msk [vmem:[#allocation4 + $0x90] sm:$0xff] %vm741, %v1656
          %1662 = vst.msk [vmem:[#allocation4 + $0x98] sm:$0xff] %vm741, %v1658
          %v1663 = vld [vmem:[#allocation2 + $0x50] sm:$0xff]
          %v1664 = vld [vmem:[#allocation2 + $0x58] sm:$0xff]
          %1667 = vrot.lane.b32.xlu0 %v1663, 96
          %v1668 = vpop.permute.xlu0 %1667
          %1669 = vrot.lane.b32.xlu0 %v1664, 96
          %v1670 = vpop.permute.xlu0 %1669
          %1673 = vst.msk [vmem:[#allocation4 + $0x90] sm:$0xff] %vm754, %v1668
          %1674 = vst.msk [vmem:[#allocation4 + $0x98] sm:$0xff] %vm754, %v1670
          %v1675 = vld [vmem:[#allocation2 + $0x60] sm:$0xff]
          %v1676 = vld [vmem:[#allocation2 + $0x68] sm:$0xff]
          %1679 = vrot.lane.b32.xlu0 %v1675, 104
          %v1680 = vpop.permute.xlu0 %1679
          %1681 = vrot.lane.b32.xlu0 %v1676, 104
          %v1682 = vpop.permute.xlu0 %1681
          %1685 = vst.msk [vmem:[#allocation4 + $0x90] sm:$0xff] %vm767, %v1680
          %1686 = vst.msk [vmem:[#allocation4 + $0x98] sm:$0xff] %vm767, %v1682
          %v1687 = vld [vmem:[#allocation2 + $0x70] sm:$0xff]
          %v1688 = vld [vmem:[#allocation2 + $0x78] sm:$0xff]
          %1691 = vrot.lane.b32.xlu0 %v1687, 112
          %v1692 = vpop.permute.xlu0 %1691
          %1693 = vrot.lane.b32.xlu0 %v1688, 112
          %v1694 = vpop.permute.xlu0 %1693
          %1697 = vst.msk [vmem:[#allocation4 + $0x90] sm:$0xff] %vm780, %v1692
          %1698 = vst.msk [vmem:[#allocation4 + $0x98] sm:$0xff] %vm780, %v1694
          %v1699 = vld [vmem:[#allocation3] sm:$0xff]
          %v1700 = vld [vmem:[#allocation3 + $0x8] sm:$0xff]
          %1703 = vrot.lane.b32.xlu0 %v1699, 118
          %v1704 = vpop.permute.xlu0 %1703
          %1705 = vrot.lane.b32.xlu0 %v1700, 118
          %v1706 = vpop.permute.xlu0 %1705
          %1709 = vst.msk [vmem:[#allocation5 + $0xa0] sm:$0xff] %vm685, %v1704
          %1710 = vst.msk [vmem:[#allocation5 + $0xa8] sm:$0xff] %vm685, %v1706
          %v1711 = vld [vmem:[#allocation2] sm:$0xff]
          %v1712 = vld [vmem:[#allocation2 + $0x8] sm:$0xff]
          %1715 = vrot.lane.b32.xlu0 %v1711, 48
          %v1716 = vpop.permute.xlu0 %1715
          %1717 = vrot.lane.b32.xlu0 %v1712, 48
          %v1718 = vpop.permute.xlu0 %1717
          %1721 = vst.msk [vmem:[#allocation4 + $0xa0] sm:$0xff] %vm531, %v1716
          %1722 = vst.msk [vmem:[#allocation4 + $0xa8] sm:$0xff] %vm531, %v1718
          %v1723 = vld [vmem:[#allocation2 + $0x10] sm:$0xff]
          %v1724 = vld [vmem:[#allocation2 + $0x18] sm:$0xff]
          %1727 = vrot.lane.b32.xlu0 %v1723, 56
          %v1728 = vpop.permute.xlu0 %1727
          %1729 = vrot.lane.b32.xlu0 %v1724, 56
          %v1730 = vpop.permute.xlu0 %1729
          %1733 = vst.msk [vmem:[#allocation4 + $0xa0] sm:$0xff] %vm702, %v1728
          %1734 = vst.msk [vmem:[#allocation4 + $0xa8] sm:$0xff] %vm702, %v1730
          %v1735 = vld [vmem:[#allocation2 + $0x20] sm:$0xff]
          %v1736 = vld [vmem:[#allocation2 + $0x28] sm:$0xff]
          %1739 = vrot.lane.b32.xlu0 %v1735, 64
          %v1740 = vpop.permute.xlu0 %1739
          %1741 = vrot.lane.b32.xlu0 %v1736, 64
          %v1742 = vpop.permute.xlu0 %1741
          %1745 = vst.msk [vmem:[#allocation4 + $0xa0] sm:$0xff] %vm715, %v1740
          %1746 = vst.msk [vmem:[#allocation4 + $0xa8] sm:$0xff] %vm715, %v1742
          %v1747 = vld [vmem:[#allocation2 + $0x30] sm:$0xff]
          %v1748 = vld [vmem:[#allocation2 + $0x38] sm:$0xff]
          %1751 = vrot.lane.b32.xlu0 %v1747, 72
          %v1752 = vpop.permute.xlu0 %1751
          %1753 = vrot.lane.b32.xlu0 %v1748, 72
          %v1754 = vpop.permute.xlu0 %1753
          %1757 = vst.msk [vmem:[#allocation4 + $0xa0] sm:$0xff] %vm728, %v1752
          %1758 = vst.msk [vmem:[#allocation4 + $0xa8] sm:$0xff] %vm728, %v1754
          %v1759 = vld [vmem:[#allocation2 + $0x40] sm:$0xff]
          %v1760 = vld [vmem:[#allocation2 + $0x48] sm:$0xff]
          %1763 = vrot.lane.b32.xlu0 %v1759, 80
          %v1764 = vpop.permute.xlu0 %1763
          %1765 = vrot.lane.b32.xlu0 %v1760, 80
          %v1766 = vpop.permute.xlu0 %1765
          %1769 = vst.msk [vmem:[#allocation4 + $0xa0] sm:$0xff] %vm741, %v1764
          %1770 = vst.msk [vmem:[#allocation4 + $0xa8] sm:$0xff] %vm741, %v1766
          %v1771 = vld [vmem:[#allocation2 + $0x50] sm:$0xff]
          %v1772 = vld [vmem:[#allocation2 + $0x58] sm:$0xff]
          %1775 = vrot.lane.b32.xlu0 %v1771, 88
          %v1776 = vpop.permute.xlu0 %1775
          %1777 = vrot.lane.b32.xlu0 %v1772, 88
          %v1778 = vpop.permute.xlu0 %1777
          %1781 = vst.msk [vmem:[#allocation4 + $0xa0] sm:$0xff] %vm754, %v1776
          %1782 = vst.msk [vmem:[#allocation4 + $0xa8] sm:$0xff] %vm754, %v1778
          %v1783 = vld [vmem:[#allocation2 + $0x60] sm:$0xff]
          %v1784 = vld [vmem:[#allocation2 + $0x68] sm:$0xff]
          %1787 = vrot.lane.b32.xlu0 %v1783, 96
          %v1788 = vpop.permute.xlu0 %1787
          %1789 = vrot.lane.b32.xlu0 %v1784, 96
          %v1790 = vpop.permute.xlu0 %1789
          %1793 = vst.msk [vmem:[#allocation4 + $0xa0] sm:$0xff] %vm767, %v1788
          %1794 = vst.msk [vmem:[#allocation4 + $0xa8] sm:$0xff] %vm767, %v1790
          %v1795 = vld [vmem:[#allocation2 + $0x70] sm:$0xff]
          %v1796 = vld [vmem:[#allocation2 + $0x78] sm:$0xff]
          %1799 = vrot.lane.b32.xlu0 %v1795, 104
          %v1800 = vpop.permute.xlu0 %1799
          %1801 = vrot.lane.b32.xlu0 %v1796, 104
          %v1802 = vpop.permute.xlu0 %1801
          %1805 = vst.msk [vmem:[#allocation4 + $0xa0] sm:$0xff] %vm780, %v1800
          %1806 = vst.msk [vmem:[#allocation4 + $0xa8] sm:$0xff] %vm780, %v1802
          %v1807 = vld [vmem:[#allocation3] sm:$0xff]
          %v1808 = vld [vmem:[#allocation3 + $0x8] sm:$0xff]
          %1811 = vrot.lane.b32.xlu0 %v1807, 117
          %v1812 = vpop.permute.xlu0 %1811
          %1813 = vrot.lane.b32.xlu0 %v1808, 117
          %v1814 = vpop.permute.xlu0 %1813
          %1817 = vst.msk [vmem:[#allocation5 + $0xb0] sm:$0xff] %vm685, %v1812
          %1818 = vst.msk [vmem:[#allocation5 + $0xb8] sm:$0xff] %vm685, %v1814
          %v1819 = vld [vmem:[#allocation2] sm:$0xff]
          %v1820 = vld [vmem:[#allocation2 + $0x8] sm:$0xff]
          %1823 = vrot.lane.b32.xlu0 %v1819, 40
          %v1824 = vpop.permute.xlu0 %1823
          %1825 = vrot.lane.b32.xlu0 %v1820, 40
          %v1826 = vpop.permute.xlu0 %1825
          %1829 = vst.msk [vmem:[#allocation4 + $0xb0] sm:$0xff] %vm531, %v1824
          %1830 = vst.msk [vmem:[#allocation4 + $0xb8] sm:$0xff] %vm531, %v1826
          %v1831 = vld [vmem:[#allocation2 + $0x10] sm:$0xff]
          %v1832 = vld [vmem:[#allocation2 + $0x18] sm:$0xff]
          %1835 = vrot.lane.b32.xlu0 %v1831, 48
          %v1836 = vpop.permute.xlu0 %1835
          %1837 = vrot.lane.b32.xlu0 %v1832, 48
          %v1838 = vpop.permute.xlu0 %1837
          %1841 = vst.msk [vmem:[#allocation4 + $0xb0] sm:$0xff] %vm702, %v1836
          %1842 = vst.msk [vmem:[#allocation4 + $0xb8] sm:$0xff] %vm702, %v1838
          %v1843 = vld [vmem:[#allocation2 + $0x20] sm:$0xff]
          %v1844 = vld [vmem:[#allocation2 + $0x28] sm:$0xff]
          %1847 = vrot.lane.b32.xlu0 %v1843, 56
          %v1848 = vpop.permute.xlu0 %1847
          %1849 = vrot.lane.b32.xlu0 %v1844, 56
          %v1850 = vpop.permute.xlu0 %1849
          %1853 = vst.msk [vmem:[#allocation4 + $0xb0] sm:$0xff] %vm715, %v1848
          %1854 = vst.msk [vmem:[#allocation4 + $0xb8] sm:$0xff] %vm715, %v1850
          %v1855 = vld [vmem:[#allocation2 + $0x30] sm:$0xff]
          %v1856 = vld [vmem:[#allocation2 + $0x38] sm:$0xff]
          %1859 = vrot.lane.b32.xlu0 %v1855, 64
          %v1860 = vpop.permute.xlu0 %1859
          %1861 = vrot.lane.b32.xlu0 %v1856, 64
          %v1862 = vpop.permute.xlu0 %1861
          %1865 = vst.msk [vmem:[#allocation4 + $0xb0] sm:$0xff] %vm728, %v1860
          %1866 = vst.msk [vmem:[#allocation4 + $0xb8] sm:$0xff] %vm728, %v1862
          %v1867 = vld [vmem:[#allocation2 + $0x40] sm:$0xff]
          %v1868 = vld [vmem:[#allocation2 + $0x48] sm:$0xff]
          %1871 = vrot.lane.b32.xlu0 %v1867, 72
          %v1872 = vpop.permute.xlu0 %1871
          %1873 = vrot.lane.b32.xlu0 %v1868, 72
          %v1874 = vpop.permute.xlu0 %1873
          %1877 = vst.msk [vmem:[#allocation4 + $0xb0] sm:$0xff] %vm741, %v1872
          %1878 = vst.msk [vmem:[#allocation4 + $0xb8] sm:$0xff] %vm741, %v1874
          %v1879 = vld [vmem:[#allocation2 + $0x50] sm:$0xff]
          %v1880 = vld [vmem:[#allocation2 + $0x58] sm:$0xff]
          %1883 = vrot.lane.b32.xlu0 %v1879, 80
          %v1884 = vpop.permute.xlu0 %1883
          %1885 = vrot.lane.b32.xlu0 %v1880, 80
          %v1886 = vpop.permute.xlu0 %1885
          %1889 = vst.msk [vmem:[#allocation4 + $0xb0] sm:$0xff] %vm754, %v1884
          %1890 = vst.msk [vmem:[#allocation4 + $0xb8] sm:$0xff] %vm754, %v1886
          %v1891 = vld [vmem:[#allocation2 + $0x60] sm:$0xff]
          %v1892 = vld [vmem:[#allocation2 + $0x68] sm:$0xff]
          %1895 = vrot.lane.b32.xlu0 %v1891, 88
          %v1896 = vpop.permute.xlu0 %1895
          %1897 = vrot.lane.b32.xlu0 %v1892, 88
          %v1898 = vpop.permute.xlu0 %1897
          %1901 = vst.msk [vmem:[#allocation4 + $0xb0] sm:$0xff] %vm767, %v1896
          %1902 = vst.msk [vmem:[#allocation4 + $0xb8] sm:$0xff] %vm767, %v1898
          %v1903 = vld [vmem:[#allocation2 + $0x70] sm:$0xff]
          %v1904 = vld [vmem:[#allocation2 + $0x78] sm:$0xff]
          %1907 = vrot.lane.b32.xlu0 %v1903, 96
          %v1908 = vpop.permute.xlu0 %1907
          %1909 = vrot.lane.b32.xlu0 %v1904, 96
          %v1910 = vpop.permute.xlu0 %1909
          %1913 = vst.msk [vmem:[#allocation4 + $0xb0] sm:$0xff] %vm780, %v1908
          %1914 = vst.msk [vmem:[#allocation4 + $0xb8] sm:$0xff] %vm780, %v1910
          %v1915 = vld [vmem:[#allocation3] sm:$0xff]
          %v1916 = vld [vmem:[#allocation3 + $0x8] sm:$0xff]
          %1919 = vrot.lane.b32.xlu0 %v1915, 116
          %v1920 = vpop.permute.xlu0 %1919
          %1921 = vrot.lane.b32.xlu0 %v1916, 116
          %v1922 = vpop.permute.xlu0 %1921
          %1925 = vst.msk [vmem:[#allocation5 + $0xc0] sm:$0xff] %vm685, %v1920
          %1926 = vst.msk [vmem:[#allocation5 + $0xc8] sm:$0xff] %vm685, %v1922
          %v1927 = vld [vmem:[#allocation2] sm:$0xff]
          %v1928 = vld [vmem:[#allocation2 + $0x8] sm:$0xff]
          %1931 = vrot.lane.b32.xlu0 %v1927, 32
          %v1932 = vpop.permute.xlu0 %1931
          %1933 = vrot.lane.b32.xlu0 %v1928, 32
          %v1934 = vpop.permute.xlu0 %1933
          %1937 = vst.msk [vmem:[#allocation4 + $0xc0] sm:$0xff] %vm531, %v1932
          %1938 = vst.msk [vmem:[#allocation4 + $0xc8] sm:$0xff] %vm531, %v1934
          %v1939 = vld [vmem:[#allocation2 + $0x10] sm:$0xff]
          %v1940 = vld [vmem:[#allocation2 + $0x18] sm:$0xff]
          %1943 = vrot.lane.b32.xlu0 %v1939, 40
          %v1944 = vpop.permute.xlu0 %1943
          %1945 = vrot.lane.b32.xlu0 %v1940, 40
          %v1946 = vpop.permute.xlu0 %1945
          %1949 = vst.msk [vmem:[#allocation4 + $0xc0] sm:$0xff] %vm702, %v1944
          %1950 = vst.msk [vmem:[#allocation4 + $0xc8] sm:$0xff] %vm702, %v1946
          %v1951 = vld [vmem:[#allocation2 + $0x20] sm:$0xff]
          %v1952 = vld [vmem:[#allocation2 + $0x28] sm:$0xff]
          %1955 = vrot.lane.b32.xlu0 %v1951, 48
          %v1956 = vpop.permute.xlu0 %1955
          %1957 = vrot.lane.b32.xlu0 %v1952, 48
          %v1958 = vpop.permute.xlu0 %1957
          %1961 = vst.msk [vmem:[#allocation4 + $0xc0] sm:$0xff] %vm715, %v1956
          %1962 = vst.msk [vmem:[#allocation4 + $0xc8] sm:$0xff] %vm715, %v1958
          %v1963 = vld [vmem:[#allocation2 + $0x30] sm:$0xff]
          %v1964 = vld [vmem:[#allocation2 + $0x38] sm:$0xff]
          %1967 = vrot.lane.b32.xlu0 %v1963, 56
          %v1968 = vpop.permute.xlu0 %1967
          %1969 = vrot.lane.b32.xlu0 %v1964, 56
          %v1970 = vpop.permute.xlu0 %1969
          %1973 = vst.msk [vmem:[#allocation4 + $0xc0] sm:$0xff] %vm728, %v1968
          %1974 = vst.msk [vmem:[#allocation4 + $0xc8] sm:$0xff] %vm728, %v1970
          %v1975 = vld [vmem:[#allocation2 + $0x40] sm:$0xff]
          %v1976 = vld [vmem:[#allocation2 + $0x48] sm:$0xff]
          %1979 = vrot.lane.b32.xlu0 %v1975, 64
          %v1980 = vpop.permute.xlu0 %1979
          %1981 = vrot.lane.b32.xlu0 %v1976, 64
          %v1982 = vpop.permute.xlu0 %1981
          %1985 = vst.msk [vmem:[#allocation4 + $0xc0] sm:$0xff] %vm741, %v1980
          %1986 = vst.msk [vmem:[#allocation4 + $0xc8] sm:$0xff] %vm741, %v1982
          %v1987 = vld [vmem:[#allocation2 + $0x50] sm:$0xff]
          %v1988 = vld [vmem:[#allocation2 + $0x58] sm:$0xff]
          %1991 = vrot.lane.b32.xlu0 %v1987, 72
          %v1992 = vpop.permute.xlu0 %1991
          %1993 = vrot.lane.b32.xlu0 %v1988, 72
          %v1994 = vpop.permute.xlu0 %1993
          %1997 = vst.msk [vmem:[#allocation4 + $0xc0] sm:$0xff] %vm754, %v1992
          %1998 = vst.msk [vmem:[#allocation4 + $0xc8] sm:$0xff] %vm754, %v1994
          %v1999 = vld [vmem:[#allocation2 + $0x60] sm:$0xff]
          %v2000 = vld [vmem:[#allocation2 + $0x68] sm:$0xff]
          %2003 = vrot.lane.b32.xlu0 %v1999, 80
          %v2004 = vpop.permute.xlu0 %2003
          %2005 = vrot.lane.b32.xlu0 %v2000, 80
          %v2006 = vpop.permute.xlu0 %2005
          %2009 = vst.msk [vmem:[#allocation4 + $0xc0] sm:$0xff] %vm767, %v2004
          %2010 = vst.msk [vmem:[#allocation4 + $0xc8] sm:$0xff] %vm767, %v2006
          %v2011 = vld [vmem:[#allocation2 + $0x70] sm:$0xff]
          %v2012 = vld [vmem:[#allocation2 + $0x78] sm:$0xff]
          %2015 = vrot.lane.b32.xlu0 %v2011, 88
          %v2016 = vpop.permute.xlu0 %2015
          %2017 = vrot.lane.b32.xlu0 %v2012, 88
          %v2018 = vpop.permute.xlu0 %2017
          %2021 = vst.msk [vmem:[#allocation4 + $0xc0] sm:$0xff] %vm780, %v2016
          %2022 = vst.msk [vmem:[#allocation4 + $0xc8] sm:$0xff] %vm780, %v2018
          %v2023 = vld [vmem:[#allocation3] sm:$0xff]
          %v2024 = vld [vmem:[#allocation3 + $0x8] sm:$0xff]
          %2027 = vrot.lane.b32.xlu0 %v2023, 115
          %v2028 = vpop.permute.xlu0 %2027
          %2029 = vrot.lane.b32.xlu0 %v2024, 115
          %v2030 = vpop.permute.xlu0 %2029
          %2033 = vst.msk [vmem:[#allocation5 + $0xd0] sm:$0xff] %vm685, %v2028
          %2034 = vst.msk [vmem:[#allocation5 + $0xd8] sm:$0xff] %vm685, %v2030
          %v2035 = vld [vmem:[#allocation2] sm:$0xff]
          %v2036 = vld [vmem:[#allocation2 + $0x8] sm:$0xff]
          %2039 = vrot.lane.b32.xlu0 %v2035, 24
          %v2040 = vpop.permute.xlu0 %2039
          %2041 = vrot.lane.b32.xlu0 %v2036, 24
          %v2042 = vpop.permute.xlu0 %2041
          %2045 = vst.msk [vmem:[#allocation4 + $0xd0] sm:$0xff] %vm531, %v2040
          %2046 = vst.msk [vmem:[#allocation4 + $0xd8] sm:$0xff] %vm531, %v2042
          %v2047 = vld [vmem:[#allocation2 + $0x10] sm:$0xff]
          %v2048 = vld [vmem:[#allocation2 + $0x18] sm:$0xff]
          %2051 = vrot.lane.b32.xlu0 %v2047, 32
          %v2052 = vpop.permute.xlu0 %2051
          %2053 = vrot.lane.b32.xlu0 %v2048, 32
          %v2054 = vpop.permute.xlu0 %2053
          %2057 = vst.msk [vmem:[#allocation4 + $0xd0] sm:$0xff] %vm702, %v2052
          %2058 = vst.msk [vmem:[#allocation4 + $0xd8] sm:$0xff] %vm702, %v2054
          %v2059 = vld [vmem:[#allocation2 + $0x20] sm:$0xff]
          %v2060 = vld [vmem:[#allocation2 + $0x28] sm:$0xff]
          %2063 = vrot.lane.b32.xlu0 %v2059, 40
          %v2064 = vpop.permute.xlu0 %2063
          %2065 = vrot.lane.b32.xlu0 %v2060, 40
          %v2066 = vpop.permute.xlu0 %2065
          %2069 = vst.msk [vmem:[#allocation4 + $0xd0] sm:$0xff] %vm715, %v2064
          %2070 = vst.msk [vmem:[#allocation4 + $0xd8] sm:$0xff] %vm715, %v2066
          %v2071 = vld [vmem:[#allocation2 + $0x30] sm:$0xff]
          %v2072 = vld [vmem:[#allocation2 + $0x38] sm:$0xff]
          %2075 = vrot.lane.b32.xlu0 %v2071, 48
          %v2076 = vpop.permute.xlu0 %2075
          %2077 = vrot.lane.b32.xlu0 %v2072, 48
          %v2078 = vpop.permute.xlu0 %2077
          %2081 = vst.msk [vmem:[#allocation4 + $0xd0] sm:$0xff] %vm728, %v2076
          %2082 = vst.msk [vmem:[#allocation4 + $0xd8] sm:$0xff] %vm728, %v2078
          %v2083 = vld [vmem:[#allocation2 + $0x40] sm:$0xff]
          %v2084 = vld [vmem:[#allocation2 + $0x48] sm:$0xff]
          %2087 = vrot.lane.b32.xlu0 %v2083, 56
          %v2088 = vpop.permute.xlu0 %2087
          %2089 = vrot.lane.b32.xlu0 %v2084, 56
          %v2090 = vpop.permute.xlu0 %2089
          %2093 = vst.msk [vmem:[#allocation4 + $0xd0] sm:$0xff] %vm741, %v2088
          %2094 = vst.msk [vmem:[#allocation4 + $0xd8] sm:$0xff] %vm741, %v2090
          %v2095 = vld [vmem:[#allocation2 + $0x50] sm:$0xff]
          %v2096 = vld [vmem:[#allocation2 + $0x58] sm:$0xff]
          %2099 = vrot.lane.b32.xlu0 %v2095, 64
          %v2100 = vpop.permute.xlu0 %2099
          %2101 = vrot.lane.b32.xlu0 %v2096, 64
          %v2102 = vpop.permute.xlu0 %2101
          %2105 = vst.msk [vmem:[#allocation4 + $0xd0] sm:$0xff] %vm754, %v2100
          %2106 = vst.msk [vmem:[#allocation4 + $0xd8] sm:$0xff] %vm754, %v2102
          %v2107 = vld [vmem:[#allocation2 + $0x60] sm:$0xff]
          %v2108 = vld [vmem:[#allocation2 + $0x68] sm:$0xff]
          %2111 = vrot.lane.b32.xlu0 %v2107, 72
          %v2112 = vpop.permute.xlu0 %2111
          %2113 = vrot.lane.b32.xlu0 %v2108, 72
          %v2114 = vpop.permute.xlu0 %2113
          %2117 = vst.msk [vmem:[#allocation4 + $0xd0] sm:$0xff] %vm767, %v2112
          %2118 = vst.msk [vmem:[#allocation4 + $0xd8] sm:$0xff] %vm767, %v2114
          %v2119 = vld [vmem:[#allocation2 + $0x70] sm:$0xff]
          %v2120 = vld [vmem:[#allocation2 + $0x78] sm:$0xff]
          %2123 = vrot.lane.b32.xlu0 %v2119, 80
          %v2124 = vpop.permute.xlu0 %2123
          %2125 = vrot.lane.b32.xlu0 %v2120, 80
          %v2126 = vpop.permute.xlu0 %2125
          %2129 = vst.msk [vmem:[#allocation4 + $0xd0] sm:$0xff] %vm780, %v2124
          %2130 = vst.msk [vmem:[#allocation4 + $0xd8] sm:$0xff] %vm780, %v2126
          %v2131 = vld [vmem:[#allocation3] sm:$0xff]
          %v2132 = vld [vmem:[#allocation3 + $0x8] sm:$0xff]
          %2135 = vrot.lane.b32.xlu0 %v2131, 114
          %v2136 = vpop.permute.xlu0 %2135
          %2137 = vrot.lane.b32.xlu0 %v2132, 114
          %v2138 = vpop.permute.xlu0 %2137
          %2141 = vst.msk [vmem:[#allocation5 + $0xe0] sm:$0xff] %vm685, %v2136
          %2142 = vst.msk [vmem:[#allocation5 + $0xe8] sm:$0xff] %vm685, %v2138
          %v2143 = vld [vmem:[#allocation2] sm:$0xff]
          %v2144 = vld [vmem:[#allocation2 + $0x8] sm:$0xff]
          %2147 = vrot.lane.b32.xlu0 %v2143, 16
          %v2148 = vpop.permute.xlu0 %2147
          %2149 = vrot.lane.b32.xlu0 %v2144, 16
          %v2150 = vpop.permute.xlu0 %2149
          %2153 = vst.msk [vmem:[#allocation4 + $0xe0] sm:$0xff] %vm531, %v2148
          %2154 = vst.msk [vmem:[#allocation4 + $0xe8] sm:$0xff] %vm531, %v2150
          %v2155 = vld [vmem:[#allocation2 + $0x10] sm:$0xff]
          %v2156 = vld [vmem:[#allocation2 + $0x18] sm:$0xff]
          %2159 = vrot.lane.b32.xlu0 %v2155, 24
          %v2160 = vpop.permute.xlu0 %2159
          %2161 = vrot.lane.b32.xlu0 %v2156, 24
          %v2162 = vpop.permute.xlu0 %2161
          %2165 = vst.msk [vmem:[#allocation4 + $0xe0] sm:$0xff] %vm702, %v2160
          %2166 = vst.msk [vmem:[#allocation4 + $0xe8] sm:$0xff] %vm702, %v2162
          %v2167 = vld [vmem:[#allocation2 + $0x20] sm:$0xff]
          %v2168 = vld [vmem:[#allocation2 + $0x28] sm:$0xff]
          %2171 = vrot.lane.b32.xlu0 %v2167, 32
          %v2172 = vpop.permute.xlu0 %2171
          %2173 = vrot.lane.b32.xlu0 %v2168, 32
          %v2174 = vpop.permute.xlu0 %2173
          %2177 = vst.msk [vmem:[#allocation4 + $0xe0] sm:$0xff] %vm715, %v2172
          %2178 = vst.msk [vmem:[#allocation4 + $0xe8] sm:$0xff] %vm715, %v2174
          %v2179 = vld [vmem:[#allocation2 + $0x30] sm:$0xff]
          %v2180 = vld [vmem:[#allocation2 + $0x38] sm:$0xff]
          %2183 = vrot.lane.b32.xlu0 %v2179, 40
          %v2184 = vpop.permute.xlu0 %2183
          %2185 = vrot.lane.b32.xlu0 %v2180, 40
          %v2186 = vpop.permute.xlu0 %2185
          %2189 = vst.msk [vmem:[#allocation4 + $0xe0] sm:$0xff] %vm728, %v2184
          %2190 = vst.msk [vmem:[#allocation4 + $0xe8] sm:$0xff] %vm728, %v2186
          %v2191 = vld [vmem:[#allocation2 + $0x40] sm:$0xff]
          %v2192 = vld [vmem:[#allocation2 + $0x48] sm:$0xff]
          %2195 = vrot.lane.b32.xlu0 %v2191, 48
          %v2196 = vpop.permute.xlu0 %2195
          %2197 = vrot.lane.b32.xlu0 %v2192, 48
          %v2198 = vpop.permute.xlu0 %2197
          %2201 = vst.msk [vmem:[#allocation4 + $0xe0] sm:$0xff] %vm741, %v2196
          %2202 = vst.msk [vmem:[#allocation4 + $0xe8] sm:$0xff] %vm741, %v2198
          %v2203 = vld [vmem:[#allocation2 + $0x50] sm:$0xff]
          %v2204 = vld [vmem:[#allocation2 + $0x58] sm:$0xff]
          %2207 = vrot.lane.b32.xlu0 %v2203, 56
          %v2208 = vpop.permute.xlu0 %2207
          %2209 = vrot.lane.b32.xlu0 %v2204, 56
          %v2210 = vpop.permute.xlu0 %2209
          %2213 = vst.msk [vmem:[#allocation4 + $0xe0] sm:$0xff] %vm754, %v2208
          %2214 = vst.msk [vmem:[#allocation4 + $0xe8] sm:$0xff] %vm754, %v2210
          %v2215 = vld [vmem:[#allocation2 + $0x60] sm:$0xff]
          %v2216 = vld [vmem:[#allocation2 + $0x68] sm:$0xff]
          %2219 = vrot.lane.b32.xlu0 %v2215, 64
          %v2220 = vpop.permute.xlu0 %2219
          %2221 = vrot.lane.b32.xlu0 %v2216, 64
          %v2222 = vpop.permute.xlu0 %2221
          %2225 = vst.msk [vmem:[#allocation4 + $0xe0] sm:$0xff] %vm767, %v2220
          %2226 = vst.msk [vmem:[#allocation4 + $0xe8] sm:$0xff] %vm767, %v2222
          %v2227 = vld [vmem:[#allocation2 + $0x70] sm:$0xff]
          %v2228 = vld [vmem:[#allocation2 + $0x78] sm:$0xff]
          %2231 = vrot.lane.b32.xlu0 %v2227, 72
          %v2232 = vpop.permute.xlu0 %2231
          %2233 = vrot.lane.b32.xlu0 %v2228, 72
          %v2234 = vpop.permute.xlu0 %2233
          %2237 = vst.msk [vmem:[#allocation4 + $0xe0] sm:$0xff] %vm780, %v2232
          %2238 = vst.msk [vmem:[#allocation4 + $0xe8] sm:$0xff] %vm780, %v2234
          %v2239 = vld [vmem:[#allocation3] sm:$0xff]
          %v2240 = vld [vmem:[#allocation3 + $0x8] sm:$0xff]
          %2243 = vrot.lane.b32.xlu0 %v2239, 113
          %v2244 = vpop.permute.xlu0 %2243
          %2245 = vrot.lane.b32.xlu0 %v2240, 113
          %v2246 = vpop.permute.xlu0 %2245
          %2249 = vst.msk [vmem:[#allocation5 + $0xf0] sm:$0xff] %vm685, %v2244
          %2250 = vst.msk [vmem:[#allocation5 + $0xf8] sm:$0xff] %vm685, %v2246
          %v2251 = vld [vmem:[#allocation2] sm:$0xff]
          %v2252 = vld [vmem:[#allocation2 + $0x8] sm:$0xff]
          %2255 = vrot.lane.b32.xlu0 %v2251, 8
          %v2256 = vpop.permute.xlu0 %2255
          %2257 = vrot.lane.b32.xlu0 %v2252, 8
          %v2258 = vpop.permute.xlu0 %2257
          %2261 = vst.msk [vmem:[#allocation4 + $0xf0] sm:$0xff] %vm531, %v2256
          %2262 = vst.msk [vmem:[#allocation4 + $0xf8] sm:$0xff] %vm531, %v2258
          %v2263 = vld [vmem:[#allocation2 + $0x10] sm:$0xff]
          %v2264 = vld [vmem:[#allocation2 + $0x18] sm:$0xff]
          %2267 = vrot.lane.b32.xlu0 %v2263, 16
          %v2268 = vpop.permute.xlu0 %2267
          %2269 = vrot.lane.b32.xlu0 %v2264, 16
          %v2270 = vpop.permute.xlu0 %2269
          %2273 = vst.msk [vmem:[#allocation4 + $0xf0] sm:$0xff] %vm702, %v2268
          %2274 = vst.msk [vmem:[#allocation4 + $0xf8] sm:$0xff] %vm702, %v2270
          %v2275 = vld [vmem:[#allocation2 + $0x20] sm:$0xff]
          %v2276 = vld [vmem:[#allocation2 + $0x28] sm:$0xff]
          %2279 = vrot.lane.b32.xlu0 %v2275, 24
          %v2280 = vpop.permute.xlu0 %2279
          %2281 = vrot.lane.b32.xlu0 %v2276, 24
          %v2282 = vpop.permute.xlu0 %2281
          %2285 = vst.msk [vmem:[#allocation4 + $0xf0] sm:$0xff] %vm715, %v2280
          %2286 = vst.msk [vmem:[#allocation4 + $0xf8] sm:$0xff] %vm715, %v2282
          %v2287 = vld [vmem:[#allocation2 + $0x30] sm:$0xff]
          %v2288 = vld [vmem:[#allocation2 + $0x38] sm:$0xff]
          %2291 = vrot.lane.b32.xlu0 %v2287, 32
          %v2292 = vpop.permute.xlu0 %2291
          %2293 = vrot.lane.b32.xlu0 %v2288, 32
          %v2294 = vpop.permute.xlu0 %2293
          %2297 = vst.msk [vmem:[#allocation4 + $0xf0] sm:$0xff] %vm728, %v2292
          %2298 = vst.msk [vmem:[#allocation4 + $0xf8] sm:$0xff] %vm728, %v2294
          %v2299 = vld [vmem:[#allocation2 + $0x40] sm:$0xff]
          %v2300 = vld [vmem:[#allocation2 + $0x48] sm:$0xff]
          %2303 = vrot.lane.b32.xlu0 %v2299, 40
          %v2304 = vpop.permute.xlu0 %2303
          %2305 = vrot.lane.b32.xlu0 %v2300, 40
          %v2306 = vpop.permute.xlu0 %2305
          %2309 = vst.msk [vmem:[#allocation4 + $0xf0] sm:$0xff] %vm741, %v2304
          %2310 = vst.msk [vmem:[#allocation4 + $0xf8] sm:$0xff] %vm741, %v2306
          %v2311 = vld [vmem:[#allocation2 + $0x50] sm:$0xff]
          %v2312 = vld [vmem:[#allocation2 + $0x58] sm:$0xff]
          %2315 = vrot.lane.b32.xlu0 %v2311, 48
          %v2316 = vpop.permute.xlu0 %2315
          %2317 = vrot.lane.b32.xlu0 %v2312, 48
          %v2318 = vpop.permute.xlu0 %2317
          %2321 = vst.msk [vmem:[#allocation4 + $0xf0] sm:$0xff] %vm754, %v2316
          %2322 = vst.msk [vmem:[#allocation4 + $0xf8] sm:$0xff] %vm754, %v2318
          %v2323 = vld [vmem:[#allocation2 + $0x60] sm:$0xff]
          %v2324 = vld [vmem:[#allocation2 + $0x68] sm:$0xff]
          %2327 = vrot.lane.b32.xlu0 %v2323, 56
          %v2328 = vpop.permute.xlu0 %2327
          %2329 = vrot.lane.b32.xlu0 %v2324, 56
          %v2330 = vpop.permute.xlu0 %2329
          %2333 = vst.msk [vmem:[#allocation4 + $0xf0] sm:$0xff] %vm767, %v2328
          %2334 = vst.msk [vmem:[#allocation4 + $0xf8] sm:$0xff] %vm767, %v2330
          %v2335 = vld [vmem:[#allocation2 + $0x70] sm:$0xff]
          %v2336 = vld [vmem:[#allocation2 + $0x78] sm:$0xff]
          %2339 = vrot.lane.b32.xlu0 %v2335, 64
          %v2340 = vpop.permute.xlu0 %2339
          %2341 = vrot.lane.b32.xlu0 %v2336, 64
          %v2342 = vpop.permute.xlu0 %2341
          %2345 = vst.msk [vmem:[#allocation4 + $0xf0] sm:$0xff] %vm780, %v2340
          %2346 = vst.msk [vmem:[#allocation4 + $0xf8] sm:$0xff] %vm780, %v2342
          %v2347 = vld [vmem:[#allocation4] sm:$0xff]
          %v2348 = vld [vmem:[#allocation4 + $0x8] sm:$0xff]
          %v2349 = vld [vmem:[#allocation4 + $0x10] sm:$0xff]
          %v2350 = vld [vmem:[#allocation4 + $0x18] sm:$0xff]
          %v2351 = vld [vmem:[#allocation4 + $0x20] sm:$0xff]
          %v2352 = vld [vmem:[#allocation4 + $0x28] sm:$0xff]
          %v2353 = vld [vmem:[#allocation4 + $0x30] sm:$0xff]
          %v2354 = vld [vmem:[#allocation4 + $0x38] sm:$0xff]
          %v2355 = vld [vmem:[#allocation4 + $0x40] sm:$0xff]
          %v2356 = vld [vmem:[#allocation4 + $0x48] sm:$0xff]
          %v2357 = vld [vmem:[#allocation4 + $0x50] sm:$0xff]
          %v2358 = vld [vmem:[#allocation4 + $0x58] sm:$0xff]
          %v2359 = vld [vmem:[#allocation4 + $0x60] sm:$0xff]
          %v2360 = vld [vmem:[#allocation4 + $0x68] sm:$0xff]
          %v2361 = vld [vmem:[#allocation4 + $0x70] sm:$0xff]
          %v2362 = vld [vmem:[#allocation4 + $0x78] sm:$0xff]
          %v2363 = vld [vmem:[#allocation4 + $0x80] sm:$0xff]
          %v2364 = vld [vmem:[#allocation4 + $0x88] sm:$0xff]
          %v2365 = vld [vmem:[#allocation4 + $0x90] sm:$0xff]
          %v2366 = vld [vmem:[#allocation4 + $0x98] sm:$0xff]
          %v2367 = vld [vmem:[#allocation4 + $0xa0] sm:$0xff]
          %v2368 = vld [vmem:[#allocation4 + $0xa8] sm:$0xff]
          %v2369 = vld [vmem:[#allocation4 + $0xb0] sm:$0xff]
          %v2370 = vld [vmem:[#allocation4 + $0xb8] sm:$0xff]
          %v2371 = vld [vmem:[#allocation4 + $0xc0] sm:$0xff]
          %v2372 = vld [vmem:[#allocation4 + $0xc8] sm:$0xff]
          %v2373 = vld [vmem:[#allocation4 + $0xd0] sm:$0xff]
          %v2374 = vld [vmem:[#allocation4 + $0xd8] sm:$0xff]
          %v2375 = vld [vmem:[#allocation4 + $0xe0] sm:$0xff]
          %v2376 = vld [vmem:[#allocation4 + $0xe8] sm:$0xff]
          %v2377 = vld [vmem:[#allocation4 + $0xf0] sm:$0xff]
          %v2378 = vld [vmem:[#allocation4 + $0xf8] sm:$0xff]
          %v2379 = vpack.c.bf16 %v2348, %v2347
          %v2380 = vpack.c.bf16 %v2350, %v2349
          %v2381 = vpack.c.bf16 %v2352, %v2351
          %v2382 = vpack.c.bf16 %v2354, %v2353
          %v2383 = vpack.c.bf16 %v2356, %v2355
          %v2384 = vpack.c.bf16 %v2358, %v2357
          %v2385 = vpack.c.bf16 %v2360, %v2359
          %v2386 = vpack.c.bf16 %v2362, %v2361
          %v2387 = vpack.c.bf16 %v2364, %v2363
          %v2388 = vpack.c.bf16 %v2366, %v2365
          %v2389 = vpack.c.bf16 %v2368, %v2367
          %v2390 = vpack.c.bf16 %v2370, %v2369
          %v2391 = vpack.c.bf16 %v2372, %v2371
          %v2392 = vpack.c.bf16 %v2374, %v2373
          %v2393 = vpack.c.bf16 %v2376, %v2375
          %v2394 = vpack.c.bf16 %v2378, %v2377
          %v2395 = vld [vmem:[%s4] sm:$0xf]
          %v2396 = vld [vmem:[%s4 + $0x4] sm:$0xf]
          %v2397 = vld [vmem:[%s4 + $0x8] sm:$0xf]
          %v2398 = vld [vmem:[%s4 + $0xc] sm:$0xf]
          %v2399 = vld [vmem:[%s4 + $0x10] sm:$0xf]
          %v2400 = vld [vmem:[%s4 + $0x14] sm:$0xf]
          %v2401 = vld [vmem:[%s4 + $0x18] sm:$0xf]
          %v2402 = vld [vmem:[%s4 + $0x1c] sm:$0xf]
          %v2403 = vld [vmem:[#allocation5] sm:$0xff]
          %v2404 = vld [vmem:[#allocation5 + $0x8] sm:$0xff]
          %v2405 = vld [vmem:[#allocation5 + $0x10] sm:$0xff]
          %v2406 = vld [vmem:[#allocation5 + $0x18] sm:$0xff]
          %v2407 = vld [vmem:[#allocation5 + $0x20] sm:$0xff]
          %v2408 = vld [vmem:[#allocation5 + $0x28] sm:$0xff]
          %v2409 = vld [vmem:[#allocation5 + $0x30] sm:$0xff]
          %v2410 = vld [vmem:[#allocation5 + $0x38] sm:$0xff]
          %v2411 = vld [vmem:[#allocation5 + $0x40] sm:$0xff]
          %v2412 = vld [vmem:[#allocation5 + $0x48] sm:$0xff]
          %v2413 = vld [vmem:[#allocation5 + $0x50] sm:$0xff]
          %v2414 = vld [vmem:[#allocation5 + $0x58] sm:$0xff]
          %v2415 = vld [vmem:[#allocation5 + $0x60] sm:$0xff]
          %v2416 = vld [vmem:[#allocation5 + $0x68] sm:$0xff]
          %v2417 = vld [vmem:[#allocation5 + $0x70] sm:$0xff]
          %v2418 = vld [vmem:[#allocation5 + $0x78] sm:$0xff]
          %v2419 = vld [vmem:[#allocation5 + $0x80] sm:$0xff]
          %v2420 = vld [vmem:[#allocation5 + $0x88] sm:$0xff]
          %v2421 = vld [vmem:[#allocation5 + $0x90] sm:$0xff]
          %v2422 = vld [vmem:[#allocation5 + $0x98] sm:$0xff]
          %v2423 = vld [vmem:[#allocation5 + $0xa0] sm:$0xff]
          %v2424 = vld [vmem:[#allocation5 + $0xa8] sm:$0xff]
          %v2425 = vld [vmem:[#allocation5 + $0xb0] sm:$0xff]
          %v2426 = vld [vmem:[#allocation5 + $0xb8] sm:$0xff]
          %v2427 = vld [vmem:[#allocation5 + $0xc0] sm:$0xff]
          %v2428 = vld [vmem:[#allocation5 + $0xc8] sm:$0xff]
          %v2429 = vld [vmem:[#allocation5 + $0xd0] sm:$0xff]
          %v2430 = vld [vmem:[#allocation5 + $0xd8] sm:$0xff]
          %v2431 = vld [vmem:[#allocation5 + $0xe0] sm:$0xff]
          %v2432 = vld [vmem:[#allocation5 + $0xe8] sm:$0xff]
          %v2433 = vld [vmem:[#allocation5 + $0xf0] sm:$0xff]
          %v2434 = vld [vmem:[#allocation5 + $0xf8] sm:$0xff]
          %v2435 = vadd.f32 %v2403, 0.001
          %v2436 = vadd.f32 %v2404, 0.001
          %v2437 = vadd.f32 %v2405, 0.001
          %v2438 = vadd.f32 %v2406, 0.001
          %v2439 = vadd.f32 %v2407, 0.001
          %v2440 = vadd.f32 %v2408, 0.001
          %v2441 = vadd.f32 %v2409, 0.001
          %v2442 = vadd.f32 %v2410, 0.001
          %v2443 = vadd.f32 %v2411, 0.001
          %v2444 = vadd.f32 %v2412, 0.001
          %v2445 = vadd.f32 %v2413, 0.001
          %v2446 = vadd.f32 %v2414, 0.001
          %v2447 = vadd.f32 %v2415, 0.001
          %v2448 = vadd.f32 %v2416, 0.001
          %v2449 = vadd.f32 %v2417, 0.001
          %v2450 = vadd.f32 %v2418, 0.001
          %v2451 = vadd.f32 %v2419, 0.001
          %v2452 = vadd.f32 %v2420, 0.001
          %v2453 = vadd.f32 %v2421, 0.001
          %v2454 = vadd.f32 %v2422, 0.001
          %v2455 = vadd.f32 %v2423, 0.001
          %v2456 = vadd.f32 %v2424, 0.001
          %v2457 = vadd.f32 %v2425, 0.001
          %v2458 = vadd.f32 %v2426, 0.001
          %v2459 = vadd.f32 %v2427, 0.001
          %v2460 = vadd.f32 %v2428, 0.001
          %v2461 = vadd.f32 %v2429, 0.001
          %v2462 = vadd.f32 %v2430, 0.001
          %v2463 = vadd.f32 %v2431, 0.001
          %v2464 = vadd.f32 %v2432, 0.001
          %v2465 = vadd.f32 %v2433, 0.001
          %v2466 = vadd.f32 %v2434, 0.001
          %v2467 = vrcp.pop %v2435
          %v2468 = vrcp.pop %v2436
          %v2469 = vrcp.pop %v2437
          %v2470 = vrcp.pop %v2438
          %v2471 = vrcp.pop %v2439
          %v2472 = vrcp.pop %v2440
          %v2473 = vrcp.pop %v2441
          %v2474 = vrcp.pop %v2442
          %v2475 = vrcp.pop %v2443
          %v2476 = vrcp.pop %v2444
          %v2477 = vrcp.pop %v2445
          %v2478 = vrcp.pop %v2446
          %v2479 = vrcp.pop %v2447
          %v2480 = vrcp.pop %v2448
          %v2481 = vrcp.pop %v2449
          %v2482 = vrcp.pop %v2450
          %v2483 = vrcp.pop %v2451
          %v2484 = vrcp.pop %v2452
          %v2485 = vrcp.pop %v2453
          %v2486 = vrcp.pop %v2454
          %v2487 = vrcp.pop %v2455
          %v2488 = vrcp.pop %v2456
          %v2489 = vrcp.pop %v2457
          %v2490 = vrcp.pop %v2458
          %v2491 = vrcp.pop %v2459
          %v2492 = vrcp.pop %v2460
          %v2493 = vrcp.pop %v2461
          %v2494 = vrcp.pop %v2462
          %v2495 = vrcp.pop %v2463
          %v2496 = vrcp.pop %v2464
          %v2497 = vrcp.pop %v2465
          %v2498 = vrcp.pop %v2466
          %v2499 = vld [vmem:[%s5] sm:$0x1]
          %v2501 = vperm.slane %v2499, 0
          %v2511 = vunpack.c.l.b16 %v2395
          %v2512 = vunpack.c.l.b16 %v2396
          %v2513 = vunpack.c.l.b16 %v2397
          %v2514 = vunpack.c.l.b16 %v2398
          %v2515 = vunpack.c.l.b16 %v2399
          %v2516 = vunpack.c.l.b16 %v2400
          %v2517 = vunpack.c.l.b16 %v2401
          %v2518 = vunpack.c.l.b16 %v2402
          %v2519 = vpack.c.b16 %v2512, %v2511
          %v2520 = vpack.c.b16 %v2514, %v2513
          %v2521 = vpack.c.b16 %v2516, %v2515
          %v2522 = vpack.c.b16 %v2518, %v2517
          %vm2527 = vcmask 523264
          %v2529 = vsel %vm2527, %v2379, 0
          %v2532 = vsel %vm2527, %v2380, 0
          %v2535 = vsel %vm2527, %v2381, 0
          %v2538 = vsel %vm2527, %v2382, 0
          %v2541 = vsel %vm2527, %v2383, 0
          %v2544 = vsel %vm2527, %v2384, 0
          %v2547 = vsel %vm2527, %v2385, 0
          %v2550 = vsel %vm2527, %v2386, 0
          %v2553 = vsel %vm2527, %v2387, 0
          %v2556 = vsel %vm2527, %v2388, 0
          %v2559 = vsel %vm2527, %v2389, 0
          %v2562 = vsel %vm2527, %v2390, 0
          %v2565 = vsel %vm2527, %v2391, 0
          %v2568 = vsel %vm2527, %v2392, 0
          %v2571 = vsel %vm2527, %v2393, 0
          %v2574 = vsel %vm2527, %v2394, 0
          %2576 = vmatpush.bf16.msra.mxu0 0
          %2577 = vmatpush.bf16.msra.mxu0 0
          %2578 = vmatpush.bf16.msra.mxu0 0
          %2579 = vmatpush.bf16.msra.mxu0 0
          %2580 = vmatpush.bf16.msra.mxu0 %v2522
          %2581 = vmatpush.bf16.msra.mxu0 %v2521
          %2582 = vmatpush.bf16.msra.mxu0 %v2520
          %2583 = vmatpush.bf16.msra.mxu0 %v2519
          %2584 = vmatmul.bf16.gmra.mxu0 %v2529
          %v2585 = vpop.f32.mrf.mxu0
          %v2586 = vadd.f32 %v2501, %v2585
          %v2587 = vpop.f32.mrf.mxu0
          %v2588 = vadd.f32 %v2501, %v2587
          %2589 = vmatmul.bf16.gmra.mxu0 %v2532
          %v2590 = vpop.f32.mrf.mxu0
          %v2591 = vadd.f32 %v2501, %v2590
          %v2592 = vpop.f32.mrf.mxu0
          %v2593 = vadd.f32 %v2501, %v2592
          %2594 = vmatmul.bf16.gmra.mxu0 %v2535
          %v2595 = vpop.f32.mrf.mxu0
          %v2596 = vadd.f32 %v2501, %v2595
          %v2597 = vpop.f32.mrf.mxu0
          %v2598 = vadd.f32 %v2501, %v2597
          %2599 = vmatmul.bf16.gmra.mxu0 %v2538
          %v2600 = vpop.f32.mrf.mxu0
          %v2601 = vadd.f32 %v2501, %v2600
          %v2602 = vpop.f32.mrf.mxu0
          %v2603 = vadd.f32 %v2501, %v2602
          %2604 = vmatmul.bf16.gmra.mxu0 %v2541
          %v2605 = vpop.f32.mrf.mxu0
          %v2606 = vadd.f32 %v2501, %v2605
          %v2607 = vpop.f32.mrf.mxu0
          %v2608 = vadd.f32 %v2501, %v2607
          %2609 = vmatmul.bf16.gmra.mxu0 %v2544
          %v2610 = vpop.f32.mrf.mxu0
          %v2611 = vadd.f32 %v2501, %v2610
          %v2612 = vpop.f32.mrf.mxu0
          %v2613 = vadd.f32 %v2501, %v2612
          %2614 = vmatmul.bf16.gmra.mxu0 %v2547
          %v2615 = vpop.f32.mrf.mxu0
          %v2616 = vadd.f32 %v2501, %v2615
          %v2617 = vpop.f32.mrf.mxu0
          %v2618 = vadd.f32 %v2501, %v2617
          %2619 = vmatmul.bf16.gmra.mxu0 %v2550
          %v2620 = vpop.f32.mrf.mxu0
          %v2621 = vadd.f32 %v2501, %v2620
          %v2622 = vpop.f32.mrf.mxu0
          %v2623 = vadd.f32 %v2501, %v2622
          %2624 = vmatmul.bf16.gmra.mxu0 %v2553
          %v2625 = vpop.f32.mrf.mxu0
          %v2626 = vadd.f32 %v2501, %v2625
          %v2627 = vpop.f32.mrf.mxu0
          %v2628 = vadd.f32 %v2501, %v2627
          %2629 = vmatmul.bf16.gmra.mxu0 %v2556
          %v2630 = vpop.f32.mrf.mxu0
          %v2631 = vadd.f32 %v2501, %v2630
          %v2632 = vpop.f32.mrf.mxu0
          %v2633 = vadd.f32 %v2501, %v2632
          %2634 = vmatmul.bf16.gmra.mxu0 %v2559
          %v2635 = vpop.f32.mrf.mxu0
          %v2636 = vadd.f32 %v2501, %v2635
          %v2637 = vpop.f32.mrf.mxu0
          %v2638 = vadd.f32 %v2501, %v2637
          %2639 = vmatmul.bf16.gmra.mxu0 %v2562
          %v2640 = vpop.f32.mrf.mxu0
          %v2641 = vadd.f32 %v2501, %v2640
          %v2642 = vpop.f32.mrf.mxu0
          %v2643 = vadd.f32 %v2501, %v2642
          %2644 = vmatmul.bf16.gmra.mxu0 %v2565
          %v2645 = vpop.f32.mrf.mxu0
          %v2646 = vadd.f32 %v2501, %v2645
          %v2647 = vpop.f32.mrf.mxu0
          %v2648 = vadd.f32 %v2501, %v2647
          %2649 = vmatmul.bf16.gmra.mxu0 %v2568
          %v2650 = vpop.f32.mrf.mxu0
          %v2651 = vadd.f32 %v2501, %v2650
          %v2652 = vpop.f32.mrf.mxu0
          %v2653 = vadd.f32 %v2501, %v2652
          %2654 = vmatmul.bf16.gmra.mxu0 %v2571
          %v2655 = vpop.f32.mrf.mxu0
          %v2656 = vadd.f32 %v2501, %v2655
          %v2657 = vpop.f32.mrf.mxu0
          %v2658 = vadd.f32 %v2501, %v2657
          %2659 = vmatmul.bf16.gmra.mxu0 %v2574
          %v2660 = vpop.f32.mrf.mxu0
          %v2661 = vadd.f32 %v2501, %v2660
          %v2662 = vpop.f32.mrf.mxu0
          %v2663 = vadd.f32 %v2501, %v2662
          %2664 = vdwg.mxu0
          %2666 = vset.pattern.permute.xlu0 0
          %2667 = vperm.xlu0 %2666, %v2467
          %v2668 = vpop.permute.xlu0 %2667
          %2671 = vset.pattern.permute.xlu0 0
          %2672 = vperm.xlu0 %2671, %v2468
          %v2673 = vpop.permute.xlu0 %2672
          %2676 = vset.pattern.permute.xlu0 0
          %2677 = vperm.xlu0 %2676, %v2469
          %v2678 = vpop.permute.xlu0 %2677
          %2681 = vset.pattern.permute.xlu0 0
          %2682 = vperm.xlu0 %2681, %v2470
          %v2683 = vpop.permute.xlu0 %2682
          %2686 = vset.pattern.permute.xlu0 0
          %2687 = vperm.xlu0 %2686, %v2471
          %v2688 = vpop.permute.xlu0 %2687
          %2691 = vset.pattern.permute.xlu0 0
          %2692 = vperm.xlu0 %2691, %v2472
          %v2693 = vpop.permute.xlu0 %2692
          %2696 = vset.pattern.permute.xlu0 0
          %2697 = vperm.xlu0 %2696, %v2473
          %v2698 = vpop.permute.xlu0 %2697
          %2701 = vset.pattern.permute.xlu0 0
          %2702 = vperm.xlu0 %2701, %v2474
          %v2703 = vpop.permute.xlu0 %2702
          %2706 = vset.pattern.permute.xlu0 0
          %2707 = vperm.xlu0 %2706, %v2475
          %v2708 = vpop.permute.xlu0 %2707
          %2711 = vset.pattern.permute.xlu0 0
          %2712 = vperm.xlu0 %2711, %v2476
          %v2713 = vpop.permute.xlu0 %2712
          %2716 = vset.pattern.permute.xlu0 0
          %2717 = vperm.xlu0 %2716, %v2477
          %v2718 = vpop.permute.xlu0 %2717
          %2721 = vset.pattern.permute.xlu0 0
          %2722 = vperm.xlu0 %2721, %v2478
          %v2723 = vpop.permute.xlu0 %2722
          %2726 = vset.pattern.permute.xlu0 0
          %2727 = vperm.xlu0 %2726, %v2479
          %v2728 = vpop.permute.xlu0 %2727
          %2731 = vset.pattern.permute.xlu0 0
          %2732 = vperm.xlu0 %2731, %v2480
          %v2733 = vpop.permute.xlu0 %2732
          %2736 = vset.pattern.permute.xlu0 0
          %2737 = vperm.xlu0 %2736, %v2481
          %v2738 = vpop.permute.xlu0 %2737
          %2741 = vset.pattern.permute.xlu0 0
          %2742 = vperm.xlu0 %2741, %v2482
          %v2743 = vpop.permute.xlu0 %2742
          %2746 = vset.pattern.permute.xlu0 0
          %2747 = vperm.xlu0 %2746, %v2483
          %v2748 = vpop.permute.xlu0 %2747
          %2751 = vset.pattern.permute.xlu0 0
          %2752 = vperm.xlu0 %2751, %v2484
          %v2753 = vpop.permute.xlu0 %2752
          %2756 = vset.pattern.permute.xlu0 0
          %2757 = vperm.xlu0 %2756, %v2485
          %v2758 = vpop.permute.xlu0 %2757
          %2761 = vset.pattern.permute.xlu0 0
          %2762 = vperm.xlu0 %2761, %v2486
          %v2763 = vpop.permute.xlu0 %2762
          %2766 = vset.pattern.permute.xlu0 0
          %2767 = vperm.xlu0 %2766, %v2487
          %v2768 = vpop.permute.xlu0 %2767
          %2771 = vset.pattern.permute.xlu0 0
          %2772 = vperm.xlu0 %2771, %v2488
          %v2773 = vpop.permute.xlu0 %2772
          %2776 = vset.pattern.permute.xlu0 0
          %2777 = vperm.xlu0 %2776, %v2489
          %v2778 = vpop.permute.xlu0 %2777
          %2781 = vset.pattern.permute.xlu0 0
          %2782 = vperm.xlu0 %2781, %v2490
          %v2783 = vpop.permute.xlu0 %2782
          %2786 = vset.pattern.permute.xlu0 0
          %2787 = vperm.xlu0 %2786, %v2491
          %v2788 = vpop.permute.xlu0 %2787
          %2791 = vset.pattern.permute.xlu0 0
          %2792 = vperm.xlu0 %2791, %v2492
          %v2793 = vpop.permute.xlu0 %2792
          %2796 = vset.pattern.permute.xlu0 0
          %2797 = vperm.xlu0 %2796, %v2493
          %v2798 = vpop.permute.xlu0 %2797
          %2801 = vset.pattern.permute.xlu0 0
          %2802 = vperm.xlu0 %2801, %v2494
          %v2803 = vpop.permute.xlu0 %2802
          %2806 = vset.pattern.permute.xlu0 0
          %2807 = vperm.xlu0 %2806, %v2495
          %v2808 = vpop.permute.xlu0 %2807
          %2811 = vset.pattern.permute.xlu0 0
          %2812 = vperm.xlu0 %2811, %v2496
          %v2813 = vpop.permute.xlu0 %2812
          %2816 = vset.pattern.permute.xlu0 0
          %2817 = vperm.xlu0 %2816, %v2497
          %v2818 = vpop.permute.xlu0 %2817
          %2821 = vset.pattern.permute.xlu0 0
          %2822 = vperm.xlu0 %2821, %v2498
          %v2823 = vpop.permute.xlu0 %2822
          %v2825 = vmul.f32 %v2586, %v2668
          %v2826 = vmul.f32 %v2588, %v2673
          %v2827 = vmul.f32 %v2591, %v2678
          %v2828 = vmul.f32 %v2593, %v2683
          %v2829 = vmul.f32 %v2596, %v2688
          %v2830 = vmul.f32 %v2598, %v2693
          %v2831 = vmul.f32 %v2601, %v2698
          %v2832 = vmul.f32 %v2603, %v2703
          %v2833 = vmul.f32 %v2606, %v2708
          %v2834 = vmul.f32 %v2608, %v2713
          %v2835 = vmul.f32 %v2611, %v2718
          %v2836 = vmul.f32 %v2613, %v2723
          %v2837 = vmul.f32 %v2616, %v2728
          %v2838 = vmul.f32 %v2618, %v2733
          %v2839 = vmul.f32 %v2621, %v2738
          %v2840 = vmul.f32 %v2623, %v2743
          %v2841 = vmul.f32 %v2626, %v2748
          %v2842 = vmul.f32 %v2628, %v2753
          %v2843 = vmul.f32 %v2631, %v2758
          %v2844 = vmul.f32 %v2633, %v2763
          %v2845 = vmul.f32 %v2636, %v2768
          %v2846 = vmul.f32 %v2638, %v2773
          %v2847 = vmul.f32 %v2641, %v2778
          %v2848 = vmul.f32 %v2643, %v2783
          %v2849 = vmul.f32 %v2646, %v2788
          %v2850 = vmul.f32 %v2648, %v2793
          %v2851 = vmul.f32 %v2651, %v2798
          %v2852 = vmul.f32 %v2653, %v2803
          %v2853 = vmul.f32 %v2656, %v2808
          %v2854 = vmul.f32 %v2658, %v2813
          %v2855 = vmul.f32 %v2661, %v2818
          %v2856 = vmul.f32 %v2663, %v2823
          %vm2857 = vcmask 261120
          %2858 = vst.msk [vmem:[%s385] sm:$0xff] %vm2857, %v2825
          %2859 = vst.msk [vmem:[%s385 + $0x8] sm:$0xff] %vm2857, %v2826
          %2860 = vst.msk [vmem:[%s385 + $0x10] sm:$0xff] %vm2857, %v2827
          %2861 = vst.msk [vmem:[%s385 + $0x18] sm:$0xff] %vm2857, %v2828
          %2862 = vst.msk [vmem:[%s385 + $0x20] sm:$0xff] %vm2857, %v2829
          %2863 = vst.msk [vmem:[%s385 + $0x28] sm:$0xff] %vm2857, %v2830
          %2864 = vst.msk [vmem:[%s385 + $0x30] sm:$0xff] %vm2857, %v2831
          %2865 = vst.msk [vmem:[%s385 + $0x38] sm:$0xff] %vm2857, %v2832
          %2866 = vst.msk [vmem:[%s385 + $0x40] sm:$0xff] %vm2857, %v2833
          %2867 = vst.msk [vmem:[%s385 + $0x48] sm:$0xff] %vm2857, %v2834
          %2868 = vst.msk [vmem:[%s385 + $0x50] sm:$0xff] %vm2857, %v2835
          %2869 = vst.msk [vmem:[%s385 + $0x58] sm:$0xff] %vm2857, %v2836
          %2870 = vst.msk [vmem:[%s385 + $0x60] sm:$0xff] %vm2857, %v2837
          %2871 = vst.msk [vmem:[%s385 + $0x68] sm:$0xff] %vm2857, %v2838
          %2872 = vst.msk [vmem:[%s385 + $0x70] sm:$0xff] %vm2857, %v2839
          %2873 = vst.msk [vmem:[%s385 + $0x78] sm:$0xff] %vm2857, %v2840
          %2874 = vst.msk [vmem:[%s385 + $0x80] sm:$0xff] %vm2857, %v2841
          %2875 = vst.msk [vmem:[%s385 + $0x88] sm:$0xff] %vm2857, %v2842
          %2876 = vst.msk [vmem:[%s385 + $0x90] sm:$0xff] %vm2857, %v2843
          %2877 = vst.msk [vmem:[%s385 + $0x98] sm:$0xff] %vm2857, %v2844
          %2878 = vst.msk [vmem:[%s385 + $0xa0] sm:$0xff] %vm2857, %v2845
          %2879 = vst.msk [vmem:[%s385 + $0xa8] sm:$0xff] %vm2857, %v2846
          %2880 = vst.msk [vmem:[%s385 + $0xb0] sm:$0xff] %vm2857, %v2847
          %2881 = vst.msk [vmem:[%s385 + $0xb8] sm:$0xff] %vm2857, %v2848
          %2882 = vst.msk [vmem:[%s385 + $0xc0] sm:$0xff] %vm2857, %v2849
          %2883 = vst.msk [vmem:[%s385 + $0xc8] sm:$0xff] %vm2857, %v2850
          %2884 = vst.msk [vmem:[%s385 + $0xd0] sm:$0xff] %vm2857, %v2851
          %2885 = vst.msk [vmem:[%s385 + $0xd8] sm:$0xff] %vm2857, %v2852
          %2886 = vst.msk [vmem:[%s385 + $0xe0] sm:$0xff] %vm2857, %v2853
          %2887 = vst.msk [vmem:[%s385 + $0xe8] sm:$0xff] %vm2857, %v2854
          %2888 = vst.msk [vmem:[%s385 + $0xf0] sm:$0xff] %vm2857, %v2855
          %2889 = vst.msk [vmem:[%s385 + $0xf8] sm:$0xff] %vm2857, %v2856
        $region52: #{outer_product_mean.3} parent=43 // pred_fallthru
          _
        %s2890 = sand.u32 %s220, 1
        %s2891 = scalar_lea.sflag [#allocation7], %s2890
        %s2892 = sand.u32 %s220, 1
        %s2893 = smul.addr %s2892, 256
        %s2894 = scalar_lea.vmem [#allocation6], %s2893
        // Predicated region
        $region53: #{outer_product_mean.3} parent=43 // pred_check
          %p2895 = pneg %p230
        $region54: #{outer_product_mean.3} parent=43 // pred_check_branch
          %2897 = sbr.rel (%p2895) target = $region56
        $region55: #{outer_product_mean.3} parent=43 // pred_region
          %s2898 = smul.u32 16, %s27
          %s2899 = smul.u32 2, %s28
          %2901 = vsyncadd %s2891, 0
          %s2902 = smul.addr %s2898, 2
          %s2903 = sadd.s32 %s2899, %s2902
          %s2904 = smul.addr %s26, 32
          %s2905 = sadd.s32 %s2903, %s2904
          %s2906 = smul.addr %s2905, 8
          %s2907 = scalar_lea.hbm %s6, %s2906
          %s2908 = sshll.u32 %s2894, 4
          %s2909 = int_to_ptr.vmem [resolvable:$true] %s2908
          %s2910 = sshll.u32 %s2907, 4
          %s2911 = int_to_ptr.hbm [resolvable:$true] %s2910
          %2916 = dma.vmem_to_hbm [thread:$0]  %s2909, 4096, %s2911, %s2891, 128, 128, 8
        $region56: #{outer_product_mean.3} parent=43 // pred_fallthru
          _
      $region44: #{outer_product_mean.3} parent=5 // pred_fallthru
        _
      %p2917 = scmp.le.s32.totalorder 2, %s15
      // Predicated region
      $region57: #{outer_product_mean.3} parent=5 // pred_check
        %p2918 = pneg %p2917
      $region58: #{outer_product_mean.3} parent=5 // pred_check_branch
        %2920 = sbr.rel (%p2918) target = $region60
      $region59: #{outer_product_mean.3} parent=5 // pred_region
        %s2921 = ssub.s32 %s15, 2
        // Predicated region
        $region61: #{outer_product_mean.3} parent=59 // pred_check
          %p2922 = pneg %p236
        $region62: #{outer_product_mean.3} parent=59 // pred_check_branch
          %2924 = sbr.rel (%p2922) target = $region64
        $region63: #{outer_product_mean.3} parent=59 // pred_region
          %s2925 = sand.u32 %s221, 1
          %s2926 = scalar_lea.sflag [#allocation7], %s2925
          %s2927 = sand.u32 %s221, 1
          %s2928 = smul.addr %s2927, 256
          %s2929 = scalar_lea.vmem [#allocation6], %s2928
          %2931 = dma.done %s2926, 4096
        $region64: #{outer_product_mean.3} parent=59 // pred_fallthru
          _
      $region60: #{outer_product_mean.3} parent=5 // pred_fallthru
        _
    $region6: #{outer_product_mean.3} parent=1 // loop_footer
      %s19 = sadd.s32 1, %s15
    $region7: #{outer_product_mean.3} parent=1 // loop_footer_branch
      %14 = sbr.rel target = $region3
    $region8: #{outer_product_mean.3} parent=1 // loop_exit
      _
    %2932 = vsyncpa [#allocation7], 1
    %s2933 = scalar_lea.sflag [#allocation7], 1
    %2934 = vsyncpa %s2933, 1

</llo_original>
